<compile_context>
chip_gen: v7x
topology: tpu7x:2x2x1
jax: 0.10.0
libtpu: 0.0.40
codegen_flags: <defaults>
</compile_context>

<pallas_src>
import functools

import jax
import jax.numpy as jnp
from jax.experimental import pallas as pl
from jax.experimental.pallas import tpu as pltpu

LEAKY_SLOPE = 0.2
BN_EPS = 1e-5
LANE = 128
SUB = 8
VMEM_LIMIT_BYTES = 32 * 1024 * 1024


def _round_up(x, m):
    return (x + m - 1) // m * m


# ---------------- Pallas kernels ----------------------------------------------

def _mm_leaky_kernel(p_ref, w_ref, o_ref):
    # (tm, K) bf16 @ (K, Cp) bf16 -> f32 accum, LeakyReLU, store bf16.
    y = jnp.dot(p_ref[...], w_ref[...], preferred_element_type=jnp.float32)
    y = jnp.where(y > 0, y, LEAKY_SLOPE * y)
    o_ref[...] = y.astype(o_ref.dtype)


def _conv_bn_leaky_kernel(p_ref, w_ref, g_ref, b_ref, o_ref,
                          y_scr, sum_scr, sq_scr, *, inv_m):
    # Fused: tiled matmul -> per-channel sum / sum-of-squares accumulated across
    # the M grid axis -> (finalize) BatchNorm (training-mode batch stats,
    # biased var) + LeakyReLU over the whole VMEM-resident activation.
    i = pl.program_id(0)

    @pl.when(i == 0)
    def _():
        sum_scr[...] = jnp.zeros_like(sum_scr)
        sq_scr[...] = jnp.zeros_like(sq_scr)

    y = jnp.dot(p_ref[...], w_ref[...], preferred_element_type=jnp.float32)
    y_scr[i] = y                                   # pre-BN tile stays in VMEM (f32)
    sum_scr[...] += jnp.sum(y, axis=0, keepdims=True)
    sq_scr[...] += jnp.sum(y * y, axis=0, keepdims=True)

    @pl.when(i == pl.num_programs(0) - 1)
    def _():
        mean = sum_scr[...] * inv_m
        # NOTE: E[x^2] - E[x]^2 in f32; fine for DCGAN-scale activations, a
        # shifted/Welford combine would be safer for very large means.
        var = sq_scr[...] * inv_m - mean * mean
        scale = g_ref[...] * jax.lax.rsqrt(var + BN_EPS)
        shift = b_ref[...] - mean * scale
        z = y_scr[...] * scale + shift             # (nt, tm, Cp) * (1, Cp)
        z = jnp.where(z > 0, z, LEAKY_SLOPE * z)
        o_ref[...] = z.reshape(o_ref.shape).astype(o_ref.dtype)


def _mm_sigmoid_kernel(p_ref, w_ref, o_ref):
    y = jnp.dot(p_ref[...], w_ref[...], preferred_element_type=jnp.float32)
    o_ref[...] = jax.nn.sigmoid(y)


# ---------------- glue: im2col (NHWC) + tiled layer wrappers -------------------

def _im2col_nhwc(x, k, stride, pad, cin_take=None):
    # x: (B, H, W, C) -> (B*Ho*Wo, k*k*Ct); column order = (kh, kw, ci).
    # cin_take lets a layer consume only the leading real channels of a
    # 128-padded activation without a separate slice copy.
    # TODO(synk): fuse this patch extraction into the conv kernels.
    if pad:
        x = jnp.pad(x, ((0, 0), (pad, pad), (pad, pad), (0, 0)))
    B, H, W, C = x.shape
    Ct = C if cin_take is None else cin_take
    Ho = (H - k) // stride + 1
    Wo = (W - k) // stride + 1
    cols = []
    for kh in range(k):
        for kw in range(k):
            cols.append(x[:, kh:kh + stride * Ho:stride,
                          kw:kw + stride * Wo:stride, :Ct])
    p = jnp.concatenate(cols, axis=-1)             # (B, Ho, Wo, k*k*Ct)
    return p.reshape(B * Ho * Wo, k * k * Ct), (B, Ho, Wo)


def _tile_m(M, cap, gran=SUB):
    # Prefer a tile that divides M exactly (no padded rows), else pad minimally.
    mg = _round_up(M, gran)
    cap = max(cap - cap % gran, gran)
    if mg <= cap:
        return mg, mg
    for tm in range(cap, gran - 1, -gran):
        if mg % tm == 0:
            return tm, mg
    return cap, _round_up(mg, cap)


def _conv_leaky(x, wmat, cin_take=None, k=4, stride=2, pad=1, tm_cap=2048):
    patches, (B, Ho, Wo) = _im2col_nhwc(x, k, stride, pad, cin_take)
    M, K = patches.shape
    Cp = wmat.shape[1]
    tm, Mp = _tile_m(M, tm_cap, gran=SUB)
    if Mp != M:
        patches = jnp.pad(patches, ((0, Mp - M), (0, 0)))
    out = pl.pallas_call(
        _mm_leaky_kernel,
        out_shape=jax.ShapeDtypeStruct((Mp, Cp), jnp.bfloat16),
        grid=(Mp // tm,),
        in_specs=[pl.BlockSpec((tm, K), lambda i: (i, 0)),
                  pl.BlockSpec((K, Cp), lambda i: (0, 0))],
        out_specs=pl.BlockSpec((tm, Cp), lambda i: (i, 0)),
        compiler_params=pltpu.CompilerParams(
            dimension_semantics=("parallel",),
            vmem_limit_bytes=VMEM_LIMIT_BYTES),
    )(patches, wmat)
    if Mp != M:
        out = out[:M]
    return out.reshape(B, Ho, Wo, Cp)


def _conv_bn_leaky(x, wmat, gamma, beta, cin_take=None, k=4, stride=2, pad=1,
                   tm_cap=1024):
    patches, (B, Ho, Wo) = _im2col_nhwc(x, k, stride, pad, cin_take)
    M, K = patches.shape
    Cp = wmat.shape[1]
    # gran=16 keeps bf16/f32 tiles sublane-aligned; zero-padded rows contribute
    # 0 to sum/sumsq and we divide by the true M.
    tm, Mp = _tile_m(M, tm_cap, gran=16)
    if Mp != M:
        patches = jnp.pad(patches, ((0, Mp - M), (0, 0)))
    nt = Mp // tm

    out = pl.pallas_call(
        functools.partial(_conv_bn_leaky_kernel, inv_m=1.0 / float(M)),
        out_shape=jax.ShapeDtypeStruct((Mp, Cp), jnp.bfloat16),
        grid=(nt,),
        in_specs=[pl.BlockSpec((tm, K), lambda i: (i, 0)),
                  pl.BlockSpec((K, Cp), lambda i: (0, 0)),
                  pl.BlockSpec((1, Cp), lambda i: (0, 0)),
                  pl.BlockSpec((1, Cp), lambda i: (0, 0))],
        # Output is a single resident full block: written back to HBM exactly
        # once, after the finalize step of the last grid iteration.
        out_specs=pl.BlockSpec((Mp, Cp), lambda i: (0, 0)),
        scratch_shapes=[pltpu.VMEM((nt, tm, Cp), jnp.float32),   # pre-BN y
                        pltpu.VMEM((1, Cp), jnp.float32),        # sum
                        pltpu.VMEM((1, Cp), jnp.float32)],       # sum of squares
        compiler_params=pltpu.CompilerParams(
            dimension_semantics=("arbitrary",),   # stats accumulate across M
            vmem_limit_bytes=VMEM_LIMIT_BYTES),
    )(patches, wmat, gamma, beta)
    if Mp != M:
        out = out[:M]
    return out.reshape(B, Ho, Wo, Cp)


def _head_sigmoid(x, wmat):
    # 4x4 conv, stride 1, no pad on a 4x4 map == dense layer on the flattened
    # NHWC map; im2col is a pure (free) reshape.  The weight's K rows are
    # zero-padded to match conv3's 128-padded channels, so no channel slice.
    B, Ho, Wo, C = x.shape
    K = Ho * Wo * C
    patches = x.reshape(B, K)
    Cp = wmat.shape[1]
    Mp = _round_up(max(B, SUB), SUB)
    if Mp != B:
        patches = jnp.pad(patches, ((0, Mp - B), (0, 0)))
    out = pl.pallas_call(
        _mm_sigmoid_kernel,
        out_shape=jax.ShapeDtypeStruct((Mp, Cp), jnp.float32),
        grid=(1,),
        in_specs=[pl.BlockSpec((Mp, K), lambda i: (0, 0)),
                  pl.BlockSpec((K, Cp), lambda i: (0, 0))],
        out_specs=pl.BlockSpec((Mp, Cp), lambda i: (0, 0)),
        compiler_params=pltpu.CompilerParams(
            dimension_semantics=("parallel",),
            vmem_limit_bytes=VMEM_LIMIT_BYTES),
    )(patches, wmat)
    return out[:B, 0]                              # (B,)


# ---------------- parameters (deterministic synthetic init) -------------------

def _conv_w_to_mat(w, cin_pad=None, cout_pad=None):
    # PyTorch (Cout, Cin, KH, KW) -> (KH*KW*Cin_pad, Cout_pad); column order
    # matches the (kh, kw, ci) im2col layout; padding rows/cols are zeros.
    cout, cin, kh, kw = w.shape
    m = jnp.transpose(w, (2, 3, 1, 0))             # (kh, kw, cin, cout)
    if cin_pad is not None and cin_pad > cin:
        m = jnp.pad(m, ((0, 0), (0, 0), (0, cin_pad - cin), (0, 0)))
    if cout_pad is not None and cout_pad > cout:
        m = jnp.pad(m, ((0, 0), (0, 0), (0, 0), (0, cout_pad - cout)))
    return m.reshape(kh * kw * m.shape[2], m.shape[3])


def init_params(key, nc=3):
    ks = jax.random.split(key, 5)
    cin1 = nc + 1
    cin1_pad = _round_up(cin1, SUB)                # -> layer-1 K = 4*4*8 = 128
    w1 = 0.02 * jax.random.normal(ks[1], (64, cin1, 4, 4), jnp.float32)
    w2 = 0.02 * jax.random.normal(ks[2], (128, 64, 4, 4), jnp.float32)
    w3 = 0.02 * jax.random.normal(ks[3], (64, 128, 4, 4), jnp.float32)
    w4 = 0.02 * jax.random.normal(ks[4], (1, 64, 4, 4), jnp.float32)
    return {
        "embed": jax.random.normal(ks[0], (10, 32 * 32), jnp.float32),  # nn.Embedding(10, 1024)
        # Weights pre-transposed / padded once, stored bf16 (MXU operands).
        # Cout padded to 128 (lane-dense outputs); padded columns are zero so
        # padded activation channels stay exactly zero through BN/LeakyReLU
        # (no conv bias) and are consumed by zero weight rows downstream.
        "w1m": _conv_w_to_mat(w1, cin_pad=cin1_pad, cout_pad=LANE).astype(jnp.bfloat16),
        "w2m": _conv_w_to_mat(w2, cout_pad=LANE).astype(jnp.bfloat16),
        "w3m": _conv_w_to_mat(w3, cout_pad=LANE).astype(jnp.bfloat16),
        # Head weight: Cin padded to 128 so conv3's 128-padded map feeds it
        # directly (K = 4*4*128 = 2048), Cout padded to 128 lanes.
        "w4m": _conv_w_to_mat(w4, cin_pad=LANE, cout_pad=LANE).astype(jnp.bfloat16),
        # BatchNorm2d defaults (gamma=1, beta=0), lane-padded to 128.
        "bn2_g": jnp.ones((1, LANE), jnp.float32),
        "bn2_b": jnp.zeros((1, LANE), jnp.float32),
        "bn3_g": jnp.ones((1, LANE), jnp.float32),
        "bn3_b": jnp.zeros((1, LANE), jnp.float32),
    }


# ---------------- forward ------------------------------------------------------

@jax.jit
def discriminator_forward(params, x, labels):
    B, nc = x.shape[0], x.shape[1]
    cin1_pad = params["w1m"].shape[0] // 16        # 4*4*Cin_pad / 16

    # Embedding lookup + concat as an extra channel (XLA glue, not hot path).
    y = params["embed"][labels].reshape(B, 32, 32, 1)
    h = jnp.concatenate([jnp.transpose(x, (0, 2, 3, 1)), y], axis=-1)  # NHWC
    h = jnp.pad(h, ((0, 0), (0, 0), (0, 0), (0, cin1_pad - (nc + 1))))
    h = h.astype(jnp.bfloat16)

    # conv1 + LeakyReLU -> (B,16,16,128); channels 64..127 are exactly zero.
    h = _conv_leaky(h, params["w1m"], tm_cap=2048)
    # conv2 + BN + LeakyReLU (fused); consumes only the 64 real channels.
    h = _conv_bn_leaky(h, params["w2m"], params["bn2_g"], params["bn2_b"],
                       cin_take=64, tm_cap=1024)                  # (B,8,8,128)
    # conv3 + BN + LeakyReLU (fused) -> (B,4,4,128); channels 64..127 zero.
    h = _conv_bn_leaky(h, params["w3m"], params["bn3_g"], params["bn3_b"],
                       cin_take=None, tm_cap=1024)
    # head: 4x4 conv == dense on the flattened map, sigmoid.
    out = _head_sigmoid(h, params["w4m"])                         # (B,)
    # torch: output.view(-1, 1).squeeze(1) -> (B,)
    return out


if __name__ == "__main__":
    key = jax.random.PRNGKey(0)
    kx, kl, kp = jax.random.split(key, 3)
    B, nc = 2, 3
    x = jax.random.normal(kx, (B, nc, 32, 32), jnp.float32)   # SVHN images (NCHW)
    labels = jax.random.randint(kl, (B,), 0, 10)              # class labels in [0, 10)
    params = init_params(kp, nc)

    out = discriminator_forward(params, x, labels)
    jax.block_until_ready(out)
    assert out.shape == (B,)
    assert bool(jnp.all(jnp.isfinite(out)))
    assert bool(jnp.all((out >= 0.0) & (out <= 1.0)))
    print("KERNEL_OK")
</pallas_src>

<mosaic_0001>
module attributes {stable_mosaic.version = 11 : i64} {
  func.func @_mm_leaky_kernel(%arg0: i32, %arg1: memref<512x128xbf16, #tpu.memory_space<vmem>>, %arg2: memref<128x128xbf16, #tpu.memory_space<vmem>>, %arg3: memref<512x128xbf16, #tpu.memory_space<vmem>>) attributes {dimension_semantics = [#tpu.dimension_semantics<parallel>], iteration_bounds = array<i64: 1>, scalar_prefetch = 0 : i64, scratch_operands = 0 : i64, tpu.core_type = #tpu.core_type<tc>, window_params = [{transform_indices = @transform_0, window_bounds = array<i64: 512, 128>}, {pipeline_mode = #tpu.pipeline_mode<synchronous>, transform_indices = @transform_1, window_bounds = array<i64: 128, 128>}, {transform_indices = @transform_2, window_bounds = array<i64: 512, 128>}]} {
    %c0 = arith.constant 0 : index
    %c0_0 = arith.constant 0 : index
    %0 = vector.load %arg1[%c0, %c0_0] : memref<512x128xbf16, #tpu.memory_space<vmem>>, vector<512x128xbf16>
    %c0_1 = arith.constant 0 : index
    %c0_2 = arith.constant 0 : index
    %1 = vector.load %arg2[%c0_1, %c0_2] : memref<128x128xbf16, #tpu.memory_space<vmem>>, vector<128x128xbf16>
    %cst = arith.constant dense<0.000000e+00> : vector<512x128xf32>
    %2 = tpu.matmul %0, %1, %cst {dimension_numbers = #tpu.dot_dimension_numbers<[1], [0], [0], [1], [0, 0, 1, 1], [], []>} : vector<512x128xbf16>, vector<128x128xbf16>, vector<512x128xf32> -> vector<512x128xf32>
    %cst_3 = arith.constant 0.000000e+00 : f32
    %3 = vector.broadcast %cst_3 : f32 to vector<512x128xf32>
    %4 = arith.cmpf ogt, %2, %3 : vector<512x128xf32>
    %cst_4 = arith.constant 2.000000e-01 : f32
    %5 = vector.broadcast %cst_4 : f32 to vector<512x128xf32>
    %6 = arith.mulf %5, %2 : vector<512x128xf32>
    %7 = arith.select %4, %2, %6 : vector<512x128xi1>, vector<512x128xf32>
    %8 = arith.truncf %7 : vector<512x128xf32> to vector<512x128xbf16>
    %c0_5 = arith.constant 0 : index
    %c0_6 = arith.constant 0 : index
    %9 = vector.load %arg3[%c0_5, %c0_6] : memref<512x128xbf16, #tpu.memory_space<vmem>>, vector<512x128xbf16>
    tpu.vector_store %arg3[%c0_5, %c0_6], %8 {strides = array<i32>} : memref<512x128xbf16, #tpu.memory_space<vmem>>, vector<512x128xbf16>,
    return
  }
  func.func @transform_0(%arg0: i32) -> (i32, i32) {
    %c0_i32 = arith.constant 0 : i32
    %c0_i32_0 = arith.constant 0 : i32
    return %arg0, %c0_i32 : i32, i32
  }
  func.func @transform_1(%arg0: i32) -> (i32, i32) {
    %c0_i32 = arith.constant 0 : i32
    %c0_i32_0 = arith.constant 0 : i32
    %c0_i32_1 = arith.constant 0 : i32
    return %c0_i32, %c0_i32_0 : i32, i32
  }
  func.func @transform_2(%arg0: i32) -> (i32, i32) {
    %c0_i32 = arith.constant 0 : i32
    %c0_i32_0 = arith.constant 0 : i32
    return %arg0, %c0_i32 : i32, i32
  }
}

module attributes {stable_mosaic.version = 11 : i64} {
  func.func @_conv_bn_leaky_kernel(%arg0: i32, %arg1: memref<128x1024xbf16, #tpu.memory_space<vmem>>, %arg2: memref<1024x128xbf16, #tpu.memory_space<vmem>>, %arg3: memref<1x128xf32, #tpu.memory_space<vmem>>, %arg4: memref<1x128xf32, #tpu.memory_space<vmem>>, %arg5: memref<128x128xbf16, #tpu.memory_space<vmem>>, %arg6: memref<1x128x128xf32, #tpu.memory_space<vmem>>, %arg7: memref<1x128xf32, #tpu.memory_space<vmem>>, %arg8: memref<1x128xf32, #tpu.memory_space<vmem>>) attributes {dimension_semantics = [#tpu.dimension_semantics<arbitrary>], iteration_bounds = array<i64: 1>, scalar_prefetch = 0 : i64, scratch_operands = 3 : i64, tpu.core_type = #tpu.core_type<tc>, window_params = [{transform_indices = @transform_0, window_bounds = array<i64: 128, 1024>}, {pipeline_mode = #tpu.pipeline_mode<synchronous>, transform_indices = @transform_1, window_bounds = array<i64: 1024, 128>}, {pipeline_mode = #tpu.pipeline_mode<synchronous>, transform_indices = @transform_2, window_bounds = array<i64: 1, 128>}, {pipeline_mode = #tpu.pipeline_mode<synchronous>, transform_indices = @transform_3, window_bounds = array<i64: 1, 128>}, {pipeline_mode = #tpu.pipeline_mode<synchronous>, transform_indices = @transform_4, window_bounds = array<i64: 128, 128>}]} {
    %c0_i32 = arith.constant 0 : i32
    %0 = arith.cmpi eq, %arg0, %c0_i32 : i32
    %1 = arith.extui %0 : i1 to i32
    %c0_i32_0 = arith.constant 0 : i32
    %2 = arith.cmpi ne, %1, %c0_i32_0 : i32
    scf.if %2 {
      %cst_18 = arith.constant 0.000000e+00 : f32
      %24 = vector.broadcast %cst_18 : f32 to vector<1x128xf32>
      %c0_19 = arith.constant 0 : index
      %c0_20 = arith.constant 0 : index
      %25 = vector.load %arg7[%c0_19, %c0_20] : memref<1x128xf32, #tpu.memory_space<vmem>>, vector<1x128xf32>
      tpu.vector_store %arg7[%c0_19, %c0_20], %24 {strides = array<i32>} : memref<1x128xf32, #tpu.memory_space<vmem>>, vector<1x128xf32>,
      %cst_21 = arith.constant 0.000000e+00 : f32
      %26 = vector.broadcast %cst_21 : f32 to vector<1x128xf32>
      %c0_22 = arith.constant 0 : index
      %c0_23 = arith.constant 0 : index
      %27 = vector.load %arg8[%c0_22, %c0_23] : memref<1x128xf32, #tpu.memory_space<vmem>>, vector<1x128xf32>
      tpu.vector_store %arg8[%c0_22, %c0_23], %26 {strides = array<i32>} : memref<1x128xf32, #tpu.memory_space<vmem>>, vector<1x128xf32>,
    } else {
    }
    %c0 = arith.constant 0 : index
    %c0_1 = arith.constant 0 : index
    %3 = vector.load %arg1[%c0, %c0_1] : memref<128x1024xbf16, #tpu.memory_space<vmem>>, vector<128x1024xbf16>
    %c0_2 = arith.constant 0 : index
    %c0_3 = arith.constant 0 : index
    %4 = vector.load %arg2[%c0_2, %c0_3] : memref<1024x128xbf16, #tpu.memory_space<vmem>>, vector<1024x128xbf16>
    %cst = arith.constant dense<0.000000e+00> : vector<128x128xf32>
    %5 = tpu.matmul %3, %4, %cst {dimension_numbers = #tpu.dot_dimension_numbers<[1], [0], [0], [1], [0, 0, 1, 1], [], []>} : vector<128x1024xbf16>, vector<1024x128xbf16>, vector<128x128xf32> -> vector<128x128xf32>
    %6 = arith.index_cast %arg0 : i32 to index
    %c0_4 = arith.constant 0 : index
    %c0_5 = arith.constant 0 : index
    %7 = vector.load %arg6[%6, %c0_4, %c0_5] : memref<1x128x128xf32, #tpu.memory_space<vmem>>, vector<1x128x128xf32>
    %8 = vector.shape_cast %7 : vector<1x128x128xf32> to vector<128x128xf32>
    %9 = vector.shape_cast %5 : vector<128x128xf32> to vector<1x128x128xf32>
    tpu.vector_store %arg6[%6, %c0_4, %c0_5], %9 {strides = array<i32>} : memref<1x128x128xf32, #tpu.memory_space<vmem>>, vector<1x128x128xf32>,
    %c0_6 = arith.constant 0 : index
    %c0_7 = arith.constant 0 : index
    %10 = vector.load %arg7[%c0_6, %c0_7] : memref<1x128xf32, #tpu.memory_space<vmem>>, vector<1x128xf32>
    %cst_8 = arith.constant dense<0.000000e+00> : vector<128xf32>
    %11 = vector.multi_reduction <add>, %5, %cst_8 [0] : vector<128x128xf32> to vector<128xf32>
    %12 = vector.shape_cast %11 : vector<128xf32> to vector<1x128xf32>
    %13 = arith.addf %10, %12 : vector<1x128xf32>
    %c0_9 = arith.constant 0 : index
    %c0_10 = arith.constant 0 : index
    %14 = vector.load %arg7[%c0_9, %c0_10] : memref<1x128xf32, #tpu.memory_space<vmem>>, vector<1x128xf32>
    tpu.vector_store %arg7[%c0_9, %c0_10], %13 {strides = array<i32>} : memref<1x128xf32, #tpu.memory_space<vmem>>, vector<1x128xf32>,
    %c0_11 = arith.constant 0 : index
    %c0_12 = arith.constant 0 : index
    %15 = vector.load %arg8[%c0_11, %c0_12] : memref<1x128xf32, #tpu.memory_space<vmem>>, vector<1x128xf32>
    %16 = arith.mulf %5, %5 : vector<128x128xf32>
    %cst_13 = arith.constant dense<0.000000e+00> : vector<128xf32>
    %17 = vector.multi_reduction <add>, %16, %cst_13 [0] : vector<128x128xf32> to vector<128xf32>
    %18 = vector.shape_cast %17 : vector<128xf32> to vector<1x128xf32>
    %19 = arith.addf %15, %18 : vector<1x128xf32>
    %c0_14 = arith.constant 0 : index
    %c0_15 = arith.constant 0 : index
    %20 = vector.load %arg8[%c0_14, %c0_15] : memref<1x128xf32, #tpu.memory_space<vmem>>, vector<1x128xf32>
    tpu.vector_store %arg8[%c0_14, %c0_15], %19 {strides = array<i32>} : memref<1x128xf32, #tpu.memory_space<vmem>>, vector<1x128xf32>,
    %c0_i32_16 = arith.constant 0 : i32
    %21 = arith.cmpi eq, %arg0, %c0_i32_16 : i32
    %22 = arith.extui %21 : i1 to i32
    %c0_i32_17 = arith.constant 0 : i32
    %23 = arith.cmpi ne, %22, %c0_i32_17 : i32
    scf.if %23 {
      %c0_18 = arith.constant 0 : index
      %c0_19 = arith.constant 0 : index
      %24 = vector.load %arg7[%c0_18, %c0_19] : memref<1x128xf32, #tpu.memory_space<vmem>>, vector<1x128xf32>
      %cst_20 = arith.constant 7.812500e-03 : f32
      %25 = vector.broadcast %cst_20 : f32 to vector<1x128xf32>
      %26 = arith.mulf %24, %25 : vector<1x128xf32>
      %c0_21 = arith.constant 0 : index
      %c0_22 = arith.constant 0 : index
      %27 = vector.load %arg8[%c0_21, %c0_22] : memref<1x128xf32, #tpu.memory_space<vmem>>, vector<1x128xf32>
      %cst_23 = arith.constant 7.812500e-03 : f32
      %28 = vector.broadcast %cst_23 : f32 to vector<1x128xf32>
      %29 = arith.mulf %27, %28 : vector<1x128xf32>
      %30 = arith.mulf %26, %26 : vector<1x128xf32>
      %31 = arith.subf %29, %30 : vector<1x128xf32>
      %c0_24 = arith.constant 0 : index
      %c0_25 = arith.constant 0 : index
      %32 = vector.load %arg3[%c0_24, %c0_25] : memref<1x128xf32, #tpu.memory_space<vmem>>, vector<1x128xf32>
      %cst_26 = arith.constant 9.99999974E-6 : f32
      %33 = vector.broadcast %cst_26 : f32 to vector<1x128xf32>
      %34 = arith.addf %31, %33 : vector<1x128xf32>
      %35 = math.rsqrt %34 : vector<1x128xf32>
      %36 = arith.mulf %32, %35 : vector<1x128xf32>
      %c0_27 = arith.constant 0 : index
      %c0_28 = arith.constant 0 : index
      %37 = vector.load %arg4[%c0_27, %c0_28] : memref<1x128xf32, #tpu.memory_space<vmem>>, vector<1x128xf32>
      %38 = arith.mulf %26, %36 : vector<1x128xf32>
      %39 = arith.subf %37, %38 : vector<1x128xf32>
      %c0_29 = arith.constant 0 : index
      %c0_30 = arith.constant 0 : index
      %c0_31 = arith.constant 0 : index
      %40 = vector.load %arg6[%c0_29, %c0_30, %c0_31] : memref<1x128x128xf32, #tpu.memory_space<vmem>>, vector<1x128x128xf32>
      %41 = vector.shape_cast %36 : vector<1x128xf32> to vector<1x1x128xf32>
      %42 = vector.broadcast %41 : vector<1x1x128xf32> to vector<1x128x128xf32>
      %43 = arith.mulf %40, %42 : vector<1x128x128xf32>
      %44 = vector.shape_cast %39 : vector<1x128xf32> to vector<1x1x128xf32>
      %45 = vector.broadcast %44 : vector<1x1x128xf32> to vector<1x128x128xf32>
      %46 = arith.addf %43, %45 : vector<1x128x128xf32>
      %cst_32 = arith.constant 0.000000e+00 : f32
      %47 = vector.broadcast %cst_32 : f32 to vector<1x128x128xf32>
      %48 = arith.cmpf ogt, %46, %47 : vector<1x128x128xf32>
      %cst_33 = arith.constant 2.000000e-01 : f32
      %49 = vector.broadcast %cst_33 : f32 to vector<1x128x128xf32>
      %50 = arith.mulf %49, %46 : vector<1x128x128xf32>
      %51 = arith.select %48, %46, %50 : vector<1x128x128xi1>, vector<1x128x128xf32>
      %52 = vector.shape_cast %51 : vector<1x128x128xf32> to vector<128x128xf32>
      %53 = arith.truncf %52 : vector<128x128xf32> to vector<128x128xbf16>
      %c0_34 = arith.constant 0 : index
      %c0_35 = arith.constant 0 : index
      %54 = vector.load %arg5[%c0_34, %c0_35] : memref<128x128xbf16, #tpu.memory_space<vmem>>, vector<128x128xbf16>
      tpu.vector_store %arg5[%c0_34, %c0_35], %53 {strides = array<i32>} : memref<128x128xbf16, #tpu.memory_space<vmem>>, vector<128x128xbf16>,
    } else {
    }
    return
  }
  func.func @transform_0(%arg0: i32) -> (i32, i32) {
    %c0_i32 = arith.constant 0 : i32
    %c0_i32_0 = arith.constant 0 : i32
    return %arg0, %c0_i32 : i32, i32
  }
  func.func @transform_1(%arg0: i32) -> (i32, i32) {
    %c0_i32 = arith.constant 0 : i32
    %c0_i32_0 = arith.constant 0 : i32
    %c0_i32_1 = arith.constant 0 : i32
    return %c0_i32, %c0_i32_0 : i32, i32
  }
  func.func @transform_2(%arg0: i32) -> (i32, i32) {
    %c0_i32 = arith.constant 0 : i32
    %c0_i32_0 = arith.constant 0 : i32
    %c0_i32_1 = arith.constant 0 : i32
    return %c0_i32, %c0_i32_0 : i32, i32
  }
  func.func @transform_3(%arg0: i32) -> (i32, i32) {
    %c0_i32 = arith.constant 0 : i32
    %c0_i32_0 = arith.constant 0 : i32
    %c0_i32_1 = arith.constant 0 : i32
    return %c0_i32, %c0_i32_0 : i32, i32
  }
  func.func @transform_4(%arg0: i32) -> (i32, i32) {
    %c0_i32 = arith.constant 0 : i32
    %c0_i32_0 = arith.constant 0 : i32
    %c0_i32_1 = arith.constant 0 : i32
    return %c0_i32, %c0_i32_0 : i32, i32
  }
}

module attributes {stable_mosaic.version = 11 : i64} {
  func.func @_conv_bn_leaky_kernel(%arg0: i32, %arg1: memref<32x2048xbf16, #tpu.memory_space<vmem>>, %arg2: memref<2048x128xbf16, #tpu.memory_space<vmem>>, %arg3: memref<1x128xf32, #tpu.memory_space<vmem>>, %arg4: memref<1x128xf32, #tpu.memory_space<vmem>>, %arg5: memref<32x128xbf16, #tpu.memory_space<vmem>>, %arg6: memref<1x32x128xf32, #tpu.memory_space<vmem>>, %arg7: memref<1x128xf32, #tpu.memory_space<vmem>>, %arg8: memref<1x128xf32, #tpu.memory_space<vmem>>) attributes {dimension_semantics = [#tpu.dimension_semantics<arbitrary>], iteration_bounds = array<i64: 1>, scalar_prefetch = 0 : i64, scratch_operands = 3 : i64, tpu.core_type = #tpu.core_type<tc>, window_params = [{transform_indices = @transform_0, window_bounds = array<i64: 32, 2048>}, {pipeline_mode = #tpu.pipeline_mode<synchronous>, transform_indices = @transform_1, window_bounds = array<i64: 2048, 128>}, {pipeline_mode = #tpu.pipeline_mode<synchronous>, transform_indices = @transform_2, window_bounds = array<i64: 1, 128>}, {pipeline_mode = #tpu.pipeline_mode<synchronous>, transform_indices = @transform_3, window_bounds = array<i64: 1, 128>}, {pipeline_mode = #tpu.pipeline_mode<synchronous>, transform_indices = @transform_4, window_bounds = array<i64: 32, 128>}]} {
    %c0_i32 = arith.constant 0 : i32
    %0 = arith.cmpi eq, %arg0, %c0_i32 : i32
    %1 = arith.extui %0 : i1 to i32
    %c0_i32_0 = arith.constant 0 : i32
    %2 = arith.cmpi ne, %1, %c0_i32_0 : i32
    scf.if %2 {
      %cst_18 = arith.constant 0.000000e+00 : f32
      %24 = vector.broadcast %cst_18 : f32 to vector<1x128xf32>
      %c0_19 = arith.constant 0 : index
      %c0_20 = arith.constant 0 : index
      %25 = vector.load %arg7[%c0_19, %c0_20] : memref<1x128xf32, #tpu.memory_space<vmem>>, vector<1x128xf32>
      tpu.vector_store %arg7[%c0_19, %c0_20], %24 {strides = array<i32>} : memref<1x128xf32, #tpu.memory_space<vmem>>, vector<1x128xf32>,
      %cst_21 = arith.constant 0.000000e+00 : f32
      %26 = vector.broadcast %cst_21 : f32 to vector<1x128xf32>
      %c0_22 = arith.constant 0 : index
      %c0_23 = arith.constant 0 : index
      %27 = vector.load %arg8[%c0_22, %c0_23] : memref<1x128xf32, #tpu.memory_space<vmem>>, vector<1x128xf32>
      tpu.vector_store %arg8[%c0_22, %c0_23], %26 {strides = array<i32>} : memref<1x128xf32, #tpu.memory_space<vmem>>, vector<1x128xf32>,
    } else {
    }
    %c0 = arith.constant 0 : index
    %c0_1 = arith.constant 0 : index
    %3 = vector.load %arg1[%c0, %c0_1] : memref<32x2048xbf16, #tpu.memory_space<vmem>>, vector<32x2048xbf16>
    %c0_2 = arith.constant 0 : index
    %c0_3 = arith.constant 0 : index
    %4 = vector.load %arg2[%c0_2, %c0_3] : memref<2048x128xbf16, #tpu.memory_space<vmem>>, vector<2048x128xbf16>
    %cst = arith.constant dense<0.000000e+00> : vector<32x128xf32>
    %5 = tpu.matmul %3, %4, %cst {dimension_numbers = #tpu.dot_dimension_numbers<[1], [0], [0], [1], [0, 0, 1, 1], [], []>} : vector<32x2048xbf16>, vector<2048x128xbf16>, vector<32x128xf32> -> vector<32x128xf32>
    %6 = arith.index_cast %arg0 : i32 to index
    %c0_4 = arith.constant 0 : index
    %c0_5 = arith.constant 0 : index
    %7 = vector.load %arg6[%6, %c0_4, %c0_5] : memref<1x32x128xf32, #tpu.memory_space<vmem>>, vector<1x32x128xf32>
    %8 = vector.shape_cast %7 : vector<1x32x128xf32> to vector<32x128xf32>
    %9 = vector.shape_cast %5 : vector<32x128xf32> to vector<1x32x128xf32>
    tpu.vector_store %arg6[%6, %c0_4, %c0_5], %9 {strides = array<i32>} : memref<1x32x128xf32, #tpu.memory_space<vmem>>, vector<1x32x128xf32>,
    %c0_6 = arith.constant 0 : index
    %c0_7 = arith.constant 0 : index
    %10 = vector.load %arg7[%c0_6, %c0_7] : memref<1x128xf32, #tpu.memory_space<vmem>>, vector<1x128xf32>
    %cst_8 = arith.constant dense<0.000000e+00> : vector<128xf32>
    %11 = vector.multi_reduction <add>, %5, %cst_8 [0] : vector<32x128xf32> to vector<128xf32>
    %12 = vector.shape_cast %11 : vector<128xf32> to vector<1x128xf32>
    %13 = arith.addf %10, %12 : vector<1x128xf32>
    %c0_9 = arith.constant 0 : index
    %c0_10 = arith.constant 0 : index
    %14 = vector.load %arg7[%c0_9, %c0_10] : memref<1x128xf32, #tpu.memory_space<vmem>>, vector<1x128xf32>
    tpu.vector_store %arg7[%c0_9, %c0_10], %13 {strides = array<i32>} : memref<1x128xf32, #tpu.memory_space<vmem>>, vector<1x128xf32>,
    %c0_11 = arith.constant 0 : index
    %c0_12 = arith.constant 0 : index
    %15 = vector.load %arg8[%c0_11, %c0_12] : memref<1x128xf32, #tpu.memory_space<vmem>>, vector<1x128xf32>
    %16 = arith.mulf %5, %5 : vector<32x128xf32>
    %cst_13 = arith.constant dense<0.000000e+00> : vector<128xf32>
    %17 = vector.multi_reduction <add>, %16, %cst_13 [0] : vector<32x128xf32> to vector<128xf32>
    %18 = vector.shape_cast %17 : vector<128xf32> to vector<1x128xf32>
    %19 = arith.addf %15, %18 : vector<1x128xf32>
    %c0_14 = arith.constant 0 : index
    %c0_15 = arith.constant 0 : index
    %20 = vector.load %arg8[%c0_14, %c0_15] : memref<1x128xf32, #tpu.memory_space<vmem>>, vector<1x128xf32>
    tpu.vector_store %arg8[%c0_14, %c0_15], %19 {strides = array<i32>} : memref<1x128xf32, #tpu.memory_space<vmem>>, vector<1x128xf32>,
    %c0_i32_16 = arith.constant 0 : i32
    %21 = arith.cmpi eq, %arg0, %c0_i32_16 : i32
    %22 = arith.extui %21 : i1 to i32
    %c0_i32_17 = arith.constant 0 : i32
    %23 = arith.cmpi ne, %22, %c0_i32_17 : i32
    scf.if %23 {
      %c0_18 = arith.constant 0 : index
      %c0_19 = arith.constant 0 : index
      %24 = vector.load %arg7[%c0_18, %c0_19] : memref<1x128xf32, #tpu.memory_space<vmem>>, vector<1x128xf32>
      %cst_20 = arith.constant 3.125000e-02 : f32
      %25 = vector.broadcast %cst_20 : f32 to vector<1x128xf32>
      %26 = arith.mulf %24, %25 : vector<1x128xf32>
      %c0_21 = arith.constant 0 : index
      %c0_22 = arith.constant 0 : index
      %27 = vector.load %arg8[%c0_21, %c0_22] : memref<1x128xf32, #tpu.memory_space<vmem>>, vector<1x128xf32>
      %cst_23 = arith.constant 3.125000e-02 : f32
      %28 = vector.broadcast %cst_23 : f32 to vector<1x128xf32>
      %29 = arith.mulf %27, %28 : vector<1x128xf32>
      %30 = arith.mulf %26, %26 : vector<1x128xf32>
      %31 = arith.subf %29, %30 : vector<1x128xf32>
      %c0_24 = arith.constant 0 : index
      %c0_25 = arith.constant 0 : index
      %32 = vector.load %arg3[%c0_24, %c0_25] : memref<1x128xf32, #tpu.memory_space<vmem>>, vector<1x128xf32>
      %cst_26 = arith.constant 9.99999974E-6 : f32
      %33 = vector.broadcast %cst_26 : f32 to vector<1x128xf32>
      %34 = arith.addf %31, %33 : vector<1x128xf32>
      %35 = math.rsqrt %34 : vector<1x128xf32>
      %36 = arith.mulf %32, %35 : vector<1x128xf32>
      %c0_27 = arith.constant 0 : index
      %c0_28 = arith.constant 0 : index
      %37 = vector.load %arg4[%c0_27, %c0_28] : memref<1x128xf32, #tpu.memory_space<vmem>>, vector<1x128xf32>
      %38 = arith.mulf %26, %36 : vector<1x128xf32>
      %39 = arith.subf %37, %38 : vector<1x128xf32>
      %c0_29 = arith.constant 0 : index
      %c0_30 = arith.constant 0 : index
      %c0_31 = arith.constant 0 : index
      %40 = vector.load %arg6[%c0_29, %c0_30, %c0_31] : memref<1x32x128xf32, #tpu.memory_space<vmem>>, vector<1x32x128xf32>
      %41 = vector.shape_cast %36 : vector<1x128xf32> to vector<1x1x128xf32>
      %42 = vector.broadcast %41 : vector<1x1x128xf32> to vector<1x32x128xf32>
      %43 = arith.mulf %40, %42 : vector<1x32x128xf32>
      %44 = vector.shape_cast %39 : vector<1x128xf32> to vector<1x1x128xf32>
      %45 = vector.broadcast %44 : vector<1x1x128xf32> to vector<1x32x128xf32>
      %46 = arith.addf %43, %45 : vector<1x32x128xf32>
      %cst_32 = arith.constant 0.000000e+00 : f32
      %47 = vector.broadcast %cst_32 : f32 to vector<1x32x128xf32>
      %48 = arith.cmpf ogt, %46, %47 : vector<1x32x128xf32>
      %cst_33 = arith.constant 2.000000e-01 : f32
      %49 = vector.broadcast %cst_33 : f32 to vector<1x32x128xf32>
      %50 = arith.mulf %49, %46 : vector<1x32x128xf32>
      %51 = arith.select %48, %46, %50 : vector<1x32x128xi1>, vector<1x32x128xf32>
      %52 = vector.shape_cast %51 : vector<1x32x128xf32> to vector<32x128xf32>
      %53 = arith.truncf %52 : vector<32x128xf32> to vector<32x128xbf16>
      %c0_34 = arith.constant 0 : index
      %c0_35 = arith.constant 0 : index
      %54 = vector.load %arg5[%c0_34, %c0_35] : memref<32x128xbf16, #tpu.memory_space<vmem>>, vector<32x128xbf16>
      tpu.vector_store %arg5[%c0_34, %c0_35], %53 {strides = array<i32>} : memref<32x128xbf16, #tpu.memory_space<vmem>>, vector<32x128xbf16>,
    } else {
    }
    return
  }
  func.func @transform_0(%arg0: i32) -> (i32, i32) {
    %c0_i32 = arith.constant 0 : i32
    %c0_i32_0 = arith.constant 0 : i32
    return %arg0, %c0_i32 : i32, i32
  }
  func.func @transform_1(%arg0: i32) -> (i32, i32) {
    %c0_i32 = arith.constant 0 : i32
    %c0_i32_0 = arith.constant 0 : i32
    %c0_i32_1 = arith.constant 0 : i32
    return %c0_i32, %c0_i32_0 : i32, i32
  }
  func.func @transform_2(%arg0: i32) -> (i32, i32) {
    %c0_i32 = arith.constant 0 : i32
    %c0_i32_0 = arith.constant 0 : i32
    %c0_i32_1 = arith.constant 0 : i32
    return %c0_i32, %c0_i32_0 : i32, i32
  }
  func.func @transform_3(%arg0: i32) -> (i32, i32) {
    %c0_i32 = arith.constant 0 : i32
    %c0_i32_0 = arith.constant 0 : i32
    %c0_i32_1 = arith.constant 0 : i32
    return %c0_i32, %c0_i32_0 : i32, i32
  }
  func.func @transform_4(%arg0: i32) -> (i32, i32) {
    %c0_i32 = arith.constant 0 : i32
    %c0_i32_0 = arith.constant 0 : i32
    %c0_i32_1 = arith.constant 0 : i32
    return %c0_i32, %c0_i32_0 : i32, i32
  }
}

module attributes {stable_mosaic.version = 11 : i64} {
  func.func @_mm_sigmoid_kernel(%arg0: i32, %arg1: memref<8x2048xbf16, #tpu.memory_space<vmem>>, %arg2: memref<2048x128xbf16, #tpu.memory_space<vmem>>, %arg3: memref<8x128xf32, #tpu.memory_space<vmem>>) attributes {dimension_semantics = [#tpu.dimension_semantics<parallel>], iteration_bounds = array<i64: 1>, scalar_prefetch = 0 : i64, scratch_operands = 0 : i64, tpu.core_type = #tpu.core_type<tc>, window_params = [{pipeline_mode = #tpu.pipeline_mode<synchronous>, transform_indices = @transform_0, window_bounds = array<i64: 8, 2048>}, {pipeline_mode = #tpu.pipeline_mode<synchronous>, transform_indices = @transform_1, window_bounds = array<i64: 2048, 128>}, {pipeline_mode = #tpu.pipeline_mode<synchronous>, transform_indices = @transform_2, window_bounds = array<i64: 8, 128>}]} {
    %c0 = arith.constant 0 : index
    %c0_0 = arith.constant 0 : index
    %0 = vector.load %arg1[%c0, %c0_0] : memref<8x2048xbf16, #tpu.memory_space<vmem>>, vector<8x2048xbf16>
    %c0_1 = arith.constant 0 : index
    %c0_2 = arith.constant 0 : index
    %1 = vector.load %arg2[%c0_1, %c0_2] : memref<2048x128xbf16, #tpu.memory_space<vmem>>, vector<2048x128xbf16>
    %cst = arith.constant dense<0.000000e+00> : vector<8x128xf32>
    %2 = tpu.matmul %0, %1, %cst {dimension_numbers = #tpu.dot_dimension_numbers<[1], [0], [0], [1], [0, 0, 1, 1], [], []>} : vector<8x2048xbf16>, vector<2048x128xbf16>, vector<8x128xf32> -> vector<8x128xf32>
    %3 = arith.negf %2 : vector<8x128xf32>
    %4 = math.exp %3 : vector<8x128xf32>
    %cst_3 = arith.constant 1.000000e+00 : f32
    %5 = vector.broadcast %cst_3 : f32 to vector<8x128xf32>
    %6 = arith.addf %5, %4 : vector<8x128xf32>
    %7 = arith.divf %5, %6 : vector<8x128xf32>
    %c0_4 = arith.constant 0 : index
    %c0_5 = arith.constant 0 : index
    %8 = vector.load %arg3[%c0_4, %c0_5] : memref<8x128xf32, #tpu.memory_space<vmem>>, vector<8x128xf32>
    tpu.vector_store %arg3[%c0_4, %c0_5], %7 {strides = array<i32>} : memref<8x128xf32, #tpu.memory_space<vmem>>, vector<8x128xf32>,
    return
  }
  func.func @transform_0(%arg0: i32) -> (i32, i32) {
    %c0_i32 = arith.constant 0 : i32
    %c0_i32_0 = arith.constant 0 : i32
    %c0_i32_1 = arith.constant 0 : i32
    return %c0_i32, %c0_i32_0 : i32, i32
  }
  func.func @transform_1(%arg0: i32) -> (i32, i32) {
    %c0_i32 = arith.constant 0 : i32
    %c0_i32_0 = arith.constant 0 : i32
    %c0_i32_1 = arith.constant 0 : i32
    return %c0_i32, %c0_i32_0 : i32, i32
  }
  func.func @transform_2(%arg0: i32) -> (i32, i32) {
    %c0_i32 = arith.constant 0 : i32
    %c0_i32_0 = arith.constant 0 : i32
    %c0_i32_1 = arith.constant 0 : i32
    return %c0_i32, %c0_i32_0 : i32, i32
  }
}

</mosaic_0001>

<llo_original>
// kernel: discriminator_forward.4
$region0: #{discriminator_forward.4}
  #allocation0 [shape = 'u32[]', space=smem, size = 0x4, offset = 0x4, fixed_abs, tag = 'smem constant byte address 0x4 - core index']
  #allocation1 [shape = 'u32[144,128]{1,0:T(1,128)}', space=vmem, size = 0x12000, scoped, tag = 'internal scratch']
  %s0 = inlined_call_operand.vmem [shape: bf16[512,128], index: 0, kind: input, shape index: {}]
  %s1 = inlined_call_operand.vmem [shape: bf16[128,128], index: 1, kind: input, shape index: {}]
  %s2 = inlined_call_operand.vmem [shape: bf16[512,128], index: 2, kind: output, shape index: {}]
  %s3 = sld [smem:[#allocation0]]
  $region18: #{discriminator_forward.4} parent=0
    _
  %s5 = ssub.s32 1, %s3
  %s6 = scalar_select 0, %s5, %s3
  // Predicated region
  $region2: #{discriminator_forward.4} parent=0 // pred_check
    _
  $region3: #{discriminator_forward.4} parent=0 // pred_check_branch
    %8 = sbr.rel (0) target = $region5
  $region4: #{discriminator_forward.4} parent=0 // pred_region
    _
  $region5: #{discriminator_forward.4} parent=0 // pred_fallthru
    _
  // Predicated region
  $region6: #{discriminator_forward.4} parent=0 // pred_check
    _
  $region7: #{discriminator_forward.4} parent=0 // pred_check_branch
    %10 = sbr.rel (0) target = $region9
  $region8: #{discriminator_forward.4} parent=0 // pred_region
    _
  $region9: #{discriminator_forward.4} parent=0 // pred_fallthru
    _
  %v12 = vld [vmem:[%s0] sm:$0xf]
  %v13 = vld [vmem:[%s0 + $0x4] sm:$0xf]
  %v14 = vld [vmem:[%s0 + $0x8] sm:$0xf]
  %v15 = vld [vmem:[%s0 + $0xc] sm:$0xf]
  %v16 = vld [vmem:[%s0 + $0x10] sm:$0xf]
  %v17 = vld [vmem:[%s0 + $0x14] sm:$0xf]
  %v18 = vld [vmem:[%s0 + $0x18] sm:$0xf]
  %v19 = vld [vmem:[%s0 + $0x1c] sm:$0xf]
  %v20 = vld [vmem:[%s0 + $0x20] sm:$0xf]
  %v21 = vld [vmem:[%s0 + $0x24] sm:$0xf]
  %v22 = vld [vmem:[%s0 + $0x28] sm:$0xf]
  %v23 = vld [vmem:[%s0 + $0x2c] sm:$0xf]
  %v24 = vld [vmem:[%s0 + $0x30] sm:$0xf]
  %v25 = vld [vmem:[%s0 + $0x34] sm:$0xf]
  %v26 = vld [vmem:[%s0 + $0x38] sm:$0xf]
  %v27 = vld [vmem:[%s0 + $0x3c] sm:$0xf]
  %v28 = vld [vmem:[%s0 + $0x40] sm:$0xf]
  %v29 = vld [vmem:[%s0 + $0x44] sm:$0xf]
  %v30 = vld [vmem:[%s0 + $0x48] sm:$0xf]
  %v31 = vld [vmem:[%s0 + $0x4c] sm:$0xf]
  %v32 = vld [vmem:[%s0 + $0x50] sm:$0xf]
  %v33 = vld [vmem:[%s0 + $0x54] sm:$0xf]
  %v34 = vld [vmem:[%s0 + $0x58] sm:$0xf]
  %v35 = vld [vmem:[%s0 + $0x5c] sm:$0xf]
  %v36 = vld [vmem:[%s0 + $0x60] sm:$0xf]
  %v37 = vld [vmem:[%s0 + $0x64] sm:$0xf]
  %v38 = vld [vmem:[%s0 + $0x68] sm:$0xf]
  %v39 = vld [vmem:[%s0 + $0x6c] sm:$0xf]
  %v40 = vld [vmem:[%s0 + $0x70] sm:$0xf]
  %v41 = vld [vmem:[%s0 + $0x74] sm:$0xf]
  %v42 = vld [vmem:[%s0 + $0x78] sm:$0xf]
  %v43 = vld [vmem:[%s0 + $0x7c] sm:$0xf]
  %v44 = vld [vmem:[%s0 + $0x80] sm:$0xf]
  %v45 = vld [vmem:[%s0 + $0x84] sm:$0xf]
  %v46 = vld [vmem:[%s0 + $0x88] sm:$0xf]
  %v47 = vld [vmem:[%s0 + $0x8c] sm:$0xf]
  %v48 = vld [vmem:[%s0 + $0x90] sm:$0xf]
  %v49 = vld [vmem:[%s0 + $0x94] sm:$0xf]
  %v50 = vld [vmem:[%s0 + $0x98] sm:$0xf]
  %v51 = vld [vmem:[%s0 + $0x9c] sm:$0xf]
  %v52 = vld [vmem:[%s0 + $0xa0] sm:$0xf]
  %v53 = vld [vmem:[%s0 + $0xa4] sm:$0xf]
  %v54 = vld [vmem:[%s0 + $0xa8] sm:$0xf]
  %v55 = vld [vmem:[%s0 + $0xac] sm:$0xf]
  %v56 = vld [vmem:[%s0 + $0xb0] sm:$0xf]
  %v57 = vld [vmem:[%s0 + $0xb4] sm:$0xf]
  %v58 = vld [vmem:[%s0 + $0xb8] sm:$0xf]
  %v59 = vld [vmem:[%s0 + $0xbc] sm:$0xf]
  %v60 = vld [vmem:[%s0 + $0xc0] sm:$0xf]
  %v61 = vld [vmem:[%s0 + $0xc4] sm:$0xf]
  %v62 = vld [vmem:[%s0 + $0xc8] sm:$0xf]
  %v63 = vld [vmem:[%s0 + $0xcc] sm:$0xf]
  %v64 = vld [vmem:[%s0 + $0xd0] sm:$0xf]
  %v65 = vld [vmem:[%s0 + $0xd4] sm:$0xf]
  %v66 = vld [vmem:[%s0 + $0xd8] sm:$0xf]
  %v67 = vld [vmem:[%s0 + $0xdc] sm:$0xf]
  %v68 = vld [vmem:[%s0 + $0xe0] sm:$0xf]
  %v69 = vld [vmem:[%s0 + $0xe4] sm:$0xf]
  %v70 = vld [vmem:[%s0 + $0xe8] sm:$0xf]
  %v71 = vld [vmem:[%s0 + $0xec] sm:$0xf]
  %v72 = vld [vmem:[%s0 + $0xf0] sm:$0xf]
  %v73 = vld [vmem:[%s0 + $0xf4] sm:$0xf]
  %v74 = vld [vmem:[%s0 + $0xf8] sm:$0xf]
  %v75 = vld [vmem:[%s0 + $0xfc] sm:$0xf]
  %v76 = vld [vmem:[%s1] sm:$0xf]
  %v77 = vld [vmem:[%s1 + $0x4] sm:$0xf]
  %v78 = vld [vmem:[%s1 + $0x8] sm:$0xf]
  %v79 = vld [vmem:[%s1 + $0xc] sm:$0xf]
  %v80 = vld [vmem:[%s1 + $0x10] sm:$0xf]
  %v81 = vld [vmem:[%s1 + $0x14] sm:$0xf]
  %v82 = vld [vmem:[%s1 + $0x18] sm:$0xf]
  %v83 = vld [vmem:[%s1 + $0x1c] sm:$0xf]
  %v84 = vld [vmem:[%s1 + $0x20] sm:$0xf]
  %v85 = vld [vmem:[%s1 + $0x24] sm:$0xf]
  %v86 = vld [vmem:[%s1 + $0x28] sm:$0xf]
  %v87 = vld [vmem:[%s1 + $0x2c] sm:$0xf]
  %v88 = vld [vmem:[%s1 + $0x30] sm:$0xf]
  %v89 = vld [vmem:[%s1 + $0x34] sm:$0xf]
  %v90 = vld [vmem:[%s1 + $0x38] sm:$0xf]
  %v91 = vld [vmem:[%s1 + $0x3c] sm:$0xf]
  %v156 = vunpack.c.l.b16 %v12
  %v157 = vunpack.c.l.b16 %v13
  %v158 = vunpack.c.l.b16 %v14
  %v159 = vunpack.c.l.b16 %v15
  %v160 = vunpack.c.l.b16 %v16
  %v161 = vunpack.c.l.b16 %v17
  %v162 = vunpack.c.l.b16 %v18
  %v163 = vunpack.c.l.b16 %v19
  %v164 = vunpack.c.l.b16 %v20
  %v165 = vunpack.c.l.b16 %v21
  %v166 = vunpack.c.l.b16 %v22
  %v167 = vunpack.c.l.b16 %v23
  %v168 = vunpack.c.l.b16 %v24
  %v169 = vunpack.c.l.b16 %v25
  %v170 = vunpack.c.l.b16 %v26
  %v171 = vunpack.c.l.b16 %v27
  %v172 = vunpack.c.l.b16 %v28
  %v173 = vunpack.c.l.b16 %v29
  %v174 = vunpack.c.l.b16 %v30
  %v175 = vunpack.c.l.b16 %v31
  %v176 = vunpack.c.l.b16 %v32
  %v177 = vunpack.c.l.b16 %v33
  %v178 = vunpack.c.l.b16 %v34
  %v179 = vunpack.c.l.b16 %v35
  %v180 = vunpack.c.l.b16 %v36
  %v181 = vunpack.c.l.b16 %v37
  %v182 = vunpack.c.l.b16 %v38
  %v183 = vunpack.c.l.b16 %v39
  %v184 = vunpack.c.l.b16 %v40
  %v185 = vunpack.c.l.b16 %v41
  %v186 = vunpack.c.l.b16 %v42
  %v187 = vunpack.c.l.b16 %v43
  %v188 = vunpack.c.l.b16 %v44
  %v189 = vunpack.c.l.b16 %v45
  %v190 = vunpack.c.l.b16 %v46
  %v191 = vunpack.c.l.b16 %v47
  %v192 = vunpack.c.l.b16 %v48
  %v193 = vunpack.c.l.b16 %v49
  %v194 = vunpack.c.l.b16 %v50
  %v195 = vunpack.c.l.b16 %v51
  %v196 = vunpack.c.l.b16 %v52
  %v197 = vunpack.c.l.b16 %v53
  %v198 = vunpack.c.l.b16 %v54
  %v199 = vunpack.c.l.b16 %v55
  %v200 = vunpack.c.l.b16 %v56
  %v201 = vunpack.c.l.b16 %v57
  %v202 = vunpack.c.l.b16 %v58
  %v203 = vunpack.c.l.b16 %v59
  %v204 = vunpack.c.l.b16 %v60
  %v205 = vunpack.c.l.b16 %v61
  %v206 = vunpack.c.l.b16 %v62
  %v207 = vunpack.c.l.b16 %v63
  %v208 = vunpack.c.l.b16 %v64
  %v209 = vunpack.c.l.b16 %v65
  %v210 = vunpack.c.l.b16 %v66
  %v211 = vunpack.c.l.b16 %v67
  %v212 = vunpack.c.l.b16 %v68
  %v213 = vunpack.c.l.b16 %v69
  %v214 = vunpack.c.l.b16 %v70
  %v215 = vunpack.c.l.b16 %v71
  %v216 = vunpack.c.l.b16 %v72
  %v217 = vunpack.c.l.b16 %v73
  %v218 = vunpack.c.l.b16 %v74
  %v219 = vunpack.c.l.b16 %v75
  %v220 = vpack.c.b16 %v157, %v156
  %v221 = vpack.c.b16 %v159, %v158
  %v222 = vpack.c.b16 %v161, %v160
  %v223 = vpack.c.b16 %v163, %v162
  %v224 = vpack.c.b16 %v165, %v164
  %v225 = vpack.c.b16 %v167, %v166
  %v226 = vpack.c.b16 %v169, %v168
  %v227 = vpack.c.b16 %v171, %v170
  %v228 = vpack.c.b16 %v173, %v172
  %v229 = vpack.c.b16 %v175, %v174
  %v230 = vpack.c.b16 %v177, %v176
  %v231 = vpack.c.b16 %v179, %v178
  %v232 = vpack.c.b16 %v181, %v180
  %v233 = vpack.c.b16 %v183, %v182
  %v234 = vpack.c.b16 %v185, %v184
  %v235 = vpack.c.b16 %v187, %v186
  %v236 = vpack.c.b16 %v189, %v188
  %v237 = vpack.c.b16 %v191, %v190
  %v238 = vpack.c.b16 %v193, %v192
  %v239 = vpack.c.b16 %v195, %v194
  %v240 = vpack.c.b16 %v197, %v196
  %v241 = vpack.c.b16 %v199, %v198
  %v242 = vpack.c.b16 %v201, %v200
  %v243 = vpack.c.b16 %v203, %v202
  %v244 = vpack.c.b16 %v205, %v204
  %v245 = vpack.c.b16 %v207, %v206
  %v246 = vpack.c.b16 %v209, %v208
  %v247 = vpack.c.b16 %v211, %v210
  %v248 = vpack.c.b16 %v213, %v212
  %v249 = vpack.c.b16 %v215, %v214
  %v250 = vpack.c.b16 %v217, %v216
  %v251 = vpack.c.b16 %v219, %v218
  %v300 = vunpack.c.l.b16 %v76
  %v301 = vunpack.c.l.b16 %v77
  %v302 = vunpack.c.l.b16 %v78
  %v303 = vunpack.c.l.b16 %v79
  %v304 = vunpack.c.l.b16 %v80
  %v305 = vunpack.c.l.b16 %v81
  %v306 = vunpack.c.l.b16 %v82
  %v307 = vunpack.c.l.b16 %v83
  %v308 = vunpack.c.l.b16 %v84
  %v309 = vunpack.c.l.b16 %v85
  %v310 = vunpack.c.l.b16 %v86
  %v311 = vunpack.c.l.b16 %v87
  %v312 = vunpack.c.l.b16 %v88
  %v313 = vunpack.c.l.b16 %v89
  %v314 = vunpack.c.l.b16 %v90
  %v315 = vunpack.c.l.b16 %v91
  %v316 = vpack.c.b16 %v301, %v300
  %v317 = vpack.c.b16 %v303, %v302
  %v318 = vpack.c.b16 %v305, %v304
  %v319 = vpack.c.b16 %v307, %v306
  %v320 = vpack.c.b16 %v309, %v308
  %v321 = vpack.c.b16 %v311, %v310
  %v322 = vpack.c.b16 %v313, %v312
  %v323 = vpack.c.b16 %v315, %v314
  %332 = vmatprep.subr.bf16.mxu0 0
  %333 = vmatpush1.bf16.msra.mxu0 %v316
  %334 = vmatprep.subr.bf16.mxu0 0
  %335 = vmatpush1.bf16.msra.mxu0 %v317
  %336 = vmatprep.subr.bf16.mxu0 0
  %337 = vmatpush1.bf16.msra.mxu0 %v318
  %338 = vmatprep.subr.bf16.mxu0 0
  %339 = vmatpush1.bf16.msra.mxu0 %v319
  %340 = vmatprep.subr.bf16.mxu0 0
  %341 = vmatpush1.bf16.msra.mxu0 %v320
  %342 = vmatprep.subr.bf16.mxu0 0
  %343 = vmatpush1.bf16.msra.mxu0 %v321
  %344 = vmatprep.subr.bf16.mxu0 0
  %345 = vmatpush1.bf16.msra.mxu0 %v322
  %346 = vmatprep.subr.bf16.mxu0 0
  %347 = vmatpush1.bf16.msra.mxu0 %v323
  %348 = vmatprep.subr.bf16.mxu0 0
  %349 = vmatpush1.bf16.msra.mxu0 0
  %350 = vmatprep.subr.bf16.mxu0 0
  %351 = vmatpush1.bf16.msra.mxu0 0
  %352 = vmatprep.subr.bf16.mxu0 0
  %353 = vmatpush1.bf16.msra.mxu0 0
  %354 = vmatprep.subr.bf16.mxu0 0
  %355 = vmatpush1.bf16.msra.mxu0 0
  %356 = vmatprep.subr.bf16.mxu0 0
  %357 = vmatpush1.bf16.msra.mxu0 0
  %358 = vmatprep.subr.bf16.mxu0 0
  %359 = vmatpush1.bf16.msra.mxu0 0
  %360 = vmatprep.subr.bf16.mxu0 0
  %361 = vmatpush1.bf16.msra.mxu0 0
  %362 = vmatprep.subr.bf16.mxu0 0
  %363 = vmatpush1.bf16.msra.mxu0 0
  %364 = vmatprep.mubr.bf16.mxu0 0
  %365 = vmatmul.mubr.bf16.gmra.mrb[0].mxu0 %v220
  %v366 = vpop.f32.mrb[0].mxu0
  %v367 = vadd.f32 0.0, %v366
  %v368 = vpop.f32.mrb[0].mxu0
  %v369 = vpop.f32.mrb[0].mxu0
  %v370 = vadd.f32 0.0, %v369
  %v371 = vpop.f32.mrb[0].mxu0
  %372 = vmatprep.mubr.bf16.mxu0 0
  %373 = vmatmul.mubr.bf16.gmra.mrb[0].mxu0 %v221
  %v374 = vpop.f32.mrb[0].mxu0
  %v375 = vadd.f32 0.0, %v374
  %v376 = vpop.f32.mrb[0].mxu0
  %v377 = vpop.f32.mrb[0].mxu0
  %v378 = vadd.f32 0.0, %v377
  %v379 = vpop.f32.mrb[0].mxu0
  %380 = vmatprep.mubr.bf16.mxu0 0
  %381 = vmatmul.mubr.bf16.gmra.mrb[0].mxu0 %v222
  %v382 = vpop.f32.mrb[0].mxu0
  %v383 = vadd.f32 0.0, %v382
  %v384 = vpop.f32.mrb[0].mxu0
  %v385 = vpop.f32.mrb[0].mxu0
  %v386 = vadd.f32 0.0, %v385
  %v387 = vpop.f32.mrb[0].mxu0
  %388 = vmatprep.mubr.bf16.mxu0 0
  %389 = vmatmul.mubr.bf16.gmra.mrb[0].mxu0 %v223
  %v390 = vpop.f32.mrb[0].mxu0
  %v391 = vadd.f32 0.0, %v390
  %v392 = vpop.f32.mrb[0].mxu0
  %v393 = vpop.f32.mrb[0].mxu0
  %v394 = vadd.f32 0.0, %v393
  %v395 = vpop.f32.mrb[0].mxu0
  %396 = vmatprep.mubr.bf16.mxu0 0
  %397 = vmatmul.mubr.bf16.gmra.mrb[0].mxu0 %v224
  %v398 = vpop.f32.mrb[0].mxu0
  %v399 = vadd.f32 0.0, %v398
  %v400 = vpop.f32.mrb[0].mxu0
  %v401 = vpop.f32.mrb[0].mxu0
  %v402 = vadd.f32 0.0, %v401
  %v403 = vpop.f32.mrb[0].mxu0
  %404 = vmatprep.mubr.bf16.mxu0 0
  %405 = vmatmul.mubr.bf16.gmra.mrb[0].mxu0 %v225
  %v406 = vpop.f32.mrb[0].mxu0
  %v407 = vadd.f32 0.0, %v406
  %v408 = vpop.f32.mrb[0].mxu0
  %v409 = vpop.f32.mrb[0].mxu0
  %v410 = vadd.f32 0.0, %v409
  %v411 = vpop.f32.mrb[0].mxu0
  %412 = vmatprep.mubr.bf16.mxu0 0
  %413 = vmatmul.mubr.bf16.gmra.mrb[0].mxu0 %v226
  %v414 = vpop.f32.mrb[0].mxu0
  %v415 = vadd.f32 0.0, %v414
  %v416 = vpop.f32.mrb[0].mxu0
  %v417 = vpop.f32.mrb[0].mxu0
  %v418 = vadd.f32 0.0, %v417
  %v419 = vpop.f32.mrb[0].mxu0
  %420 = vmatprep.mubr.bf16.mxu0 0
  %421 = vmatmul.mubr.bf16.gmra.mrb[0].mxu0 %v227
  %v422 = vpop.f32.mrb[0].mxu0
  %v423 = vadd.f32 0.0, %v422
  %v424 = vpop.f32.mrb[0].mxu0
  %v425 = vpop.f32.mrb[0].mxu0
  %v426 = vadd.f32 0.0, %v425
  %v427 = vpop.f32.mrb[0].mxu0
  %428 = vmatprep.mubr.bf16.mxu0 0
  %429 = vmatmul.mubr.bf16.gmra.mrb[0].mxu0 %v228
  %v430 = vpop.f32.mrb[0].mxu0
  %v431 = vadd.f32 0.0, %v430
  %v432 = vpop.f32.mrb[0].mxu0
  %v433 = vpop.f32.mrb[0].mxu0
  %v434 = vadd.f32 0.0, %v433
  %v435 = vpop.f32.mrb[0].mxu0
  %436 = vmatprep.mubr.bf16.mxu0 0
  %437 = vmatmul.mubr.bf16.gmra.mrb[0].mxu0 %v229
  %v438 = vpop.f32.mrb[0].mxu0
  %v439 = vadd.f32 0.0, %v438
  %v440 = vpop.f32.mrb[0].mxu0
  %v441 = vpop.f32.mrb[0].mxu0
  %v442 = vadd.f32 0.0, %v441
  %v443 = vpop.f32.mrb[0].mxu0
  %444 = vmatprep.mubr.bf16.mxu0 0
  %445 = vmatmul.mubr.bf16.gmra.mrb[0].mxu0 %v230
  %v446 = vpop.f32.mrb[0].mxu0
  %v447 = vadd.f32 0.0, %v446
  %v448 = vpop.f32.mrb[0].mxu0
  %v449 = vpop.f32.mrb[0].mxu0
  %v450 = vadd.f32 0.0, %v449
  %v451 = vpop.f32.mrb[0].mxu0
  %452 = vmatprep.mubr.bf16.mxu0 0
  %453 = vmatmul.mubr.bf16.gmra.mrb[0].mxu0 %v231
  %v454 = vpop.f32.mrb[0].mxu0
  %v455 = vadd.f32 0.0, %v454
  %v456 = vpop.f32.mrb[0].mxu0
  %v457 = vpop.f32.mrb[0].mxu0
  %v458 = vadd.f32 0.0, %v457
  %v459 = vpop.f32.mrb[0].mxu0
  %460 = vmatprep.mubr.bf16.mxu0 0
  %461 = vmatmul.mubr.bf16.gmra.mrb[0].mxu0 %v232
  %v462 = vpop.f32.mrb[0].mxu0
  %v463 = vadd.f32 0.0, %v462
  %v464 = vpop.f32.mrb[0].mxu0
  %v465 = vpop.f32.mrb[0].mxu0
  %v466 = vadd.f32 0.0, %v465
  %v467 = vpop.f32.mrb[0].mxu0
  %468 = vmatprep.mubr.bf16.mxu0 0
  %469 = vmatmul.mubr.bf16.gmra.mrb[0].mxu0 %v233
  %v470 = vpop.f32.mrb[0].mxu0
  %v471 = vadd.f32 0.0, %v470
  %v472 = vpop.f32.mrb[0].mxu0
  %v473 = vpop.f32.mrb[0].mxu0
  %v474 = vadd.f32 0.0, %v473
  %v475 = vpop.f32.mrb[0].mxu0
  %476 = vmatprep.mubr.bf16.mxu0 0
  %477 = vmatmul.mubr.bf16.gmra.mrb[0].mxu0 %v234
  %v478 = vpop.f32.mrb[0].mxu0
  %v479 = vadd.f32 0.0, %v478
  %v480 = vpop.f32.mrb[0].mxu0
  %v481 = vpop.f32.mrb[0].mxu0
  %v482 = vadd.f32 0.0, %v481
  %v483 = vpop.f32.mrb[0].mxu0
  %484 = vmatprep.mubr.bf16.mxu0 0
  %485 = vmatmul.mubr.bf16.gmra.mrb[0].mxu0 %v235
  %v486 = vpop.f32.mrb[0].mxu0
  %v487 = vadd.f32 0.0, %v486
  %v488 = vpop.f32.mrb[0].mxu0
  %v489 = vpop.f32.mrb[0].mxu0
  %v490 = vadd.f32 0.0, %v489
  %v491 = vpop.f32.mrb[0].mxu0
  %492 = vmatprep.mubr.bf16.mxu0 0
  %493 = vmatmul.mubr.bf16.gmra.mrb[0].mxu0 %v236
  %v494 = vpop.f32.mrb[0].mxu0
  %v495 = vadd.f32 0.0, %v494
  %v496 = vpop.f32.mrb[0].mxu0
  %v497 = vpop.f32.mrb[0].mxu0
  %v498 = vadd.f32 0.0, %v497
  %v499 = vpop.f32.mrb[0].mxu0
  %500 = vmatprep.mubr.bf16.mxu0 0
  %501 = vmatmul.mubr.bf16.gmra.mrb[0].mxu0 %v237
  %v502 = vpop.f32.mrb[0].mxu0
  %v503 = vadd.f32 0.0, %v502
  %v504 = vpop.f32.mrb[0].mxu0
  %v505 = vpop.f32.mrb[0].mxu0
  %v506 = vadd.f32 0.0, %v505
  %v507 = vpop.f32.mrb[0].mxu0
  %508 = vmatprep.mubr.bf16.mxu0 0
  %509 = vmatmul.mubr.bf16.gmra.mrb[0].mxu0 %v238
  %v510 = vpop.f32.mrb[0].mxu0
  %v511 = vadd.f32 0.0, %v510
  %v512 = vpop.f32.mrb[0].mxu0
  %v513 = vpop.f32.mrb[0].mxu0
  %v514 = vadd.f32 0.0, %v513
  %v515 = vpop.f32.mrb[0].mxu0
  %516 = vmatprep.mubr.bf16.mxu0 0
  %517 = vmatmul.mubr.bf16.gmra.mrb[0].mxu0 %v239
  %v518 = vpop.f32.mrb[0].mxu0
  %v519 = vadd.f32 0.0, %v518
  %v520 = vpop.f32.mrb[0].mxu0
  %v521 = vpop.f32.mrb[0].mxu0
  %v522 = vadd.f32 0.0, %v521
  %v523 = vpop.f32.mrb[0].mxu0
  %524 = vmatprep.mubr.bf16.mxu0 0
  %525 = vmatmul.mubr.bf16.gmra.mrb[0].mxu0 %v240
  %v526 = vpop.f32.mrb[0].mxu0
  %v527 = vadd.f32 0.0, %v526
  %v528 = vpop.f32.mrb[0].mxu0
  %v529 = vpop.f32.mrb[0].mxu0
  %v530 = vadd.f32 0.0, %v529
  %v531 = vpop.f32.mrb[0].mxu0
  %532 = vmatprep.mubr.bf16.mxu0 0
  %533 = vmatmul.mubr.bf16.gmra.mrb[0].mxu0 %v241
  %v534 = vpop.f32.mrb[0].mxu0
  %v535 = vadd.f32 0.0, %v534
  %v536 = vpop.f32.mrb[0].mxu0
  %v537 = vpop.f32.mrb[0].mxu0
  %v538 = vadd.f32 0.0, %v537
  %v539 = vpop.f32.mrb[0].mxu0
  %540 = vmatprep.mubr.bf16.mxu0 0
  %541 = vmatmul.mubr.bf16.gmra.mrb[0].mxu0 %v242
  %v542 = vpop.f32.mrb[0].mxu0
  %v543 = vadd.f32 0.0, %v542
  %v544 = vpop.f32.mrb[0].mxu0
  %v545 = vpop.f32.mrb[0].mxu0
  %v546 = vadd.f32 0.0, %v545
  %v547 = vpop.f32.mrb[0].mxu0
  %548 = vmatprep.mubr.bf16.mxu0 0
  %549 = vmatmul.mubr.bf16.gmra.mrb[0].mxu0 %v243
  %v550 = vpop.f32.mrb[0].mxu0
  %v551 = vadd.f32 0.0, %v550
  %v552 = vpop.f32.mrb[0].mxu0
  %v553 = vpop.f32.mrb[0].mxu0
  %v554 = vadd.f32 0.0, %v553
  %v555 = vpop.f32.mrb[0].mxu0
  %556 = vmatprep.mubr.bf16.mxu0 0
  %557 = vmatmul.mubr.bf16.gmra.mrb[0].mxu0 %v244
  %v558 = vpop.f32.mrb[0].mxu0
  %v559 = vadd.f32 0.0, %v558
  %v560 = vpop.f32.mrb[0].mxu0
  %v561 = vpop.f32.mrb[0].mxu0
  %v562 = vadd.f32 0.0, %v561
  %v563 = vpop.f32.mrb[0].mxu0
  %564 = vmatprep.mubr.bf16.mxu0 0
  %565 = vmatmul.mubr.bf16.gmra.mrb[0].mxu0 %v245
  %v566 = vpop.f32.mrb[0].mxu0
  %v567 = vadd.f32 0.0, %v566
  %v568 = vpop.f32.mrb[0].mxu0
  %v569 = vpop.f32.mrb[0].mxu0
  %v570 = vadd.f32 0.0, %v569
  %v571 = vpop.f32.mrb[0].mxu0
  %572 = vmatprep.mubr.bf16.mxu0 0
  %573 = vmatmul.mubr.bf16.gmra.mrb[0].mxu0 %v246
  %v574 = vpop.f32.mrb[0].mxu0
  %v575 = vadd.f32 0.0, %v574
  %v576 = vpop.f32.mrb[0].mxu0
  %v577 = vpop.f32.mrb[0].mxu0
  %v578 = vadd.f32 0.0, %v577
  %v579 = vpop.f32.mrb[0].mxu0
  %580 = vmatprep.mubr.bf16.mxu0 0
  %581 = vmatmul.mubr.bf16.gmra.mrb[0].mxu0 %v247
  %v582 = vpop.f32.mrb[0].mxu0
  %v583 = vadd.f32 0.0, %v582
  %v584 = vpop.f32.mrb[0].mxu0
  %v585 = vpop.f32.mrb[0].mxu0
  %v586 = vadd.f32 0.0, %v585
  %v587 = vpop.f32.mrb[0].mxu0
  %588 = vmatprep.mubr.bf16.mxu0 0
  %589 = vmatmul.mubr.bf16.gmra.mrb[0].mxu0 %v248
  %v590 = vpop.f32.mrb[0].mxu0
  %v591 = vadd.f32 0.0, %v590
  %v592 = vpop.f32.mrb[0].mxu0
  %v593 = vpop.f32.mrb[0].mxu0
  %v594 = vadd.f32 0.0, %v593
  %v595 = vpop.f32.mrb[0].mxu0
  %596 = vmatprep.mubr.bf16.mxu0 0
  %597 = vmatmul.mubr.bf16.gmra.mrb[0].mxu0 %v249
  %v598 = vpop.f32.mrb[0].mxu0
  %v599 = vadd.f32 0.0, %v598
  %v600 = vpop.f32.mrb[0].mxu0
  %v601 = vpop.f32.mrb[0].mxu0
  %v602 = vadd.f32 0.0, %v601
  %v603 = vpop.f32.mrb[0].mxu0
  %604 = vmatprep.mubr.bf16.mxu0 0
  %605 = vmatmul.mubr.bf16.gmra.mrb[0].mxu0 %v250
  %v606 = vpop.f32.mrb[0].mxu0
  %v607 = vadd.f32 0.0, %v606
  %v608 = vpop.f32.mrb[0].mxu0
  %v609 = vpop.f32.mrb[0].mxu0
  %v610 = vadd.f32 0.0, %v609
  %v611 = vpop.f32.mrb[0].mxu0
  %612 = vmatprep.mubr.bf16.mxu0 0
  %613 = vmatmul.mubr.bf16.gmra.mrb[0].mxu0 %v251
  %v614 = vpop.f32.mrb[0].mxu0
  %v615 = vadd.f32 0.0, %v614
  %v616 = vpop.f32.mrb[0].mxu0
  %v617 = vpop.f32.mrb[0].mxu0
  %v618 = vadd.f32 0.0, %v617
  %v619 = vpop.f32.mrb[0].mxu0
  %620 = vdwg.mxu0
  %vm621 = vcmp.gt.f32.partialorder %v367, 0.0
  %vm622 = vcmp.gt.f32.partialorder %v370, 0.0
  %vm623 = vcmp.gt.f32.partialorder %v375, 0.0
  %vm624 = vcmp.gt.f32.partialorder %v378, 0.0
  %vm625 = vcmp.gt.f32.partialorder %v383, 0.0
  %vm626 = vcmp.gt.f32.partialorder %v386, 0.0
  %vm627 = vcmp.gt.f32.partialorder %v391, 0.0
  %vm628 = vcmp.gt.f32.partialorder %v394, 0.0
  %vm629 = vcmp.gt.f32.partialorder %v399, 0.0
  %vm630 = vcmp.gt.f32.partialorder %v402, 0.0
  %vm631 = vcmp.gt.f32.partialorder %v407, 0.0
  %vm632 = vcmp.gt.f32.partialorder %v410, 0.0
  %vm633 = vcmp.gt.f32.partialorder %v415, 0.0
  %vm634 = vcmp.gt.f32.partialorder %v418, 0.0
  %vm635 = vcmp.gt.f32.partialorder %v423, 0.0
  %vm636 = vcmp.gt.f32.partialorder %v426, 0.0
  %vm637 = vcmp.gt.f32.partialorder %v431, 0.0
  %vm638 = vcmp.gt.f32.partialorder %v434, 0.0
  %vm639 = vcmp.gt.f32.partialorder %v439, 0.0
  %vm640 = vcmp.gt.f32.partialorder %v442, 0.0
  %vm641 = vcmp.gt.f32.partialorder %v447, 0.0
  %vm642 = vcmp.gt.f32.partialorder %v450, 0.0
  %vm643 = vcmp.gt.f32.partialorder %v455, 0.0
  %vm644 = vcmp.gt.f32.partialorder %v458, 0.0
  %vm645 = vcmp.gt.f32.partialorder %v463, 0.0
  %vm646 = vcmp.gt.f32.partialorder %v466, 0.0
  %vm647 = vcmp.gt.f32.partialorder %v471, 0.0
  %vm648 = vcmp.gt.f32.partialorder %v474, 0.0
  %vm649 = vcmp.gt.f32.partialorder %v479, 0.0
  %vm650 = vcmp.gt.f32.partialorder %v482, 0.0
  %vm651 = vcmp.gt.f32.partialorder %v487, 0.0
  %vm652 = vcmp.gt.f32.partialorder %v490, 0.0
  %vm653 = vcmp.gt.f32.partialorder %v495, 0.0
  %vm654 = vcmp.gt.f32.partialorder %v498, 0.0
  %vm655 = vcmp.gt.f32.partialorder %v503, 0.0
  %vm656 = vcmp.gt.f32.partialorder %v506, 0.0
  %vm657 = vcmp.gt.f32.partialorder %v511, 0.0
  %vm658 = vcmp.gt.f32.partialorder %v514, 0.0
  %vm659 = vcmp.gt.f32.partialorder %v519, 0.0
  %vm660 = vcmp.gt.f32.partialorder %v522, 0.0
  %vm661 = vcmp.gt.f32.partialorder %v527, 0.0
  %vm662 = vcmp.gt.f32.partialorder %v530, 0.0
  %vm663 = vcmp.gt.f32.partialorder %v535, 0.0
  %vm664 = vcmp.gt.f32.partialorder %v538, 0.0
  %vm665 = vcmp.gt.f32.partialorder %v543, 0.0
  %vm666 = vcmp.gt.f32.partialorder %v546, 0.0
  %vm667 = vcmp.gt.f32.partialorder %v551, 0.0
  %vm668 = vcmp.gt.f32.partialorder %v554, 0.0
  %vm669 = vcmp.gt.f32.partialorder %v559, 0.0
  %vm670 = vcmp.gt.f32.partialorder %v562, 0.0
  %vm671 = vcmp.gt.f32.partialorder %v567, 0.0
  %vm672 = vcmp.gt.f32.partialorder %v570, 0.0
  %vm673 = vcmp.gt.f32.partialorder %v575, 0.0
  %vm674 = vcmp.gt.f32.partialorder %v578, 0.0
  %vm675 = vcmp.gt.f32.partialorder %v583, 0.0
  %vm676 = vcmp.gt.f32.partialorder %v586, 0.0
  %vm677 = vcmp.gt.f32.partialorder %v591, 0.0
  %vm678 = vcmp.gt.f32.partialorder %v594, 0.0
  %vm679 = vcmp.gt.f32.partialorder %v599, 0.0
  %vm680 = vcmp.gt.f32.partialorder %v602, 0.0
  %vm681 = vcmp.gt.f32.partialorder %v607, 0.0
  %vm682 = vcmp.gt.f32.partialorder %v610, 0.0
  %vm683 = vcmp.gt.f32.partialorder %v615, 0.0
  %vm684 = vcmp.gt.f32.partialorder %v618, 0.0
  %v685 = vmul.f32 %v367, 0.2
  %v686 = vmul.f32 %v370, 0.2
  %v687 = vmul.f32 %v375, 0.2
  %v688 = vmul.f32 %v378, 0.2
  %v689 = vmul.f32 %v383, 0.2
  %v690 = vmul.f32 %v386, 0.2
  %v691 = vmul.f32 %v391, 0.2
  %v692 = vmul.f32 %v394, 0.2
  %v693 = vmul.f32 %v399, 0.2
  %v694 = vmul.f32 %v402, 0.2
  %v695 = vmul.f32 %v407, 0.2
  %v696 = vmul.f32 %v410, 0.2
  %v697 = vmul.f32 %v415, 0.2
  %v698 = vmul.f32 %v418, 0.2
  %v699 = vmul.f32 %v423, 0.2
  %v700 = vmul.f32 %v426, 0.2
  %v701 = vmul.f32 %v431, 0.2
  %v702 = vmul.f32 %v434, 0.2
  %v703 = vmul.f32 %v439, 0.2
  %v704 = vmul.f32 %v442, 0.2
  %v705 = vmul.f32 %v447, 0.2
  %v706 = vmul.f32 %v450, 0.2
  %v707 = vmul.f32 %v455, 0.2
  %v708 = vmul.f32 %v458, 0.2
  %v709 = vmul.f32 %v463, 0.2
  %v710 = vmul.f32 %v466, 0.2
  %v711 = vmul.f32 %v471, 0.2
  %v712 = vmul.f32 %v474, 0.2
  %v713 = vmul.f32 %v479, 0.2
  %v714 = vmul.f32 %v482, 0.2
  %v715 = vmul.f32 %v487, 0.2
  %v716 = vmul.f32 %v490, 0.2
  %v717 = vmul.f32 %v495, 0.2
  %v718 = vmul.f32 %v498, 0.2
  %v719 = vmul.f32 %v503, 0.2
  %v720 = vmul.f32 %v506, 0.2
  %v721 = vmul.f32 %v511, 0.2
  %v722 = vmul.f32 %v514, 0.2
  %v723 = vmul.f32 %v519, 0.2
  %v724 = vmul.f32 %v522, 0.2
  %v725 = vmul.f32 %v527, 0.2
  %v726 = vmul.f32 %v530, 0.2
  %v727 = vmul.f32 %v535, 0.2
  %v728 = vmul.f32 %v538, 0.2
  %v729 = vmul.f32 %v543, 0.2
  %v730 = vmul.f32 %v546, 0.2
  %v731 = vmul.f32 %v551, 0.2
  %v732 = vmul.f32 %v554, 0.2
  %v733 = vmul.f32 %v559, 0.2
  %v734 = vmul.f32 %v562, 0.2
  %v735 = vmul.f32 %v567, 0.2
  %v736 = vmul.f32 %v570, 0.2
  %v737 = vmul.f32 %v575, 0.2
  %v738 = vmul.f32 %v578, 0.2
  %v739 = vmul.f32 %v583, 0.2
  %v740 = vmul.f32 %v586, 0.2
  %v741 = vmul.f32 %v591, 0.2
  %v742 = vmul.f32 %v594, 0.2
  %v743 = vmul.f32 %v599, 0.2
  %v744 = vmul.f32 %v602, 0.2
  %v745 = vmul.f32 %v607, 0.2
  %v746 = vmul.f32 %v610, 0.2
  %v747 = vmul.f32 %v615, 0.2
  %v748 = vmul.f32 %v618, 0.2
  %v749 = vsel %vm621, %v367, %v685
  %v750 = vsel %vm622, %v370, %v686
  %v751 = vsel %vm623, %v375, %v687
  %v752 = vsel %vm624, %v378, %v688
  %v753 = vsel %vm625, %v383, %v689
  %v754 = vsel %vm626, %v386, %v690
  %v755 = vsel %vm627, %v391, %v691
  %v756 = vsel %vm628, %v394, %v692
  %v757 = vsel %vm629, %v399, %v693
  %v758 = vsel %vm630, %v402, %v694
  %v759 = vsel %vm631, %v407, %v695
  %v760 = vsel %vm632, %v410, %v696
  %v761 = vsel %vm633, %v415, %v697
  %v762 = vsel %vm634, %v418, %v698
  %v763 = vsel %vm635, %v423, %v699
  %v764 = vsel %vm636, %v426, %v700
  %v765 = vsel %vm637, %v431, %v701
  %v766 = vsel %vm638, %v434, %v702
  %v767 = vsel %vm639, %v439, %v703
  %v768 = vsel %vm640, %v442, %v704
  %v769 = vsel %vm641, %v447, %v705
  %v770 = vsel %vm642, %v450, %v706
  %v771 = vsel %vm643, %v455, %v707
  %v772 = vsel %vm644, %v458, %v708
  %v773 = vsel %vm645, %v463, %v709
  %v774 = vsel %vm646, %v466, %v710
  %v775 = vsel %vm647, %v471, %v711
  %v776 = vsel %vm648, %v474, %v712
  %v777 = vsel %vm649, %v479, %v713
  %v778 = vsel %vm650, %v482, %v714
  %v779 = vsel %vm651, %v487, %v715
  %v780 = vsel %vm652, %v490, %v716
  %v781 = vsel %vm653, %v495, %v717
  %v782 = vsel %vm654, %v498, %v718
  %v783 = vsel %vm655, %v503, %v719
  %v784 = vsel %vm656, %v506, %v720
  %v785 = vsel %vm657, %v511, %v721
  %v786 = vsel %vm658, %v514, %v722
  %v787 = vsel %vm659, %v519, %v723
  %v788 = vsel %vm660, %v522, %v724
  %v789 = vsel %vm661, %v527, %v725
  %v790 = vsel %vm662, %v530, %v726
  %v791 = vsel %vm663, %v535, %v727
  %v792 = vsel %vm664, %v538, %v728
  %v793 = vsel %vm665, %v543, %v729
  %v794 = vsel %vm666, %v546, %v730
  %v795 = vsel %vm667, %v551, %v731
  %v796 = vsel %vm668, %v554, %v732
  %v797 = vsel %vm669, %v559, %v733
  %v798 = vsel %vm670, %v562, %v734
  %v799 = vsel %vm671, %v567, %v735
  %v800 = vsel %vm672, %v570, %v736
  %v801 = vsel %vm673, %v575, %v737
  %v802 = vsel %vm674, %v578, %v738
  %v803 = vsel %vm675, %v583, %v739
  %v804 = vsel %vm676, %v586, %v740
  %v805 = vsel %vm677, %v591, %v741
  %v806 = vsel %vm678, %v594, %v742
  %v807 = vsel %vm679, %v599, %v743
  %v808 = vsel %vm680, %v602, %v744
  %v809 = vsel %vm681, %v607, %v745
  %v810 = vsel %vm682, %v610, %v746
  %v811 = vsel %vm683, %v615, %v747
  %v812 = vsel %vm684, %v618, %v748
  %v813 = vpack.c.bf16 %v750, %v749
  %v814 = vpack.c.bf16 %v752, %v751
  %v815 = vpack.c.bf16 %v754, %v753
  %v816 = vpack.c.bf16 %v756, %v755
  %v817 = vpack.c.bf16 %v758, %v757
  %v818 = vpack.c.bf16 %v760, %v759
  %v819 = vpack.c.bf16 %v762, %v761
  %v820 = vpack.c.bf16 %v764, %v763
  %v821 = vpack.c.bf16 %v766, %v765
  %v822 = vpack.c.bf16 %v768, %v767
  %v823 = vpack.c.bf16 %v770, %v769
  %v824 = vpack.c.bf16 %v772, %v771
  %v825 = vpack.c.bf16 %v774, %v773
  %v826 = vpack.c.bf16 %v776, %v775
  %v827 = vpack.c.bf16 %v778, %v777
  %v828 = vpack.c.bf16 %v780, %v779
  %v829 = vpack.c.bf16 %v782, %v781
  %v830 = vpack.c.bf16 %v784, %v783
  %v831 = vpack.c.bf16 %v786, %v785
  %v832 = vpack.c.bf16 %v788, %v787
  %v833 = vpack.c.bf16 %v790, %v789
  %v834 = vpack.c.bf16 %v792, %v791
  %v835 = vpack.c.bf16 %v794, %v793
  %v836 = vpack.c.bf16 %v796, %v795
  %v837 = vpack.c.bf16 %v798, %v797
  %v838 = vpack.c.bf16 %v800, %v799
  %v839 = vpack.c.bf16 %v802, %v801
  %v840 = vpack.c.bf16 %v804, %v803
  %v841 = vpack.c.bf16 %v806, %v805
  %v842 = vpack.c.bf16 %v808, %v807
  %v843 = vpack.c.bf16 %v810, %v809
  %v844 = vpack.c.bf16 %v812, %v811
  %v877 = vunpack.c.l.b16 %v813
  %v878 = vunpack.c.h.b16 %v813
  %v879 = vunpack.c.l.b16 %v814
  %v880 = vunpack.c.h.b16 %v814
  %v881 = vunpack.c.l.b16 %v815
  %v882 = vunpack.c.h.b16 %v815
  %v883 = vunpack.c.l.b16 %v816
  %v884 = vunpack.c.h.b16 %v816
  %v885 = vunpack.c.l.b16 %v817
  %v886 = vunpack.c.h.b16 %v817
  %v887 = vunpack.c.l.b16 %v818
  %v888 = vunpack.c.h.b16 %v818
  %v889 = vunpack.c.l.b16 %v819
  %v890 = vunpack.c.h.b16 %v819
  %v891 = vunpack.c.l.b16 %v820
  %v892 = vunpack.c.h.b16 %v820
  %v893 = vunpack.c.l.b16 %v821
  %v894 = vunpack.c.h.b16 %v821
  %v895 = vunpack.c.l.b16 %v822
  %v896 = vunpack.c.h.b16 %v822
  %v897 = vunpack.c.l.b16 %v823
  %v898 = vunpack.c.h.b16 %v823
  %v899 = vunpack.c.l.b16 %v824
  %v900 = vunpack.c.h.b16 %v824
  %v901 = vunpack.c.l.b16 %v825
  %v902 = vunpack.c.h.b16 %v825
  %v903 = vunpack.c.l.b16 %v826
  %v904 = vunpack.c.h.b16 %v826
  %v905 = vunpack.c.l.b16 %v827
  %v906 = vunpack.c.h.b16 %v827
  %v907 = vunpack.c.l.b16 %v828
  %v908 = vunpack.c.h.b16 %v828
  %v909 = vunpack.c.l.b16 %v829
  %v910 = vunpack.c.h.b16 %v829
  %v911 = vunpack.c.l.b16 %v830
  %v912 = vunpack.c.h.b16 %v830
  %v913 = vunpack.c.l.b16 %v831
  %v914 = vunpack.c.h.b16 %v831
  %v915 = vunpack.c.l.b16 %v832
  %v916 = vunpack.c.h.b16 %v832
  %v917 = vunpack.c.l.b16 %v833
  %v918 = vunpack.c.h.b16 %v833
  %v919 = vunpack.c.l.b16 %v834
  %v920 = vunpack.c.h.b16 %v834
  %v921 = vunpack.c.l.b16 %v835
  %v922 = vunpack.c.h.b16 %v835
  %v923 = vunpack.c.l.b16 %v836
  %v924 = vunpack.c.h.b16 %v836
  %v925 = vunpack.c.l.b16 %v837
  %v926 = vunpack.c.h.b16 %v837
  %v927 = vunpack.c.l.b16 %v838
  %v928 = vunpack.c.h.b16 %v838
  %v929 = vunpack.c.l.b16 %v839
  %v930 = vunpack.c.h.b16 %v839
  %v931 = vunpack.c.l.b16 %v840
  %v932 = vunpack.c.h.b16 %v840
  %v933 = vunpack.c.l.b16 %v841
  %v934 = vunpack.c.h.b16 %v841
  %v935 = vunpack.c.l.b16 %v842
  %v936 = vunpack.c.h.b16 %v842
  %v937 = vunpack.c.l.b16 %v843
  %v938 = vunpack.c.h.b16 %v843
  %v939 = vunpack.c.l.b16 %v844
  %v940 = vunpack.c.h.b16 %v844
  %v941 = vpack.c.b16 %v877, %v877
  %v942 = vpack.c.b16 %v878, %v878
  %v943 = vpack.c.b16 %v879, %v879
  %v944 = vpack.c.b16 %v880, %v880
  %v945 = vpack.c.b16 %v881, %v881
  %v946 = vpack.c.b16 %v882, %v882
  %v947 = vpack.c.b16 %v883, %v883
  %v948 = vpack.c.b16 %v884, %v884
  %v949 = vpack.c.b16 %v885, %v885
  %v950 = vpack.c.b16 %v886, %v886
  %v951 = vpack.c.b16 %v887, %v887
  %v952 = vpack.c.b16 %v888, %v888
  %v953 = vpack.c.b16 %v889, %v889
  %v954 = vpack.c.b16 %v890, %v890
  %v955 = vpack.c.b16 %v891, %v891
  %v956 = vpack.c.b16 %v892, %v892
  %v957 = vpack.c.b16 %v893, %v893
  %v958 = vpack.c.b16 %v894, %v894
  %v959 = vpack.c.b16 %v895, %v895
  %v960 = vpack.c.b16 %v896, %v896
  %v961 = vpack.c.b16 %v897, %v897
  %v962 = vpack.c.b16 %v898, %v898
  %v963 = vpack.c.b16 %v899, %v899
  %v964 = vpack.c.b16 %v900, %v900
  %v965 = vpack.c.b16 %v901, %v901
  %v966 = vpack.c.b16 %v902, %v902
  %v967 = vpack.c.b16 %v903, %v903
  %v968 = vpack.c.b16 %v904, %v904
  %v969 = vpack.c.b16 %v905, %v905
  %v970 = vpack.c.b16 %v906, %v906
  %v971 = vpack.c.b16 %v907, %v907
  %v972 = vpack.c.b16 %v908, %v908
  %v973 = vpack.c.b16 %v909, %v909
  %v974 = vpack.c.b16 %v910, %v910
  %v975 = vpack.c.b16 %v911, %v911
  %v976 = vpack.c.b16 %v912, %v912
  %v977 = vpack.c.b16 %v913, %v913
  %v978 = vpack.c.b16 %v914, %v914
  %v979 = vpack.c.b16 %v915, %v915
  %v980 = vpack.c.b16 %v916, %v916
  %v981 = vpack.c.b16 %v917, %v917
  %v982 = vpack.c.b16 %v918, %v918
  %v983 = vpack.c.b16 %v919, %v919
  %v984 = vpack.c.b16 %v920, %v920
  %v985 = vpack.c.b16 %v921, %v921
  %v986 = vpack.c.b16 %v922, %v922
  %v987 = vpack.c.b16 %v923, %v923
  %v988 = vpack.c.b16 %v924, %v924
  %v989 = vpack.c.b16 %v925, %v925
  %v990 = vpack.c.b16 %v926, %v926
  %v991 = vpack.c.b16 %v927, %v927
  %v992 = vpack.c.b16 %v928, %v928
  %v993 = vpack.c.b16 %v929, %v929
  %v994 = vpack.c.b16 %v930, %v930
  %v995 = vpack.c.b16 %v931, %v931
  %v996 = vpack.c.b16 %v932, %v932
  %v997 = vpack.c.b16 %v933, %v933
  %v998 = vpack.c.b16 %v934, %v934
  %v999 = vpack.c.b16 %v935, %v935
  %v1000 = vpack.c.b16 %v936, %v936
  %v1001 = vpack.c.b16 %v937, %v937
  %v1002 = vpack.c.b16 %v938, %v938
  %v1003 = vpack.c.b16 %v939, %v939
  %v1004 = vpack.c.b16 %v940, %v940
  %1069 = vst [vmem:[%s2] sm:$0xf] %v941
  %1070 = vst [vmem:[%s2 + $0x4] sm:$0xf] %v942
  %1071 = vst [vmem:[%s2 + $0x8] sm:$0xf] %v943
  %1072 = vst [vmem:[%s2 + $0xc] sm:$0xf] %v944
  %1073 = vst [vmem:[%s2 + $0x10] sm:$0xf] %v945
  %1074 = vst [vmem:[%s2 + $0x14] sm:$0xf] %v946
  %1075 = vst [vmem:[%s2 + $0x18] sm:$0xf] %v947
  %1076 = vst [vmem:[%s2 + $0x1c] sm:$0xf] %v948
  %1077 = vst [vmem:[%s2 + $0x20] sm:$0xf] %v949
  %1078 = vst [vmem:[%s2 + $0x24] sm:$0xf] %v950
  %1079 = vst [vmem:[%s2 + $0x28] sm:$0xf] %v951
  %1080 = vst [vmem:[%s2 + $0x2c] sm:$0xf] %v952
  %1081 = vst [vmem:[%s2 + $0x30] sm:$0xf] %v953
  %1082 = vst [vmem:[%s2 + $0x34] sm:$0xf] %v954
  %1083 = vst [vmem:[%s2 + $0x38] sm:$0xf] %v955
  %1084 = vst [vmem:[%s2 + $0x3c] sm:$0xf] %v956
  %1085 = vst [vmem:[%s2 + $0x40] sm:$0xf] %v957
  %1086 = vst [vmem:[%s2 + $0x44] sm:$0xf] %v958
  %1087 = vst [vmem:[%s2 + $0x48] sm:$0xf] %v959
  %1088 = vst [vmem:[%s2 + $0x4c] sm:$0xf] %v960
  %1089 = vst [vmem:[%s2 + $0x50] sm:$0xf] %v961
  %1090 = vst [vmem:[%s2 + $0x54] sm:$0xf] %v962
  %1091 = vst [vmem:[%s2 + $0x58] sm:$0xf] %v963
  %1092 = vst [vmem:[%s2 + $0x5c] sm:$0xf] %v964
  %1093 = vst [vmem:[%s2 + $0x60] sm:$0xf] %v965
  %1094 = vst [vmem:[%s2 + $0x64] sm:$0xf] %v966
  %1095 = vst [vmem:[%s2 + $0x68] sm:$0xf] %v967
  %1096 = vst [vmem:[%s2 + $0x6c] sm:$0xf] %v968
  %1097 = vst [vmem:[%s2 + $0x70] sm:$0xf] %v969
  %1098 = vst [vmem:[%s2 + $0x74] sm:$0xf] %v970
  %1099 = vst [vmem:[%s2 + $0x78] sm:$0xf] %v971
  %1100 = vst [vmem:[%s2 + $0x7c] sm:$0xf] %v972
  %1101 = vst [vmem:[%s2 + $0x80] sm:$0xf] %v973
  %1102 = vst [vmem:[%s2 + $0x84] sm:$0xf] %v974
  %1103 = vst [vmem:[%s2 + $0x88] sm:$0xf] %v975
  %1104 = vst [vmem:[%s2 + $0x8c] sm:$0xf] %v976
  %1105 = vst [vmem:[%s2 + $0x90] sm:$0xf] %v977
  %1106 = vst [vmem:[%s2 + $0x94] sm:$0xf] %v978
  %1107 = vst [vmem:[%s2 + $0x98] sm:$0xf] %v979
  %1108 = vst [vmem:[%s2 + $0x9c] sm:$0xf] %v980
  %1109 = vst [vmem:[%s2 + $0xa0] sm:$0xf] %v981
  %1110 = vst [vmem:[%s2 + $0xa4] sm:$0xf] %v982
  %1111 = vst [vmem:[%s2 + $0xa8] sm:$0xf] %v983
  %1112 = vst [vmem:[%s2 + $0xac] sm:$0xf] %v984
  %1113 = vst [vmem:[%s2 + $0xb0] sm:$0xf] %v985
  %1114 = vst [vmem:[%s2 + $0xb4] sm:$0xf] %v986
  %1115 = vst [vmem:[%s2 + $0xb8] sm:$0xf] %v987
  %1116 = vst [vmem:[%s2 + $0xbc] sm:$0xf] %v988
  %1117 = vst [vmem:[%s2 + $0xc0] sm:$0xf] %v989
  %1118 = vst [vmem:[%s2 + $0xc4] sm:$0xf] %v990
  %1119 = vst [vmem:[%s2 + $0xc8] sm:$0xf] %v991
  %1120 = vst [vmem:[%s2 + $0xcc] sm:$0xf] %v992
  %1121 = vst [vmem:[%s2 + $0xd0] sm:$0xf] %v993
  %1122 = vst [vmem:[%s2 + $0xd4] sm:$0xf] %v994
  %1123 = vst [vmem:[%s2 + $0xd8] sm:$0xf] %v995
  %1124 = vst [vmem:[%s2 + $0xdc] sm:$0xf] %v996
  %1125 = vst [vmem:[%s2 + $0xe0] sm:$0xf] %v997
  %1126 = vst [vmem:[%s2 + $0xe4] sm:$0xf] %v998
  %1127 = vst [vmem:[%s2 + $0xe8] sm:$0xf] %v999
  %1128 = vst [vmem:[%s2 + $0xec] sm:$0xf] %v1000
  %1129 = vst [vmem:[%s2 + $0xf0] sm:$0xf] %v1001
  %1130 = vst [vmem:[%s2 + $0xf4] sm:$0xf] %v1002
  %1131 = vst [vmem:[%s2 + $0xf8] sm:$0xf] %v1003
  %1132 = vst [vmem:[%s2 + $0xfc] sm:$0xf] %v1004
  // Predicated region
  $region10: #{discriminator_forward.4} parent=0 // pred_check
    _
  $region11: #{discriminator_forward.4} parent=0 // pred_check_branch
    %1134 = sbr.rel (0) target = $region13
  $region12: #{discriminator_forward.4} parent=0 // pred_region
    _
  $region13: #{discriminator_forward.4} parent=0 // pred_fallthru
    _
  // Predicated region
  $region14: #{discriminator_forward.4} parent=0 // pred_check
    _
  $region15: #{discriminator_forward.4} parent=0 // pred_check_branch
    %1136 = sbr.rel (0) target = $region17
  $region16: #{discriminator_forward.4} parent=0 // pred_region
    _
  $region17: #{discriminator_forward.4} parent=0 // pred_fallthru
    _

// kernel: discriminator_forward.5
$region0: #{discriminator_forward.5}
  #allocation0 [shape = 'u32[]', space=smem, size = 0x4, offset = 0x4, fixed_abs, tag = 'smem constant byte address 0x4 - core index']
  #allocation1 [shape = 'u32[144,128]{1,0:T(1,128)}', space=vmem, size = 0x12000, scoped, tag = 'internal scratch']
  #allocation2 [shape = 'f32[1,128,128]{2,1,0:T(8,128)}', space=vmem, size = 0x10000, scoped, tag = 'scratch operand']
  #allocation3 [shape = 'f32[1,128]{1,0:T(1,128)}', space=vmem, size = 0x200, scoped, tag = 'scratch operand']
  #allocation4 [shape = 'f32[1,128]{1,0:T(1,128)}', space=vmem, size = 0x200, scoped, tag = 'scratch operand']
  %s0 = inlined_call_operand.vmem [shape: bf16[128,1024], index: 0, kind: input, shape index: {}]
  %s1 = inlined_call_operand.vmem [shape: bf16[1024,128], index: 1, kind: input, shape index: {}]
  %s2 = inlined_call_operand.vmem [shape: f32[1,128], index: 2, kind: input, shape index: {}]
  %s3 = inlined_call_operand.vmem [shape: f32[1,128], index: 3, kind: input, shape index: {}]
  %s4 = inlined_call_operand.vmem [shape: bf16[128,128], index: 4, kind: output, shape index: {}]
  %s5 = sld [smem:[#allocation0]]
  $region34: #{discriminator_forward.5} parent=0
    _
  %s7 = ssub.s32 1, %s5
  %s8 = scalar_select 0, %s7, %s5
  // Predicated region
  $region2: #{discriminator_forward.5} parent=0 // pred_check
    _
  $region3: #{discriminator_forward.5} parent=0 // pred_check_branch
    %10 = sbr.rel (0) target = $region5
  $region4: #{discriminator_forward.5} parent=0 // pred_region
    _
  $region5: #{discriminator_forward.5} parent=0 // pred_fallthru
    _
  // Predicated region
  $region6: #{discriminator_forward.5} parent=0 // pred_check
    _
  $region7: #{discriminator_forward.5} parent=0 // pred_check_branch
    %12 = sbr.rel (0) target = $region9
  $region8: #{discriminator_forward.5} parent=0 // pred_region
    _
  $region9: #{discriminator_forward.5} parent=0 // pred_fallthru
    _
  // Predicated region
  $region10: #{discriminator_forward.5} parent=0 // pred_check
    _
  $region11: #{discriminator_forward.5} parent=0 // pred_check_branch
    %14 = sbr.rel (0) target = $region13
  $region12: #{discriminator_forward.5} parent=0 // pred_region
    _
  $region13: #{discriminator_forward.5} parent=0 // pred_fallthru
    _
  // Predicated region
  $region14: #{discriminator_forward.5} parent=0 // pred_check
    _
  $region15: #{discriminator_forward.5} parent=0 // pred_check_branch
    %16 = sbr.rel (0) target = $region17
  $region16: #{discriminator_forward.5} parent=0 // pred_region
    _
  $region17: #{discriminator_forward.5} parent=0 // pred_fallthru
    _
  %p18 = scmp.eq.s32.totalorder 0, 0
  // Predicated region
  $region18: #{discriminator_forward.5} parent=0 // pred_check
    %p19 = pneg %p18
  $region19: #{discriminator_forward.5} parent=0 // pred_check_branch
    %21 = sbr.rel (%p19) target = $region21
  $region20: #{discriminator_forward.5} parent=0 // pred_region
    %22 = vst [vmem:[#allocation3] sm:$0x1] 0.0
    %23 = vst [vmem:[#allocation4] sm:$0x1] 0.0
  $region21: #{discriminator_forward.5} parent=0 // pred_fallthru
    _
  %v24 = vld [vmem:[%s0] sm:$0xff]
  %v25 = vld [vmem:[%s0 + $0x8] sm:$0xff]
  %v26 = vld [vmem:[%s0 + $0x10] sm:$0xff]
  %v27 = vld [vmem:[%s0 + $0x18] sm:$0xff]
  %v28 = vld [vmem:[%s0 + $0x20] sm:$0xff]
  %v29 = vld [vmem:[%s0 + $0x28] sm:$0xff]
  %v30 = vld [vmem:[%s0 + $0x30] sm:$0xff]
  %v31 = vld [vmem:[%s0 + $0x38] sm:$0xff]
  %v32 = vld [vmem:[%s0 + $0x40] sm:$0xff]
  %v33 = vld [vmem:[%s0 + $0x48] sm:$0xff]
  %v34 = vld [vmem:[%s0 + $0x50] sm:$0xff]
  %v35 = vld [vmem:[%s0 + $0x58] sm:$0xff]
  %v36 = vld [vmem:[%s0 + $0x60] sm:$0xff]
  %v37 = vld [vmem:[%s0 + $0x68] sm:$0xff]
  %v38 = vld [vmem:[%s0 + $0x70] sm:$0xff]
  %v39 = vld [vmem:[%s0 + $0x78] sm:$0xff]
  %v40 = vld [vmem:[%s0 + $0x80] sm:$0xff]
  %v41 = vld [vmem:[%s0 + $0x88] sm:$0xff]
  %v42 = vld [vmem:[%s0 + $0x90] sm:$0xff]
  %v43 = vld [vmem:[%s0 + $0x98] sm:$0xff]
  %v44 = vld [vmem:[%s0 + $0xa0] sm:$0xff]
  %v45 = vld [vmem:[%s0 + $0xa8] sm:$0xff]
  %v46 = vld [vmem:[%s0 + $0xb0] sm:$0xff]
  %v47 = vld [vmem:[%s0 + $0xb8] sm:$0xff]
  %v48 = vld [vmem:[%s0 + $0xc0] sm:$0xff]
  %v49 = vld [vmem:[%s0 + $0xc8] sm:$0xff]
  %v50 = vld [vmem:[%s0 + $0xd0] sm:$0xff]
  %v51 = vld [vmem:[%s0 + $0xd8] sm:$0xff]
  %v52 = vld [vmem:[%s0 + $0xe0] sm:$0xff]
  %v53 = vld [vmem:[%s0 + $0xe8] sm:$0xff]
  %v54 = vld [vmem:[%s0 + $0xf0] sm:$0xff]
  %v55 = vld [vmem:[%s0 + $0xf8] sm:$0xff]
  %v56 = vld [vmem:[%s0 + $0x100] sm:$0xff]
  %v57 = vld [vmem:[%s0 + $0x108] sm:$0xff]
  %v58 = vld [vmem:[%s0 + $0x110] sm:$0xff]
  %v59 = vld [vmem:[%s0 + $0x118] sm:$0xff]
  %v60 = vld [vmem:[%s0 + $0x120] sm:$0xff]
  %v61 = vld [vmem:[%s0 + $0x128] sm:$0xff]
  %v62 = vld [vmem:[%s0 + $0x130] sm:$0xff]
  %v63 = vld [vmem:[%s0 + $0x138] sm:$0xff]
  %v64 = vld [vmem:[%s0 + $0x140] sm:$0xff]
  %v65 = vld [vmem:[%s0 + $0x148] sm:$0xff]
  %v66 = vld [vmem:[%s0 + $0x150] sm:$0xff]
  %v67 = vld [vmem:[%s0 + $0x158] sm:$0xff]
  %v68 = vld [vmem:[%s0 + $0x160] sm:$0xff]
  %v69 = vld [vmem:[%s0 + $0x168] sm:$0xff]
  %v70 = vld [vmem:[%s0 + $0x170] sm:$0xff]
  %v71 = vld [vmem:[%s0 + $0x178] sm:$0xff]
  %v72 = vld [vmem:[%s0 + $0x180] sm:$0xff]
  %v73 = vld [vmem:[%s0 + $0x188] sm:$0xff]
  %v74 = vld [vmem:[%s0 + $0x190] sm:$0xff]
  %v75 = vld [vmem:[%s0 + $0x198] sm:$0xff]
  %v76 = vld [vmem:[%s0 + $0x1a0] sm:$0xff]
  %v77 = vld [vmem:[%s0 + $0x1a8] sm:$0xff]
  %v78 = vld [vmem:[%s0 + $0x1b0] sm:$0xff]
  %v79 = vld [vmem:[%s0 + $0x1b8] sm:$0xff]
  %v80 = vld [vmem:[%s0 + $0x1c0] sm:$0xff]
  %v81 = vld [vmem:[%s0 + $0x1c8] sm:$0xff]
  %v82 = vld [vmem:[%s0 + $0x1d0] sm:$0xff]
  %v83 = vld [vmem:[%s0 + $0x1d8] sm:$0xff]
  %v84 = vld [vmem:[%s0 + $0x1e0] sm:$0xff]
  %v85 = vld [vmem:[%s0 + $0x1e8] sm:$0xff]
  %v86 = vld [vmem:[%s0 + $0x1f0] sm:$0xff]
  %v87 = vld [vmem:[%s0 + $0x1f8] sm:$0xff]
  %v88 = vld [vmem:[%s1] sm:$0xf]
  %v89 = vld [vmem:[%s1 + $0x4] sm:$0xf]
  %v90 = vld [vmem:[%s1 + $0x8] sm:$0xf]
  %v91 = vld [vmem:[%s1 + $0xc] sm:$0xf]
  %v92 = vld [vmem:[%s1 + $0x10] sm:$0xf]
  %v93 = vld [vmem:[%s1 + $0x14] sm:$0xf]
  %v94 = vld [vmem:[%s1 + $0x18] sm:$0xf]
  %v95 = vld [vmem:[%s1 + $0x1c] sm:$0xf]
  %v96 = vld [vmem:[%s1 + $0x20] sm:$0xf]
  %v97 = vld [vmem:[%s1 + $0x24] sm:$0xf]
  %v98 = vld [vmem:[%s1 + $0x28] sm:$0xf]
  %v99 = vld [vmem:[%s1 + $0x2c] sm:$0xf]
  %v100 = vld [vmem:[%s1 + $0x30] sm:$0xf]
  %v101 = vld [vmem:[%s1 + $0x34] sm:$0xf]
  %v102 = vld [vmem:[%s1 + $0x38] sm:$0xf]
  %v103 = vld [vmem:[%s1 + $0x3c] sm:$0xf]
  %v104 = vld [vmem:[%s1 + $0x40] sm:$0xf]
  %v105 = vld [vmem:[%s1 + $0x44] sm:$0xf]
  %v106 = vld [vmem:[%s1 + $0x48] sm:$0xf]
  %v107 = vld [vmem:[%s1 + $0x4c] sm:$0xf]
  %v108 = vld [vmem:[%s1 + $0x50] sm:$0xf]
  %v109 = vld [vmem:[%s1 + $0x54] sm:$0xf]
  %v110 = vld [vmem:[%s1 + $0x58] sm:$0xf]
  %v111 = vld [vmem:[%s1 + $0x5c] sm:$0xf]
  %v112 = vld [vmem:[%s1 + $0x60] sm:$0xf]
  %v113 = vld [vmem:[%s1 + $0x64] sm:$0xf]
  %v114 = vld [vmem:[%s1 + $0x68] sm:$0xf]
  %v115 = vld [vmem:[%s1 + $0x6c] sm:$0xf]
  %v116 = vld [vmem:[%s1 + $0x70] sm:$0xf]
  %v117 = vld [vmem:[%s1 + $0x74] sm:$0xf]
  %v118 = vld [vmem:[%s1 + $0x78] sm:$0xf]
  %v119 = vld [vmem:[%s1 + $0x7c] sm:$0xf]
  %v120 = vld [vmem:[%s1 + $0x80] sm:$0xf]
  %v121 = vld [vmem:[%s1 + $0x84] sm:$0xf]
  %v122 = vld [vmem:[%s1 + $0x88] sm:$0xf]
  %v123 = vld [vmem:[%s1 + $0x8c] sm:$0xf]
  %v124 = vld [vmem:[%s1 + $0x90] sm:$0xf]
  %v125 = vld [vmem:[%s1 + $0x94] sm:$0xf]
  %v126 = vld [vmem:[%s1 + $0x98] sm:$0xf]
  %v127 = vld [vmem:[%s1 + $0x9c] sm:$0xf]
  %v128 = vld [vmem:[%s1 + $0xa0] sm:$0xf]
  %v129 = vld [vmem:[%s1 + $0xa4] sm:$0xf]
  %v130 = vld [vmem:[%s1 + $0xa8] sm:$0xf]
  %v131 = vld [vmem:[%s1 + $0xac] sm:$0xf]
  %v132 = vld [vmem:[%s1 + $0xb0] sm:$0xf]
  %v133 = vld [vmem:[%s1 + $0xb4] sm:$0xf]
  %v134 = vld [vmem:[%s1 + $0xb8] sm:$0xf]
  %v135 = vld [vmem:[%s1 + $0xbc] sm:$0xf]
  %v136 = vld [vmem:[%s1 + $0xc0] sm:$0xf]
  %v137 = vld [vmem:[%s1 + $0xc4] sm:$0xf]
  %v138 = vld [vmem:[%s1 + $0xc8] sm:$0xf]
  %v139 = vld [vmem:[%s1 + $0xcc] sm:$0xf]
  %v140 = vld [vmem:[%s1 + $0xd0] sm:$0xf]
  %v141 = vld [vmem:[%s1 + $0xd4] sm:$0xf]
  %v142 = vld [vmem:[%s1 + $0xd8] sm:$0xf]
  %v143 = vld [vmem:[%s1 + $0xdc] sm:$0xf]
  %v144 = vld [vmem:[%s1 + $0xe0] sm:$0xf]
  %v145 = vld [vmem:[%s1 + $0xe4] sm:$0xf]
  %v146 = vld [vmem:[%s1 + $0xe8] sm:$0xf]
  %v147 = vld [vmem:[%s1 + $0xec] sm:$0xf]
  %v148 = vld [vmem:[%s1 + $0xf0] sm:$0xf]
  %v149 = vld [vmem:[%s1 + $0xf4] sm:$0xf]
  %v150 = vld [vmem:[%s1 + $0xf8] sm:$0xf]
  %v151 = vld [vmem:[%s1 + $0xfc] sm:$0xf]
  %v152 = vld [vmem:[%s1 + $0x100] sm:$0xf]
  %v153 = vld [vmem:[%s1 + $0x104] sm:$0xf]
  %v154 = vld [vmem:[%s1 + $0x108] sm:$0xf]
  %v155 = vld [vmem:[%s1 + $0x10c] sm:$0xf]
  %v156 = vld [vmem:[%s1 + $0x110] sm:$0xf]
  %v157 = vld [vmem:[%s1 + $0x114] sm:$0xf]
  %v158 = vld [vmem:[%s1 + $0x118] sm:$0xf]
  %v159 = vld [vmem:[%s1 + $0x11c] sm:$0xf]
  %v160 = vld [vmem:[%s1 + $0x120] sm:$0xf]
  %v161 = vld [vmem:[%s1 + $0x124] sm:$0xf]
  %v162 = vld [vmem:[%s1 + $0x128] sm:$0xf]
  %v163 = vld [vmem:[%s1 + $0x12c] sm:$0xf]
  %v164 = vld [vmem:[%s1 + $0x130] sm:$0xf]
  %v165 = vld [vmem:[%s1 + $0x134] sm:$0xf]
  %v166 = vld [vmem:[%s1 + $0x138] sm:$0xf]
  %v167 = vld [vmem:[%s1 + $0x13c] sm:$0xf]
  %v168 = vld [vmem:[%s1 + $0x140] sm:$0xf]
  %v169 = vld [vmem:[%s1 + $0x144] sm:$0xf]
  %v170 = vld [vmem:[%s1 + $0x148] sm:$0xf]
  %v171 = vld [vmem:[%s1 + $0x14c] sm:$0xf]
  %v172 = vld [vmem:[%s1 + $0x150] sm:$0xf]
  %v173 = vld [vmem:[%s1 + $0x154] sm:$0xf]
  %v174 = vld [vmem:[%s1 + $0x158] sm:$0xf]
  %v175 = vld [vmem:[%s1 + $0x15c] sm:$0xf]
  %v176 = vld [vmem:[%s1 + $0x160] sm:$0xf]
  %v177 = vld [vmem:[%s1 + $0x164] sm:$0xf]
  %v178 = vld [vmem:[%s1 + $0x168] sm:$0xf]
  %v179 = vld [vmem:[%s1 + $0x16c] sm:$0xf]
  %v180 = vld [vmem:[%s1 + $0x170] sm:$0xf]
  %v181 = vld [vmem:[%s1 + $0x174] sm:$0xf]
  %v182 = vld [vmem:[%s1 + $0x178] sm:$0xf]
  %v183 = vld [vmem:[%s1 + $0x17c] sm:$0xf]
  %v184 = vld [vmem:[%s1 + $0x180] sm:$0xf]
  %v185 = vld [vmem:[%s1 + $0x184] sm:$0xf]
  %v186 = vld [vmem:[%s1 + $0x188] sm:$0xf]
  %v187 = vld [vmem:[%s1 + $0x18c] sm:$0xf]
  %v188 = vld [vmem:[%s1 + $0x190] sm:$0xf]
  %v189 = vld [vmem:[%s1 + $0x194] sm:$0xf]
  %v190 = vld [vmem:[%s1 + $0x198] sm:$0xf]
  %v191 = vld [vmem:[%s1 + $0x19c] sm:$0xf]
  %v192 = vld [vmem:[%s1 + $0x1a0] sm:$0xf]
  %v193 = vld [vmem:[%s1 + $0x1a4] sm:$0xf]
  %v194 = vld [vmem:[%s1 + $0x1a8] sm:$0xf]
  %v195 = vld [vmem:[%s1 + $0x1ac] sm:$0xf]
  %v196 = vld [vmem:[%s1 + $0x1b0] sm:$0xf]
  %v197 = vld [vmem:[%s1 + $0x1b4] sm:$0xf]
  %v198 = vld [vmem:[%s1 + $0x1b8] sm:$0xf]
  %v199 = vld [vmem:[%s1 + $0x1bc] sm:$0xf]
  %v200 = vld [vmem:[%s1 + $0x1c0] sm:$0xf]
  %v201 = vld [vmem:[%s1 + $0x1c4] sm:$0xf]
  %v202 = vld [vmem:[%s1 + $0x1c8] sm:$0xf]
  %v203 = vld [vmem:[%s1 + $0x1cc] sm:$0xf]
  %v204 = vld [vmem:[%s1 + $0x1d0] sm:$0xf]
  %v205 = vld [vmem:[%s1 + $0x1d4] sm:$0xf]
  %v206 = vld [vmem:[%s1 + $0x1d8] sm:$0xf]
  %v207 = vld [vmem:[%s1 + $0x1dc] sm:$0xf]
  %v208 = vld [vmem:[%s1 + $0x1e0] sm:$0xf]
  %v209 = vld [vmem:[%s1 + $0x1e4] sm:$0xf]
  %v210 = vld [vmem:[%s1 + $0x1e8] sm:$0xf]
  %v211 = vld [vmem:[%s1 + $0x1ec] sm:$0xf]
  %v212 = vld [vmem:[%s1 + $0x1f0] sm:$0xf]
  %v213 = vld [vmem:[%s1 + $0x1f4] sm:$0xf]
  %v214 = vld [vmem:[%s1 + $0x1f8] sm:$0xf]
  %v215 = vld [vmem:[%s1 + $0x1fc] sm:$0xf]
  %v280 = vunpack.c.l.b16 %v24
  %v281 = vunpack.c.h.b16 %v24
  %v282 = vunpack.c.l.b16 %v25
  %v283 = vunpack.c.h.b16 %v25
  %v284 = vunpack.c.l.b16 %v26
  %v285 = vunpack.c.h.b16 %v26
  %v286 = vunpack.c.l.b16 %v27
  %v287 = vunpack.c.h.b16 %v27
  %v288 = vunpack.c.l.b16 %v28
  %v289 = vunpack.c.h.b16 %v28
  %v290 = vunpack.c.l.b16 %v29
  %v291 = vunpack.c.h.b16 %v29
  %v292 = vunpack.c.l.b16 %v30
  %v293 = vunpack.c.h.b16 %v30
  %v294 = vunpack.c.l.b16 %v31
  %v295 = vunpack.c.h.b16 %v31
  %v296 = vunpack.c.l.b16 %v32
  %v297 = vunpack.c.h.b16 %v32
  %v298 = vunpack.c.l.b16 %v33
  %v299 = vunpack.c.h.b16 %v33
  %v300 = vunpack.c.l.b16 %v34
  %v301 = vunpack.c.h.b16 %v34
  %v302 = vunpack.c.l.b16 %v35
  %v303 = vunpack.c.h.b16 %v35
  %v304 = vunpack.c.l.b16 %v36
  %v305 = vunpack.c.h.b16 %v36
  %v306 = vunpack.c.l.b16 %v37
  %v307 = vunpack.c.h.b16 %v37
  %v308 = vunpack.c.l.b16 %v38
  %v309 = vunpack.c.h.b16 %v38
  %v310 = vunpack.c.l.b16 %v39
  %v311 = vunpack.c.h.b16 %v39
  %v312 = vunpack.c.l.b16 %v40
  %v313 = vunpack.c.h.b16 %v40
  %v314 = vunpack.c.l.b16 %v41
  %v315 = vunpack.c.h.b16 %v41
  %v316 = vunpack.c.l.b16 %v42
  %v317 = vunpack.c.h.b16 %v42
  %v318 = vunpack.c.l.b16 %v43
  %v319 = vunpack.c.h.b16 %v43
  %v320 = vunpack.c.l.b16 %v44
  %v321 = vunpack.c.h.b16 %v44
  %v322 = vunpack.c.l.b16 %v45
  %v323 = vunpack.c.h.b16 %v45
  %v324 = vunpack.c.l.b16 %v46
  %v325 = vunpack.c.h.b16 %v46
  %v326 = vunpack.c.l.b16 %v47
  %v327 = vunpack.c.h.b16 %v47
  %v328 = vunpack.c.l.b16 %v48
  %v329 = vunpack.c.h.b16 %v48
  %v330 = vunpack.c.l.b16 %v49
  %v331 = vunpack.c.h.b16 %v49
  %v332 = vunpack.c.l.b16 %v50
  %v333 = vunpack.c.h.b16 %v50
  %v334 = vunpack.c.l.b16 %v51
  %v335 = vunpack.c.h.b16 %v51
  %v336 = vunpack.c.l.b16 %v52
  %v337 = vunpack.c.h.b16 %v52
  %v338 = vunpack.c.l.b16 %v53
  %v339 = vunpack.c.h.b16 %v53
  %v340 = vunpack.c.l.b16 %v54
  %v341 = vunpack.c.h.b16 %v54
  %v342 = vunpack.c.l.b16 %v55
  %v343 = vunpack.c.h.b16 %v55
  %v344 = vunpack.c.l.b16 %v56
  %v345 = vunpack.c.h.b16 %v56
  %v346 = vunpack.c.l.b16 %v57
  %v347 = vunpack.c.h.b16 %v57
  %v348 = vunpack.c.l.b16 %v58
  %v349 = vunpack.c.h.b16 %v58
  %v350 = vunpack.c.l.b16 %v59
  %v351 = vunpack.c.h.b16 %v59
  %v352 = vunpack.c.l.b16 %v60
  %v353 = vunpack.c.h.b16 %v60
  %v354 = vunpack.c.l.b16 %v61
  %v355 = vunpack.c.h.b16 %v61
  %v356 = vunpack.c.l.b16 %v62
  %v357 = vunpack.c.h.b16 %v62
  %v358 = vunpack.c.l.b16 %v63
  %v359 = vunpack.c.h.b16 %v63
  %v360 = vunpack.c.l.b16 %v64
  %v361 = vunpack.c.h.b16 %v64
  %v362 = vunpack.c.l.b16 %v65
  %v363 = vunpack.c.h.b16 %v65
  %v364 = vunpack.c.l.b16 %v66
  %v365 = vunpack.c.h.b16 %v66
  %v366 = vunpack.c.l.b16 %v67
  %v367 = vunpack.c.h.b16 %v67
  %v368 = vunpack.c.l.b16 %v68
  %v369 = vunpack.c.h.b16 %v68
  %v370 = vunpack.c.l.b16 %v69
  %v371 = vunpack.c.h.b16 %v69
  %v372 = vunpack.c.l.b16 %v70
  %v373 = vunpack.c.h.b16 %v70
  %v374 = vunpack.c.l.b16 %v71
  %v375 = vunpack.c.h.b16 %v71
  %v376 = vunpack.c.l.b16 %v72
  %v377 = vunpack.c.h.b16 %v72
  %v378 = vunpack.c.l.b16 %v73
  %v379 = vunpack.c.h.b16 %v73
  %v380 = vunpack.c.l.b16 %v74
  %v381 = vunpack.c.h.b16 %v74
  %v382 = vunpack.c.l.b16 %v75
  %v383 = vunpack.c.h.b16 %v75
  %v384 = vunpack.c.l.b16 %v76
  %v385 = vunpack.c.h.b16 %v76
  %v386 = vunpack.c.l.b16 %v77
  %v387 = vunpack.c.h.b16 %v77
  %v388 = vunpack.c.l.b16 %v78
  %v389 = vunpack.c.h.b16 %v78
  %v390 = vunpack.c.l.b16 %v79
  %v391 = vunpack.c.h.b16 %v79
  %v392 = vunpack.c.l.b16 %v80
  %v393 = vunpack.c.h.b16 %v80
  %v394 = vunpack.c.l.b16 %v81
  %v395 = vunpack.c.h.b16 %v81
  %v396 = vunpack.c.l.b16 %v82
  %v397 = vunpack.c.h.b16 %v82
  %v398 = vunpack.c.l.b16 %v83
  %v399 = vunpack.c.h.b16 %v83
  %v400 = vunpack.c.l.b16 %v84
  %v401 = vunpack.c.h.b16 %v84
  %v402 = vunpack.c.l.b16 %v85
  %v403 = vunpack.c.h.b16 %v85
  %v404 = vunpack.c.l.b16 %v86
  %v405 = vunpack.c.h.b16 %v86
  %v406 = vunpack.c.l.b16 %v87
  %v407 = vunpack.c.h.b16 %v87
  %v408 = vpack.c.b16 %v288, %v280
  %v409 = vpack.c.b16 %v289, %v281
  %v410 = vpack.c.b16 %v290, %v282
  %v411 = vpack.c.b16 %v291, %v283
  %v412 = vpack.c.b16 %v292, %v284
  %v413 = vpack.c.b16 %v293, %v285
  %v414 = vpack.c.b16 %v294, %v286
  %v415 = vpack.c.b16 %v295, %v287
  %v416 = vpack.c.b16 %v304, %v296
  %v417 = vpack.c.b16 %v305, %v297
  %v418 = vpack.c.b16 %v306, %v298
  %v419 = vpack.c.b16 %v307, %v299
  %v420 = vpack.c.b16 %v308, %v300
  %v421 = vpack.c.b16 %v309, %v301
  %v422 = vpack.c.b16 %v310, %v302
  %v423 = vpack.c.b16 %v311, %v303
  %v424 = vpack.c.b16 %v320, %v312
  %v425 = vpack.c.b16 %v321, %v313
  %v426 = vpack.c.b16 %v322, %v314
  %v427 = vpack.c.b16 %v323, %v315
  %v428 = vpack.c.b16 %v324, %v316
  %v429 = vpack.c.b16 %v325, %v317
  %v430 = vpack.c.b16 %v326, %v318
  %v431 = vpack.c.b16 %v327, %v319
  %v432 = vpack.c.b16 %v336, %v328
  %v433 = vpack.c.b16 %v337, %v329
  %v434 = vpack.c.b16 %v338, %v330
  %v435 = vpack.c.b16 %v339, %v331
  %v436 = vpack.c.b16 %v340, %v332
  %v437 = vpack.c.b16 %v341, %v333
  %v438 = vpack.c.b16 %v342, %v334
  %v439 = vpack.c.b16 %v343, %v335
  %v440 = vpack.c.b16 %v352, %v344
  %v441 = vpack.c.b16 %v353, %v345
  %v442 = vpack.c.b16 %v354, %v346
  %v443 = vpack.c.b16 %v355, %v347
  %v444 = vpack.c.b16 %v356, %v348
  %v445 = vpack.c.b16 %v357, %v349
  %v446 = vpack.c.b16 %v358, %v350
  %v447 = vpack.c.b16 %v359, %v351
  %v448 = vpack.c.b16 %v368, %v360
  %v449 = vpack.c.b16 %v369, %v361
  %v450 = vpack.c.b16 %v370, %v362
  %v451 = vpack.c.b16 %v371, %v363
  %v452 = vpack.c.b16 %v372, %v364
  %v453 = vpack.c.b16 %v373, %v365
  %v454 = vpack.c.b16 %v374, %v366
  %v455 = vpack.c.b16 %v375, %v367
  %v456 = vpack.c.b16 %v384, %v376
  %v457 = vpack.c.b16 %v385, %v377
  %v458 = vpack.c.b16 %v386, %v378
  %v459 = vpack.c.b16 %v387, %v379
  %v460 = vpack.c.b16 %v388, %v380
  %v461 = vpack.c.b16 %v389, %v381
  %v462 = vpack.c.b16 %v390, %v382
  %v463 = vpack.c.b16 %v391, %v383
  %v464 = vpack.c.b16 %v400, %v392
  %v465 = vpack.c.b16 %v401, %v393
  %v466 = vpack.c.b16 %v402, %v394
  %v467 = vpack.c.b16 %v403, %v395
  %v468 = vpack.c.b16 %v404, %v396
  %v469 = vpack.c.b16 %v405, %v397
  %v470 = vpack.c.b16 %v406, %v398
  %v471 = vpack.c.b16 %v407, %v399
  %v664 = vunpack.c.l.b16 %v88
  %v665 = vunpack.c.l.b16 %v89
  %v666 = vunpack.c.l.b16 %v90
  %v667 = vunpack.c.l.b16 %v91
  %v668 = vunpack.c.l.b16 %v92
  %v669 = vunpack.c.l.b16 %v93
  %v670 = vunpack.c.l.b16 %v94
  %v671 = vunpack.c.l.b16 %v95
  %v672 = vunpack.c.l.b16 %v96
  %v673 = vunpack.c.l.b16 %v97
  %v674 = vunpack.c.l.b16 %v98
  %v675 = vunpack.c.l.b16 %v99
  %v676 = vunpack.c.l.b16 %v100
  %v677 = vunpack.c.l.b16 %v101
  %v678 = vunpack.c.l.b16 %v102
  %v679 = vunpack.c.l.b16 %v103
  %v680 = vunpack.c.l.b16 %v104
  %v681 = vunpack.c.l.b16 %v105
  %v682 = vunpack.c.l.b16 %v106
  %v683 = vunpack.c.l.b16 %v107
  %v684 = vunpack.c.l.b16 %v108
  %v685 = vunpack.c.l.b16 %v109
  %v686 = vunpack.c.l.b16 %v110
  %v687 = vunpack.c.l.b16 %v111
  %v688 = vunpack.c.l.b16 %v112
  %v689 = vunpack.c.l.b16 %v113
  %v690 = vunpack.c.l.b16 %v114
  %v691 = vunpack.c.l.b16 %v115
  %v692 = vunpack.c.l.b16 %v116
  %v693 = vunpack.c.l.b16 %v117
  %v694 = vunpack.c.l.b16 %v118
  %v695 = vunpack.c.l.b16 %v119
  %v696 = vunpack.c.l.b16 %v120
  %v697 = vunpack.c.l.b16 %v121
  %v698 = vunpack.c.l.b16 %v122
  %v699 = vunpack.c.l.b16 %v123
  %v700 = vunpack.c.l.b16 %v124
  %v701 = vunpack.c.l.b16 %v125
  %v702 = vunpack.c.l.b16 %v126
  %v703 = vunpack.c.l.b16 %v127
  %v704 = vunpack.c.l.b16 %v128
  %v705 = vunpack.c.l.b16 %v129
  %v706 = vunpack.c.l.b16 %v130
  %v707 = vunpack.c.l.b16 %v131
  %v708 = vunpack.c.l.b16 %v132
  %v709 = vunpack.c.l.b16 %v133
  %v710 = vunpack.c.l.b16 %v134
  %v711 = vunpack.c.l.b16 %v135
  %v712 = vunpack.c.l.b16 %v136
  %v713 = vunpack.c.l.b16 %v137
  %v714 = vunpack.c.l.b16 %v138
  %v715 = vunpack.c.l.b16 %v139
  %v716 = vunpack.c.l.b16 %v140
  %v717 = vunpack.c.l.b16 %v141
  %v718 = vunpack.c.l.b16 %v142
  %v719 = vunpack.c.l.b16 %v143
  %v720 = vunpack.c.l.b16 %v144
  %v721 = vunpack.c.l.b16 %v145
  %v722 = vunpack.c.l.b16 %v146
  %v723 = vunpack.c.l.b16 %v147
  %v724 = vunpack.c.l.b16 %v148
  %v725 = vunpack.c.l.b16 %v149
  %v726 = vunpack.c.l.b16 %v150
  %v727 = vunpack.c.l.b16 %v151
  %v728 = vunpack.c.l.b16 %v152
  %v729 = vunpack.c.l.b16 %v153
  %v730 = vunpack.c.l.b16 %v154
  %v731 = vunpack.c.l.b16 %v155
  %v732 = vunpack.c.l.b16 %v156
  %v733 = vunpack.c.l.b16 %v157
  %v734 = vunpack.c.l.b16 %v158
  %v735 = vunpack.c.l.b16 %v159
  %v736 = vunpack.c.l.b16 %v160
  %v737 = vunpack.c.l.b16 %v161
  %v738 = vunpack.c.l.b16 %v162
  %v739 = vunpack.c.l.b16 %v163
  %v740 = vunpack.c.l.b16 %v164
  %v741 = vunpack.c.l.b16 %v165
  %v742 = vunpack.c.l.b16 %v166
  %v743 = vunpack.c.l.b16 %v167
  %v744 = vunpack.c.l.b16 %v168
  %v745 = vunpack.c.l.b16 %v169
  %v746 = vunpack.c.l.b16 %v170
  %v747 = vunpack.c.l.b16 %v171
  %v748 = vunpack.c.l.b16 %v172
  %v749 = vunpack.c.l.b16 %v173
  %v750 = vunpack.c.l.b16 %v174
  %v751 = vunpack.c.l.b16 %v175
  %v752 = vunpack.c.l.b16 %v176
  %v753 = vunpack.c.l.b16 %v177
  %v754 = vunpack.c.l.b16 %v178
  %v755 = vunpack.c.l.b16 %v179
  %v756 = vunpack.c.l.b16 %v180
  %v757 = vunpack.c.l.b16 %v181
  %v758 = vunpack.c.l.b16 %v182
  %v759 = vunpack.c.l.b16 %v183
  %v760 = vunpack.c.l.b16 %v184
  %v761 = vunpack.c.l.b16 %v185
  %v762 = vunpack.c.l.b16 %v186
  %v763 = vunpack.c.l.b16 %v187
  %v764 = vunpack.c.l.b16 %v188
  %v765 = vunpack.c.l.b16 %v189
  %v766 = vunpack.c.l.b16 %v190
  %v767 = vunpack.c.l.b16 %v191
  %v768 = vunpack.c.l.b16 %v192
  %v769 = vunpack.c.l.b16 %v193
  %v770 = vunpack.c.l.b16 %v194
  %v771 = vunpack.c.l.b16 %v195
  %v772 = vunpack.c.l.b16 %v196
  %v773 = vunpack.c.l.b16 %v197
  %v774 = vunpack.c.l.b16 %v198
  %v775 = vunpack.c.l.b16 %v199
  %v776 = vunpack.c.l.b16 %v200
  %v777 = vunpack.c.l.b16 %v201
  %v778 = vunpack.c.l.b16 %v202
  %v779 = vunpack.c.l.b16 %v203
  %v780 = vunpack.c.l.b16 %v204
  %v781 = vunpack.c.l.b16 %v205
  %v782 = vunpack.c.l.b16 %v206
  %v783 = vunpack.c.l.b16 %v207
  %v784 = vunpack.c.l.b16 %v208
  %v785 = vunpack.c.l.b16 %v209
  %v786 = vunpack.c.l.b16 %v210
  %v787 = vunpack.c.l.b16 %v211
  %v788 = vunpack.c.l.b16 %v212
  %v789 = vunpack.c.l.b16 %v213
  %v790 = vunpack.c.l.b16 %v214
  %v791 = vunpack.c.l.b16 %v215
  %v792 = vpack.c.b16 %v665, %v664
  %v793 = vpack.c.b16 %v667, %v666
  %v794 = vpack.c.b16 %v669, %v668
  %v795 = vpack.c.b16 %v671, %v670
  %v796 = vpack.c.b16 %v673, %v672
  %v797 = vpack.c.b16 %v675, %v674
  %v798 = vpack.c.b16 %v677, %v676
  %v799 = vpack.c.b16 %v679, %v678
  %v800 = vpack.c.b16 %v681, %v680
  %v801 = vpack.c.b16 %v683, %v682
  %v802 = vpack.c.b16 %v685, %v684
  %v803 = vpack.c.b16 %v687, %v686
  %v804 = vpack.c.b16 %v689, %v688
  %v805 = vpack.c.b16 %v691, %v690
  %v806 = vpack.c.b16 %v693, %v692
  %v807 = vpack.c.b16 %v695, %v694
  %v808 = vpack.c.b16 %v697, %v696
  %v809 = vpack.c.b16 %v699, %v698
  %v810 = vpack.c.b16 %v701, %v700
  %v811 = vpack.c.b16 %v703, %v702
  %v812 = vpack.c.b16 %v705, %v704
  %v813 = vpack.c.b16 %v707, %v706
  %v814 = vpack.c.b16 %v709, %v708
  %v815 = vpack.c.b16 %v711, %v710
  %v816 = vpack.c.b16 %v713, %v712
  %v817 = vpack.c.b16 %v715, %v714
  %v818 = vpack.c.b16 %v717, %v716
  %v819 = vpack.c.b16 %v719, %v718
  %v820 = vpack.c.b16 %v721, %v720
  %v821 = vpack.c.b16 %v723, %v722
  %v822 = vpack.c.b16 %v725, %v724
  %v823 = vpack.c.b16 %v727, %v726
  %v824 = vpack.c.b16 %v729, %v728
  %v825 = vpack.c.b16 %v731, %v730
  %v826 = vpack.c.b16 %v733, %v732
  %v827 = vpack.c.b16 %v735, %v734
  %v828 = vpack.c.b16 %v737, %v736
  %v829 = vpack.c.b16 %v739, %v738
  %v830 = vpack.c.b16 %v741, %v740
  %v831 = vpack.c.b16 %v743, %v742
  %v832 = vpack.c.b16 %v745, %v744
  %v833 = vpack.c.b16 %v747, %v746
  %v834 = vpack.c.b16 %v749, %v748
  %v835 = vpack.c.b16 %v751, %v750
  %v836 = vpack.c.b16 %v753, %v752
  %v837 = vpack.c.b16 %v755, %v754
  %v838 = vpack.c.b16 %v757, %v756
  %v839 = vpack.c.b16 %v759, %v758
  %v840 = vpack.c.b16 %v761, %v760
  %v841 = vpack.c.b16 %v763, %v762
  %v842 = vpack.c.b16 %v765, %v764
  %v843 = vpack.c.b16 %v767, %v766
  %v844 = vpack.c.b16 %v769, %v768
  %v845 = vpack.c.b16 %v771, %v770
  %v846 = vpack.c.b16 %v773, %v772
  %v847 = vpack.c.b16 %v775, %v774
  %v848 = vpack.c.b16 %v777, %v776
  %v849 = vpack.c.b16 %v779, %v778
  %v850 = vpack.c.b16 %v781, %v780
  %v851 = vpack.c.b16 %v783, %v782
  %v852 = vpack.c.b16 %v785, %v784
  %v853 = vpack.c.b16 %v787, %v786
  %v854 = vpack.c.b16 %v789, %v788
  %v855 = vpack.c.b16 %v791, %v790
  %920 = vmatprep.subr.bf16.mxu0 0
  %921 = vmatpush1.bf16.msra.mxu0 %v792
  %922 = vmatprep.subr.bf16.mxu0 0
  %923 = vmatpush1.bf16.msra.mxu0 %v793
  %924 = vmatprep.subr.bf16.mxu0 0
  %925 = vmatpush1.bf16.msra.mxu0 %v794
  %926 = vmatprep.subr.bf16.mxu0 0
  %927 = vmatpush1.bf16.msra.mxu0 %v795
  %928 = vmatprep.subr.bf16.mxu0 0
  %929 = vmatpush1.bf16.msra.mxu0 %v796
  %930 = vmatprep.subr.bf16.mxu0 0
  %931 = vmatpush1.bf16.msra.mxu0 %v797
  %932 = vmatprep.subr.bf16.mxu0 0
  %933 = vmatpush1.bf16.msra.mxu0 %v798
  %934 = vmatprep.subr.bf16.mxu0 0
  %935 = vmatpush1.bf16.msra.mxu0 %v799
  %936 = vmatprep.subr.bf16.mxu0 0
  %937 = vmatpush1.bf16.msra.mxu0 %v800
  %938 = vmatprep.subr.bf16.mxu0 0
  %939 = vmatpush1.bf16.msra.mxu0 %v801
  %940 = vmatprep.subr.bf16.mxu0 0
  %941 = vmatpush1.bf16.msra.mxu0 %v802
  %942 = vmatprep.subr.bf16.mxu0 0
  %943 = vmatpush1.bf16.msra.mxu0 %v803
  %944 = vmatprep.subr.bf16.mxu0 0
  %945 = vmatpush1.bf16.msra.mxu0 %v804
  %946 = vmatprep.subr.bf16.mxu0 0
  %947 = vmatpush1.bf16.msra.mxu0 %v805
  %948 = vmatprep.subr.bf16.mxu0 0
  %949 = vmatpush1.bf16.msra.mxu0 %v806
  %950 = vmatprep.subr.bf16.mxu0 0
  %951 = vmatpush1.bf16.msra.mxu0 %v807
  %952 = vmatprep.mubr.bf16.mxu0 %v409
  %953 = vmatmul.mubr.bf16.gmra.mrb[0].mxu0 %v408
  %v954 = vpop.f32.mrb[0].mxu0
  %v955 = vadd.f32 0.0, %v954
  %v956 = vpop.f32.mrb[0].mxu0
  %v957 = vpop.f32.mrb[0].mxu0
  %v958 = vadd.f32 0.0, %v957
  %v959 = vpop.f32.mrb[0].mxu0
  %960 = vmatprep.mubr.bf16.mxu0 %v417
  %961 = vmatmul.mubr.bf16.gmra.mrb[0].mxu0 %v416
  %v962 = vpop.f32.mrb[0].mxu0
  %v963 = vadd.f32 0.0, %v962
  %v964 = vpop.f32.mrb[0].mxu0
  %v965 = vpop.f32.mrb[0].mxu0
  %v966 = vadd.f32 0.0, %v965
  %v967 = vpop.f32.mrb[0].mxu0
  %968 = vmatprep.mubr.bf16.mxu0 %v425
  %969 = vmatmul.mubr.bf16.gmra.mrb[0].mxu0 %v424
  %v970 = vpop.f32.mrb[0].mxu0
  %v971 = vadd.f32 0.0, %v970
  %v972 = vpop.f32.mrb[0].mxu0
  %v973 = vpop.f32.mrb[0].mxu0
  %v974 = vadd.f32 0.0, %v973
  %v975 = vpop.f32.mrb[0].mxu0
  %976 = vmatprep.mubr.bf16.mxu0 %v433
  %977 = vmatmul.mubr.bf16.gmra.mrb[0].mxu0 %v432
  %v978 = vpop.f32.mrb[0].mxu0
  %v979 = vadd.f32 0.0, %v978
  %v980 = vpop.f32.mrb[0].mxu0
  %v981 = vpop.f32.mrb[0].mxu0
  %v982 = vadd.f32 0.0, %v981
  %v983 = vpop.f32.mrb[0].mxu0
  %984 = vmatprep.mubr.bf16.mxu0 %v441
  %985 = vmatmul.mubr.bf16.gmra.mrb[0].mxu0 %v440
  %v986 = vpop.f32.mrb[0].mxu0
  %v987 = vadd.f32 0.0, %v986
  %v988 = vpop.f32.mrb[0].mxu0
  %v989 = vpop.f32.mrb[0].mxu0
  %v990 = vadd.f32 0.0, %v989
  %v991 = vpop.f32.mrb[0].mxu0
  %992 = vmatprep.mubr.bf16.mxu0 %v449
  %993 = vmatmul.mubr.bf16.gmra.mrb[0].mxu0 %v448
  %v994 = vpop.f32.mrb[0].mxu0
  %v995 = vadd.f32 0.0, %v994
  %v996 = vpop.f32.mrb[0].mxu0
  %v997 = vpop.f32.mrb[0].mxu0
  %v998 = vadd.f32 0.0, %v997
  %v999 = vpop.f32.mrb[0].mxu0
  %1000 = vmatprep.mubr.bf16.mxu0 %v457
  %1001 = vmatmul.mubr.bf16.gmra.mrb[0].mxu0 %v456
  %v1002 = vpop.f32.mrb[0].mxu0
  %v1003 = vadd.f32 0.0, %v1002
  %v1004 = vpop.f32.mrb[0].mxu0
  %v1005 = vpop.f32.mrb[0].mxu0
  %v1006 = vadd.f32 0.0, %v1005
  %v1007 = vpop.f32.mrb[0].mxu0
  %1008 = vmatprep.mubr.bf16.mxu0 %v465
  %1009 = vmatmul.mubr.bf16.gmra.mrb[0].mxu0 %v464
  %v1010 = vpop.f32.mrb[0].mxu0
  %v1011 = vadd.f32 0.0, %v1010
  %v1012 = vpop.f32.mrb[0].mxu0
  %v1013 = vpop.f32.mrb[0].mxu0
  %v1014 = vadd.f32 0.0, %v1013
  %v1015 = vpop.f32.mrb[0].mxu0
  %1016 = vdwg.mxu0
  %1017 = vmatprep.subr.bf16.mxu0 0
  %1018 = vmatpush1.bf16.msra.mxu0 %v808
  %1019 = vmatprep.subr.bf16.mxu0 0
  %1020 = vmatpush1.bf16.msra.mxu0 %v809
  %1021 = vmatprep.subr.bf16.mxu0 0
  %1022 = vmatpush1.bf16.msra.mxu0 %v810
  %1023 = vmatprep.subr.bf16.mxu0 0
  %1024 = vmatpush1.bf16.msra.mxu0 %v811
  %1025 = vmatprep.subr.bf16.mxu0 0
  %1026 = vmatpush1.bf16.msra.mxu0 %v812
  %1027 = vmatprep.subr.bf16.mxu0 0
  %1028 = vmatpush1.bf16.msra.mxu0 %v813
  %1029 = vmatprep.subr.bf16.mxu0 0
  %1030 = vmatpush1.bf16.msra.mxu0 %v814
  %1031 = vmatprep.subr.bf16.mxu0 0
  %1032 = vmatpush1.bf16.msra.mxu0 %v815
  %1033 = vmatprep.subr.bf16.mxu0 0
  %1034 = vmatpush1.bf16.msra.mxu0 %v816
  %1035 = vmatprep.subr.bf16.mxu0 0
  %1036 = vmatpush1.bf16.msra.mxu0 %v817
  %1037 = vmatprep.subr.bf16.mxu0 0
  %1038 = vmatpush1.bf16.msra.mxu0 %v818
  %1039 = vmatprep.subr.bf16.mxu0 0
  %1040 = vmatpush1.bf16.msra.mxu0 %v819
  %1041 = vmatprep.subr.bf16.mxu0 0
  %1042 = vmatpush1.bf16.msra.mxu0 %v820
  %1043 = vmatprep.subr.bf16.mxu0 0
  %1044 = vmatpush1.bf16.msra.mxu0 %v821
  %1045 = vmatprep.subr.bf16.mxu0 0
  %1046 = vmatpush1.bf16.msra.mxu0 %v822
  %1047 = vmatprep.subr.bf16.mxu0 0
  %1048 = vmatpush1.bf16.msra.mxu0 %v823
  %1049 = vmatprep.mubr.bf16.mxu0 %v411
  %1050 = vmatmul.mubr.bf16.gmra.mrb[0].mxu0 %v410
  %v1051 = vpop.f32.mrb[0].mxu0
  %v1052 = vadd.f32 %v955, %v1051
  %v1053 = vpop.f32.mrb[0].mxu0
  %v1054 = vpop.f32.mrb[0].mxu0
  %v1055 = vadd.f32 %v958, %v1054
  %v1056 = vpop.f32.mrb[0].mxu0
  %1057 = vmatprep.mubr.bf16.mxu0 %v419
  %1058 = vmatmul.mubr.bf16.gmra.mrb[0].mxu0 %v418
  %v1059 = vpop.f32.mrb[0].mxu0
  %v1060 = vadd.f32 %v963, %v1059
  %v1061 = vpop.f32.mrb[0].mxu0
  %v1062 = vpop.f32.mrb[0].mxu0
  %v1063 = vadd.f32 %v966, %v1062
  %v1064 = vpop.f32.mrb[0].mxu0
  %1065 = vmatprep.mubr.bf16.mxu0 %v427
  %1066 = vmatmul.mubr.bf16.gmra.mrb[0].mxu0 %v426
  %v1067 = vpop.f32.mrb[0].mxu0
  %v1068 = vadd.f32 %v971, %v1067
  %v1069 = vpop.f32.mrb[0].mxu0
  %v1070 = vpop.f32.mrb[0].mxu0
  %v1071 = vadd.f32 %v974, %v1070
  %v1072 = vpop.f32.mrb[0].mxu0
  %1073 = vmatprep.mubr.bf16.mxu0 %v435
  %1074 = vmatmul.mubr.bf16.gmra.mrb[0].mxu0 %v434
  %v1075 = vpop.f32.mrb[0].mxu0
  %v1076 = vadd.f32 %v979, %v1075
  %v1077 = vpop.f32.mrb[0].mxu0
  %v1078 = vpop.f32.mrb[0].mxu0
  %v1079 = vadd.f32 %v982, %v1078
  %v1080 = vpop.f32.mrb[0].mxu0
  %1081 = vmatprep.mubr.bf16.mxu0 %v443
  %1082 = vmatmul.mubr.bf16.gmra.mrb[0].mxu0 %v442
  %v1083 = vpop.f32.mrb[0].mxu0
  %v1084 = vadd.f32 %v987, %v1083
  %v1085 = vpop.f32.mrb[0].mxu0
  %v1086 = vpop.f32.mrb[0].mxu0
  %v1087 = vadd.f32 %v990, %v1086
  %v1088 = vpop.f32.mrb[0].mxu0
  %1089 = vmatprep.mubr.bf16.mxu0 %v451
  %1090 = vmatmul.mubr.bf16.gmra.mrb[0].mxu0 %v450
  %v1091 = vpop.f32.mrb[0].mxu0
  %v1092 = vadd.f32 %v995, %v1091
  %v1093 = vpop.f32.mrb[0].mxu0
  %v1094 = vpop.f32.mrb[0].mxu0
  %v1095 = vadd.f32 %v998, %v1094
  %v1096 = vpop.f32.mrb[0].mxu0
  %1097 = vmatprep.mubr.bf16.mxu0 %v459
  %1098 = vmatmul.mubr.bf16.gmra.mrb[0].mxu0 %v458
  %v1099 = vpop.f32.mrb[0].mxu0
  %v1100 = vadd.f32 %v1003, %v1099
  %v1101 = vpop.f32.mrb[0].mxu0
  %v1102 = vpop.f32.mrb[0].mxu0
  %v1103 = vadd.f32 %v1006, %v1102
  %v1104 = vpop.f32.mrb[0].mxu0
  %1105 = vmatprep.mubr.bf16.mxu0 %v467
  %1106 = vmatmul.mubr.bf16.gmra.mrb[0].mxu0 %v466
  %v1107 = vpop.f32.mrb[0].mxu0
  %v1108 = vadd.f32 %v1011, %v1107
  %v1109 = vpop.f32.mrb[0].mxu0
  %v1110 = vpop.f32.mrb[0].mxu0
  %v1111 = vadd.f32 %v1014, %v1110
  %v1112 = vpop.f32.mrb[0].mxu0
  %1113 = vdwg.mxu0
  %1114 = vmatprep.subr.bf16.mxu0 0
  %1115 = vmatpush1.bf16.msra.mxu0 %v824
  %1116 = vmatprep.subr.bf16.mxu0 0
  %1117 = vmatpush1.bf16.msra.mxu0 %v825
  %1118 = vmatprep.subr.bf16.mxu0 0
  %1119 = vmatpush1.bf16.msra.mxu0 %v826
  %1120 = vmatprep.subr.bf16.mxu0 0
  %1121 = vmatpush1.bf16.msra.mxu0 %v827
  %1122 = vmatprep.subr.bf16.mxu0 0
  %1123 = vmatpush1.bf16.msra.mxu0 %v828
  %1124 = vmatprep.subr.bf16.mxu0 0
  %1125 = vmatpush1.bf16.msra.mxu0 %v829
  %1126 = vmatprep.subr.bf16.mxu0 0
  %1127 = vmatpush1.bf16.msra.mxu0 %v830
  %1128 = vmatprep.subr.bf16.mxu0 0
  %1129 = vmatpush1.bf16.msra.mxu0 %v831
  %1130 = vmatprep.subr.bf16.mxu0 0
  %1131 = vmatpush1.bf16.msra.mxu0 %v832
  %1132 = vmatprep.subr.bf16.mxu0 0
  %1133 = vmatpush1.bf16.msra.mxu0 %v833
  %1134 = vmatprep.subr.bf16.mxu0 0
  %1135 = vmatpush1.bf16.msra.mxu0 %v834
  %1136 = vmatprep.subr.bf16.mxu0 0
  %1137 = vmatpush1.bf16.msra.mxu0 %v835
  %1138 = vmatprep.subr.bf16.mxu0 0
  %1139 = vmatpush1.bf16.msra.mxu0 %v836
  %1140 = vmatprep.subr.bf16.mxu0 0
  %1141 = vmatpush1.bf16.msra.mxu0 %v837
  %1142 = vmatprep.subr.bf16.mxu0 0
  %1143 = vmatpush1.bf16.msra.mxu0 %v838
  %1144 = vmatprep.subr.bf16.mxu0 0
  %1145 = vmatpush1.bf16.msra.mxu0 %v839
  %1146 = vmatprep.mubr.bf16.mxu0 %v413
  %1147 = vmatmul.mubr.bf16.gmra.mrb[0].mxu0 %v412
  %v1148 = vpop.f32.mrb[0].mxu0
  %v1149 = vadd.f32 %v1052, %v1148
  %v1150 = vpop.f32.mrb[0].mxu0
  %v1151 = vpop.f32.mrb[0].mxu0
  %v1152 = vadd.f32 %v1055, %v1151
  %v1153 = vpop.f32.mrb[0].mxu0
  %1154 = vmatprep.mubr.bf16.mxu0 %v421
  %1155 = vmatmul.mubr.bf16.gmra.mrb[0].mxu0 %v420
  %v1156 = vpop.f32.mrb[0].mxu0
  %v1157 = vadd.f32 %v1060, %v1156
  %v1158 = vpop.f32.mrb[0].mxu0
  %v1159 = vpop.f32.mrb[0].mxu0
  %v1160 = vadd.f32 %v1063, %v1159
  %v1161 = vpop.f32.mrb[0].mxu0
  %1162 = vmatprep.mubr.bf16.mxu0 %v429
  %1163 = vmatmul.mubr.bf16.gmra.mrb[0].mxu0 %v428
  %v1164 = vpop.f32.mrb[0].mxu0
  %v1165 = vadd.f32 %v1068, %v1164
  %v1166 = vpop.f32.mrb[0].mxu0
  %v1167 = vpop.f32.mrb[0].mxu0
  %v1168 = vadd.f32 %v1071, %v1167
  %v1169 = vpop.f32.mrb[0].mxu0
  %1170 = vmatprep.mubr.bf16.mxu0 %v437
  %1171 = vmatmul.mubr.bf16.gmra.mrb[0].mxu0 %v436
  %v1172 = vpop.f32.mrb[0].mxu0
  %v1173 = vadd.f32 %v1076, %v1172
  %v1174 = vpop.f32.mrb[0].mxu0
  %v1175 = vpop.f32.mrb[0].mxu0
  %v1176 = vadd.f32 %v1079, %v1175
  %v1177 = vpop.f32.mrb[0].mxu0
  %1178 = vmatprep.mubr.bf16.mxu0 %v445
  %1179 = vmatmul.mubr.bf16.gmra.mrb[0].mxu0 %v444
  %v1180 = vpop.f32.mrb[0].mxu0
  %v1181 = vadd.f32 %v1084, %v1180
  %v1182 = vpop.f32.mrb[0].mxu0
  %v1183 = vpop.f32.mrb[0].mxu0
  %v1184 = vadd.f32 %v1087, %v1183
  %v1185 = vpop.f32.mrb[0].mxu0
  %1186 = vmatprep.mubr.bf16.mxu0 %v453
  %1187 = vmatmul.mubr.bf16.gmra.mrb[0].mxu0 %v452
  %v1188 = vpop.f32.mrb[0].mxu0
  %v1189 = vadd.f32 %v1092, %v1188
  %v1190 = vpop.f32.mrb[0].mxu0
  %v1191 = vpop.f32.mrb[0].mxu0
  %v1192 = vadd.f32 %v1095, %v1191
  %v1193 = vpop.f32.mrb[0].mxu0
  %1194 = vmatprep.mubr.bf16.mxu0 %v461
  %1195 = vmatmul.mubr.bf16.gmra.mrb[0].mxu0 %v460
  %v1196 = vpop.f32.mrb[0].mxu0
  %v1197 = vadd.f32 %v1100, %v1196
  %v1198 = vpop.f32.mrb[0].mxu0
  %v1199 = vpop.f32.mrb[0].mxu0
  %v1200 = vadd.f32 %v1103, %v1199
  %v1201 = vpop.f32.mrb[0].mxu0
  %1202 = vmatprep.mubr.bf16.mxu0 %v469
  %1203 = vmatmul.mubr.bf16.gmra.mrb[0].mxu0 %v468
  %v1204 = vpop.f32.mrb[0].mxu0
  %v1205 = vadd.f32 %v1108, %v1204
  %v1206 = vpop.f32.mrb[0].mxu0
  %v1207 = vpop.f32.mrb[0].mxu0
  %v1208 = vadd.f32 %v1111, %v1207
  %v1209 = vpop.f32.mrb[0].mxu0
  %1210 = vdwg.mxu0
  %1211 = vmatprep.subr.bf16.mxu0 0
  %1212 = vmatpush1.bf16.msra.mxu0 %v840
  %1213 = vmatprep.subr.bf16.mxu0 0
  %1214 = vmatpush1.bf16.msra.mxu0 %v841
  %1215 = vmatprep.subr.bf16.mxu0 0
  %1216 = vmatpush1.bf16.msra.mxu0 %v842
  %1217 = vmatprep.subr.bf16.mxu0 0
  %1218 = vmatpush1.bf16.msra.mxu0 %v843
  %1219 = vmatprep.subr.bf16.mxu0 0
  %1220 = vmatpush1.bf16.msra.mxu0 %v844
  %1221 = vmatprep.subr.bf16.mxu0 0
  %1222 = vmatpush1.bf16.msra.mxu0 %v845
  %1223 = vmatprep.subr.bf16.mxu0 0
  %1224 = vmatpush1.bf16.msra.mxu0 %v846
  %1225 = vmatprep.subr.bf16.mxu0 0
  %1226 = vmatpush1.bf16.msra.mxu0 %v847
  %1227 = vmatprep.subr.bf16.mxu0 0
  %1228 = vmatpush1.bf16.msra.mxu0 %v848
  %1229 = vmatprep.subr.bf16.mxu0 0
  %1230 = vmatpush1.bf16.msra.mxu0 %v849
  %1231 = vmatprep.subr.bf16.mxu0 0
  %1232 = vmatpush1.bf16.msra.mxu0 %v850
  %1233 = vmatprep.subr.bf16.mxu0 0
  %1234 = vmatpush1.bf16.msra.mxu0 %v851
  %1235 = vmatprep.subr.bf16.mxu0 0
  %1236 = vmatpush1.bf16.msra.mxu0 %v852
  %1237 = vmatprep.subr.bf16.mxu0 0
  %1238 = vmatpush1.bf16.msra.mxu0 %v853
  %1239 = vmatprep.subr.bf16.mxu0 0
  %1240 = vmatpush1.bf16.msra.mxu0 %v854
  %1241 = vmatprep.subr.bf16.mxu0 0
  %1242 = vmatpush1.bf16.msra.mxu0 %v855
  %1243 = vmatprep.mubr.bf16.mxu0 %v415
  %1244 = vmatmul.mubr.bf16.gmra.mrb[0].mxu0 %v414
  %v1245 = vpop.f32.mrb[0].mxu0
  %v1246 = vadd.f32 %v1149, %v1245
  %v1247 = vpop.f32.mrb[0].mxu0
  %v1248 = vpop.f32.mrb[0].mxu0
  %v1249 = vadd.f32 %v1152, %v1248
  %v1250 = vpop.f32.mrb[0].mxu0
  %1251 = vmatprep.mubr.bf16.mxu0 %v423
  %1252 = vmatmul.mubr.bf16.gmra.mrb[0].mxu0 %v422
  %v1253 = vpop.f32.mrb[0].mxu0
  %v1254 = vadd.f32 %v1157, %v1253
  %v1255 = vpop.f32.mrb[0].mxu0
  %v1256 = vpop.f32.mrb[0].mxu0
  %v1257 = vadd.f32 %v1160, %v1256
  %v1258 = vpop.f32.mrb[0].mxu0
  %1259 = vmatprep.mubr.bf16.mxu0 %v431
  %1260 = vmatmul.mubr.bf16.gmra.mrb[0].mxu0 %v430
  %v1261 = vpop.f32.mrb[0].mxu0
  %v1262 = vadd.f32 %v1165, %v1261
  %v1263 = vpop.f32.mrb[0].mxu0
  %v1264 = vpop.f32.mrb[0].mxu0
  %v1265 = vadd.f32 %v1168, %v1264
  %v1266 = vpop.f32.mrb[0].mxu0
  %1267 = vmatprep.mubr.bf16.mxu0 %v439
  %1268 = vmatmul.mubr.bf16.gmra.mrb[0].mxu0 %v438
  %v1269 = vpop.f32.mrb[0].mxu0
  %v1270 = vadd.f32 %v1173, %v1269
  %v1271 = vpop.f32.mrb[0].mxu0
  %v1272 = vpop.f32.mrb[0].mxu0
  %v1273 = vadd.f32 %v1176, %v1272
  %v1274 = vpop.f32.mrb[0].mxu0
  %1275 = vmatprep.mubr.bf16.mxu0 %v447
  %1276 = vmatmul.mubr.bf16.gmra.mrb[0].mxu0 %v446
  %v1277 = vpop.f32.mrb[0].mxu0
  %v1278 = vadd.f32 %v1181, %v1277
  %v1279 = vpop.f32.mrb[0].mxu0
  %v1280 = vpop.f32.mrb[0].mxu0
  %v1281 = vadd.f32 %v1184, %v1280
  %v1282 = vpop.f32.mrb[0].mxu0
  %1283 = vmatprep.mubr.bf16.mxu0 %v455
  %1284 = vmatmul.mubr.bf16.gmra.mrb[0].mxu0 %v454
  %v1285 = vpop.f32.mrb[0].mxu0
  %v1286 = vadd.f32 %v1189, %v1285
  %v1287 = vpop.f32.mrb[0].mxu0
  %v1288 = vpop.f32.mrb[0].mxu0
  %v1289 = vadd.f32 %v1192, %v1288
  %v1290 = vpop.f32.mrb[0].mxu0
  %1291 = vmatprep.mubr.bf16.mxu0 %v463
  %1292 = vmatmul.mubr.bf16.gmra.mrb[0].mxu0 %v462
  %v1293 = vpop.f32.mrb[0].mxu0
  %v1294 = vadd.f32 %v1197, %v1293
  %v1295 = vpop.f32.mrb[0].mxu0
  %v1296 = vpop.f32.mrb[0].mxu0
  %v1297 = vadd.f32 %v1200, %v1296
  %v1298 = vpop.f32.mrb[0].mxu0
  %1299 = vmatprep.mubr.bf16.mxu0 %v471
  %1300 = vmatmul.mubr.bf16.gmra.mrb[0].mxu0 %v470
  %v1301 = vpop.f32.mrb[0].mxu0
  %v1302 = vadd.f32 %v1205, %v1301
  %v1303 = vpop.f32.mrb[0].mxu0
  %v1304 = vpop.f32.mrb[0].mxu0
  %v1305 = vadd.f32 %v1208, %v1304
  %v1306 = vpop.f32.mrb[0].mxu0
  %1307 = vdwg.mxu0
  %s1308 = smul.u32 0, 128
  %s1309 = scalar_lea.vmem [#allocation2], %s1308
  %1310 = vst [vmem:[%s1309] sm:$0xff] %v1246
  %1311 = vst [vmem:[%s1309 + $0x8] sm:$0xff] %v1249
  %1312 = vst [vmem:[%s1309 + $0x10] sm:$0xff] %v1254
  %1313 = vst [vmem:[%s1309 + $0x18] sm:$0xff] %v1257
  %1314 = vst [vmem:[%s1309 + $0x20] sm:$0xff] %v1262
  %1315 = vst [vmem:[%s1309 + $0x28] sm:$0xff] %v1265
  %1316 = vst [vmem:[%s1309 + $0x30] sm:$0xff] %v1270
  %1317 = vst [vmem:[%s1309 + $0x38] sm:$0xff] %v1273
  %1318 = vst [vmem:[%s1309 + $0x40] sm:$0xff] %v1278
  %1319 = vst [vmem:[%s1309 + $0x48] sm:$0xff] %v1281
  %1320 = vst [vmem:[%s1309 + $0x50] sm:$0xff] %v1286
  %1321 = vst [vmem:[%s1309 + $0x58] sm:$0xff] %v1289
  %1322 = vst [vmem:[%s1309 + $0x60] sm:$0xff] %v1294
  %1323 = vst [vmem:[%s1309 + $0x68] sm:$0xff] %v1297
  %1324 = vst [vmem:[%s1309 + $0x70] sm:$0xff] %v1302
  %1325 = vst [vmem:[%s1309 + $0x78] sm:$0xff] %v1305
  %v1326 = vld [vmem:[#allocation3] sm:$0x1]
  %v1327 = vadd.f32 %v1246, %v1249
  %v1328 = vadd.f32 %v1327, %v1254
  %v1329 = vadd.f32 %v1328, %v1257
  %v1330 = vadd.f32 %v1329, %v1262
  %v1331 = vadd.f32 %v1330, %v1265
  %v1332 = vadd.f32 %v1331, %v1270
  %v1333 = vadd.f32 %v1332, %v1273
  %v1334 = vadd.f32 %v1333, %v1278
  %v1335 = vadd.f32 %v1334, %v1281
  %v1336 = vadd.f32 %v1335, %v1286
  %v1337 = vadd.f32 %v1336, %v1289
  %v1338 = vadd.f32 %v1337, %v1294
  %v1339 = vadd.f32 %v1338, %v1297
  %v1340 = vadd.f32 %v1339, %v1302
  %v1341 = vadd.f32 %v1340, %v1305
  %v1342 = vrot.slane %v1341, 4
  %v1343 = vadd.f32 %v1341, %v1342
  %v1344 = vrot.slane %v1343, 2
  %v1345 = vadd.f32 %v1343, %v1344
  %v1346 = vrot.slane %v1345, 1
  %v1347 = vadd.f32 %v1345, %v1346
  %v1348 = vadd.f32 %v1326, %v1347
  %1349 = vst [vmem:[#allocation3] sm:$0x1] %v1348
  %v1350 = vld [vmem:[#allocation4] sm:$0x1]
  %v1351 = vmul.f32 %v1246, %v1246
  %v1352 = vmul.f32 %v1249, %v1249
  %v1353 = vmul.f32 %v1254, %v1254
  %v1354 = vmul.f32 %v1257, %v1257
  %v1355 = vmul.f32 %v1262, %v1262
  %v1356 = vmul.f32 %v1265, %v1265
  %v1357 = vmul.f32 %v1270, %v1270
  %v1358 = vmul.f32 %v1273, %v1273
  %v1359 = vmul.f32 %v1278, %v1278
  %v1360 = vmul.f32 %v1281, %v1281
  %v1361 = vmul.f32 %v1286, %v1286
  %v1362 = vmul.f32 %v1289, %v1289
  %v1363 = vmul.f32 %v1294, %v1294
  %v1364 = vmul.f32 %v1297, %v1297
  %v1365 = vmul.f32 %v1302, %v1302
  %v1366 = vmul.f32 %v1305, %v1305
  %v1367 = vadd.f32 %v1351, %v1352
  %v1368 = vadd.f32 %v1367, %v1353
  %v1369 = vadd.f32 %v1368, %v1354
  %v1370 = vadd.f32 %v1369, %v1355
  %v1371 = vadd.f32 %v1370, %v1356
  %v1372 = vadd.f32 %v1371, %v1357
  %v1373 = vadd.f32 %v1372, %v1358
  %v1374 = vadd.f32 %v1373, %v1359
  %v1375 = vadd.f32 %v1374, %v1360
  %v1376 = vadd.f32 %v1375, %v1361
  %v1377 = vadd.f32 %v1376, %v1362
  %v1378 = vadd.f32 %v1377, %v1363
  %v1379 = vadd.f32 %v1378, %v1364
  %v1380 = vadd.f32 %v1379, %v1365
  %v1381 = vadd.f32 %v1380, %v1366
  %v1382 = vrot.slane %v1381, 4
  %v1383 = vadd.f32 %v1381, %v1382
  %v1384 = vrot.slane %v1383, 2
  %v1385 = vadd.f32 %v1383, %v1384
  %v1386 = vrot.slane %v1385, 1
  %v1387 = vadd.f32 %v1385, %v1386
  %v1388 = vadd.f32 %v1350, %v1387
  %1389 = vst [vmem:[#allocation4] sm:$0x1] %v1388
  // Predicated region
  $region22: #{discriminator_forward.5} parent=0 // pred_check
    %p1390 = pneg %p18
  $region23: #{discriminator_forward.5} parent=0 // pred_check_branch
    %1392 = sbr.rel (%p1390) target = $region25
  $region24: #{discriminator_forward.5} parent=0 // pred_region
    %v1393 = vld [vmem:[#allocation3] sm:$0x1]
    %v1394 = vmul.f32 %v1393, 0.0078125
    %v1395 = vld [vmem:[#allocation4] sm:$0x1]
    %v1396 = vmul.f32 %v1395, 0.0078125
    %v1397 = vmul.f32 %v1394, %v1394
    %v1398 = vsub.f32 %v1396, %v1397
    %v1399 = vld [vmem:[%s2] sm:$0x1]
    %v1400 = vadd.f32 %v1398, 1e-05
    %v1401 = vrsqrt.pop %v1400
    %v1402 = vmul.f32 %v1399, %v1401
    %v1403 = vld [vmem:[%s3] sm:$0x1]
    %v1404 = vmul.f32 %v1394, %v1402
    %v1405 = vsub.f32 %v1403, %v1404
    %v1406 = vld [vmem:[#allocation2] sm:$0xff]
    %v1407 = vld [vmem:[#allocation2 + $0x8] sm:$0xff]
    %v1408 = vld [vmem:[#allocation2 + $0x10] sm:$0xff]
    %v1409 = vld [vmem:[#allocation2 + $0x18] sm:$0xff]
    %v1410 = vld [vmem:[#allocation2 + $0x20] sm:$0xff]
    %v1411 = vld [vmem:[#allocation2 + $0x28] sm:$0xff]
    %v1412 = vld [vmem:[#allocation2 + $0x30] sm:$0xff]
    %v1413 = vld [vmem:[#allocation2 + $0x38] sm:$0xff]
    %v1414 = vld [vmem:[#allocation2 + $0x40] sm:$0xff]
    %v1415 = vld [vmem:[#allocation2 + $0x48] sm:$0xff]
    %v1416 = vld [vmem:[#allocation2 + $0x50] sm:$0xff]
    %v1417 = vld [vmem:[#allocation2 + $0x58] sm:$0xff]
    %v1418 = vld [vmem:[#allocation2 + $0x60] sm:$0xff]
    %v1419 = vld [vmem:[#allocation2 + $0x68] sm:$0xff]
    %v1420 = vld [vmem:[#allocation2 + $0x70] sm:$0xff]
    %v1421 = vld [vmem:[#allocation2 + $0x78] sm:$0xff]
    %v1423 = vlaneseq
    %v1424 = vshrl.u32 %v1423, 7
    %v1425 = vsub.s32 0, %v1424
    %v1426 = vrot.slane %v1402, %v1425
    %v1428 = vmul.f32 %v1406, %v1426
    %v1429 = vmul.f32 %v1407, %v1426
    %v1430 = vmul.f32 %v1408, %v1426
    %v1431 = vmul.f32 %v1409, %v1426
    %v1432 = vmul.f32 %v1410, %v1426
    %v1433 = vmul.f32 %v1411, %v1426
    %v1434 = vmul.f32 %v1412, %v1426
    %v1435 = vmul.f32 %v1413, %v1426
    %v1436 = vmul.f32 %v1414, %v1426
    %v1437 = vmul.f32 %v1415, %v1426
    %v1438 = vmul.f32 %v1416, %v1426
    %v1439 = vmul.f32 %v1417, %v1426
    %v1440 = vmul.f32 %v1418, %v1426
    %v1441 = vmul.f32 %v1419, %v1426
    %v1442 = vmul.f32 %v1420, %v1426
    %v1443 = vmul.f32 %v1421, %v1426
    %v1445 = vlaneseq
    %v1446 = vshrl.u32 %v1445, 7
    %v1447 = vsub.s32 0, %v1446
    %v1448 = vrot.slane %v1405, %v1447
    %v1450 = vadd.f32 %v1428, %v1448
    %v1451 = vadd.f32 %v1429, %v1448
    %v1452 = vadd.f32 %v1430, %v1448
    %v1453 = vadd.f32 %v1431, %v1448
    %v1454 = vadd.f32 %v1432, %v1448
    %v1455 = vadd.f32 %v1433, %v1448
    %v1456 = vadd.f32 %v1434, %v1448
    %v1457 = vadd.f32 %v1435, %v1448
    %v1458 = vadd.f32 %v1436, %v1448
    %v1459 = vadd.f32 %v1437, %v1448
    %v1460 = vadd.f32 %v1438, %v1448
    %v1461 = vadd.f32 %v1439, %v1448
    %v1462 = vadd.f32 %v1440, %v1448
    %v1463 = vadd.f32 %v1441, %v1448
    %v1464 = vadd.f32 %v1442, %v1448
    %v1465 = vadd.f32 %v1443, %v1448
    %vm1466 = vcmp.gt.f32.partialorder %v1450, 0.0
    %vm1467 = vcmp.gt.f32.partialorder %v1451, 0.0
    %vm1468 = vcmp.gt.f32.partialorder %v1452, 0.0
    %vm1469 = vcmp.gt.f32.partialorder %v1453, 0.0
    %vm1470 = vcmp.gt.f32.partialorder %v1454, 0.0
    %vm1471 = vcmp.gt.f32.partialorder %v1455, 0.0
    %vm1472 = vcmp.gt.f32.partialorder %v1456, 0.0
    %vm1473 = vcmp.gt.f32.partialorder %v1457, 0.0
    %vm1474 = vcmp.gt.f32.partialorder %v1458, 0.0
    %vm1475 = vcmp.gt.f32.partialorder %v1459, 0.0
    %vm1476 = vcmp.gt.f32.partialorder %v1460, 0.0
    %vm1477 = vcmp.gt.f32.partialorder %v1461, 0.0
    %vm1478 = vcmp.gt.f32.partialorder %v1462, 0.0
    %vm1479 = vcmp.gt.f32.partialorder %v1463, 0.0
    %vm1480 = vcmp.gt.f32.partialorder %v1464, 0.0
    %vm1481 = vcmp.gt.f32.partialorder %v1465, 0.0
    %v1482 = vmul.f32 %v1450, 0.2
    %v1483 = vmul.f32 %v1451, 0.2
    %v1484 = vmul.f32 %v1452, 0.2
    %v1485 = vmul.f32 %v1453, 0.2
    %v1486 = vmul.f32 %v1454, 0.2
    %v1487 = vmul.f32 %v1455, 0.2
    %v1488 = vmul.f32 %v1456, 0.2
    %v1489 = vmul.f32 %v1457, 0.2
    %v1490 = vmul.f32 %v1458, 0.2
    %v1491 = vmul.f32 %v1459, 0.2
    %v1492 = vmul.f32 %v1460, 0.2
    %v1493 = vmul.f32 %v1461, 0.2
    %v1494 = vmul.f32 %v1462, 0.2
    %v1495 = vmul.f32 %v1463, 0.2
    %v1496 = vmul.f32 %v1464, 0.2
    %v1497 = vmul.f32 %v1465, 0.2
    %v1498 = vsel %vm1466, %v1450, %v1482
    %v1499 = vsel %vm1467, %v1451, %v1483
    %v1500 = vsel %vm1468, %v1452, %v1484
    %v1501 = vsel %vm1469, %v1453, %v1485
    %v1502 = vsel %vm1470, %v1454, %v1486
    %v1503 = vsel %vm1471, %v1455, %v1487
    %v1504 = vsel %vm1472, %v1456, %v1488
    %v1505 = vsel %vm1473, %v1457, %v1489
    %v1506 = vsel %vm1474, %v1458, %v1490
    %v1507 = vsel %vm1475, %v1459, %v1491
    %v1508 = vsel %vm1476, %v1460, %v1492
    %v1509 = vsel %vm1477, %v1461, %v1493
    %v1510 = vsel %vm1478, %v1462, %v1494
    %v1511 = vsel %vm1479, %v1463, %v1495
    %v1512 = vsel %vm1480, %v1464, %v1496
    %v1513 = vsel %vm1481, %v1465, %v1497
    %v1514 = vpack.c.bf16 %v1499, %v1498
    %v1515 = vpack.c.bf16 %v1501, %v1500
    %v1516 = vpack.c.bf16 %v1503, %v1502
    %v1517 = vpack.c.bf16 %v1505, %v1504
    %v1518 = vpack.c.bf16 %v1507, %v1506
    %v1519 = vpack.c.bf16 %v1509, %v1508
    %v1520 = vpack.c.bf16 %v1511, %v1510
    %v1521 = vpack.c.bf16 %v1513, %v1512
    %v1530 = vunpack.c.l.b16 %v1514
    %v1531 = vunpack.c.h.b16 %v1514
    %v1532 = vunpack.c.l.b16 %v1515
    %v1533 = vunpack.c.h.b16 %v1515
    %v1534 = vunpack.c.l.b16 %v1516
    %v1535 = vunpack.c.h.b16 %v1516
    %v1536 = vunpack.c.l.b16 %v1517
    %v1537 = vunpack.c.h.b16 %v1517
    %v1538 = vunpack.c.l.b16 %v1518
    %v1539 = vunpack.c.h.b16 %v1518
    %v1540 = vunpack.c.l.b16 %v1519
    %v1541 = vunpack.c.h.b16 %v1519
    %v1542 = vunpack.c.l.b16 %v1520
    %v1543 = vunpack.c.h.b16 %v1520
    %v1544 = vunpack.c.l.b16 %v1521
    %v1545 = vunpack.c.h.b16 %v1521
    %v1546 = vpack.c.b16 %v1530, %v1530
    %v1547 = vpack.c.b16 %v1531, %v1531
    %v1548 = vpack.c.b16 %v1532, %v1532
    %v1549 = vpack.c.b16 %v1533, %v1533
    %v1550 = vpack.c.b16 %v1534, %v1534
    %v1551 = vpack.c.b16 %v1535, %v1535
    %v1552 = vpack.c.b16 %v1536, %v1536
    %v1553 = vpack.c.b16 %v1537, %v1537
    %v1554 = vpack.c.b16 %v1538, %v1538
    %v1555 = vpack.c.b16 %v1539, %v1539
    %v1556 = vpack.c.b16 %v1540, %v1540
    %v1557 = vpack.c.b16 %v1541, %v1541
    %v1558 = vpack.c.b16 %v1542, %v1542
    %v1559 = vpack.c.b16 %v1543, %v1543
    %v1560 = vpack.c.b16 %v1544, %v1544
    %v1561 = vpack.c.b16 %v1545, %v1545
    %1578 = vst [vmem:[%s4] sm:$0xf] %v1546
    %1579 = vst [vmem:[%s4 + $0x4] sm:$0xf] %v1547
    %1580 = vst [vmem:[%s4 + $0x8] sm:$0xf] %v1548
    %1581 = vst [vmem:[%s4 + $0xc] sm:$0xf] %v1549
    %1582 = vst [vmem:[%s4 + $0x10] sm:$0xf] %v1550
    %1583 = vst [vmem:[%s4 + $0x14] sm:$0xf] %v1551
    %1584 = vst [vmem:[%s4 + $0x18] sm:$0xf] %v1552
    %1585 = vst [vmem:[%s4 + $0x1c] sm:$0xf] %v1553
    %1586 = vst [vmem:[%s4 + $0x20] sm:$0xf] %v1554
    %1587 = vst [vmem:[%s4 + $0x24] sm:$0xf] %v1555
    %1588 = vst [vmem:[%s4 + $0x28] sm:$0xf] %v1556
    %1589 = vst [vmem:[%s4 + $0x2c] sm:$0xf] %v1557
    %1590 = vst [vmem:[%s4 + $0x30] sm:$0xf] %v1558
    %1591 = vst [vmem:[%s4 + $0x34] sm:$0xf] %v1559
    %1592 = vst [vmem:[%s4 + $0x38] sm:$0xf] %v1560
    %1593 = vst [vmem:[%s4 + $0x3c] sm:$0xf] %v1561
  $region25: #{discriminator_forward.5} parent=0 // pred_fallthru
    _
  // Predicated region
  $region26: #{discriminator_forward.5} parent=0 // pred_check
    _
  $region27: #{discriminator_forward.5} parent=0 // pred_check_branch
    %1595 = sbr.rel (0) target = $region29
  $region28: #{discriminator_forward.5} parent=0 // pred_region
    _
  $region29: #{discriminator_forward.5} parent=0 // pred_fallthru
    _
  // Predicated region
  $region30: #{discriminator_forward.5} parent=0 // pred_check
    _
  $region31: #{discriminator_forward.5} parent=0 // pred_check_branch
    %1597 = sbr.rel (0) target = $region33
  $region32: #{discriminator_forward.5} parent=0 // pred_region
    _
  $region33: #{discriminator_forward.5} parent=0 // pred_fallthru
    _

// kernel: discriminator_forward.6
$region0: #{discriminator_forward.6}
  #allocation0 [shape = 'u32[]', space=smem, size = 0x4, offset = 0x4, fixed_abs, tag = 'smem constant byte address 0x4 - core index']
  #allocation1 [shape = 'u32[144,128]{1,0:T(1,128)}', space=vmem, size = 0x12000, scoped, tag = 'internal scratch']
  #allocation2 [shape = 'f32[1,32,128]{2,1,0:T(8,128)}', space=vmem, size = 0x4000, scoped, tag = 'scratch operand']
  #allocation3 [shape = 'f32[1,128]{1,0:T(1,128)}', space=vmem, size = 0x200, scoped, tag = 'scratch operand']
  #allocation4 [shape = 'f32[1,128]{1,0:T(1,128)}', space=vmem, size = 0x200, scoped, tag = 'scratch operand']
  %s0 = inlined_call_operand.vmem [shape: bf16[32,2048], index: 0, kind: input, shape index: {}]
  %s1 = inlined_call_operand.vmem [shape: bf16[2048,128], index: 1, kind: input, shape index: {}]
  %s2 = inlined_call_operand.vmem [shape: f32[1,128], index: 2, kind: input, shape index: {}]
  %s3 = inlined_call_operand.vmem [shape: f32[1,128], index: 3, kind: input, shape index: {}]
  %s4 = inlined_call_operand.vmem [shape: bf16[32,128], index: 4, kind: output, shape index: {}]
  %s5 = sld [smem:[#allocation0]]
  $region34: #{discriminator_forward.6} parent=0
    _
  %s7 = ssub.s32 1, %s5
  %s8 = scalar_select 0, %s7, %s5
  // Predicated region
  $region2: #{discriminator_forward.6} parent=0 // pred_check
    _
  $region3: #{discriminator_forward.6} parent=0 // pred_check_branch
    %10 = sbr.rel (0) target = $region5
  $region4: #{discriminator_forward.6} parent=0 // pred_region
    _
  $region5: #{discriminator_forward.6} parent=0 // pred_fallthru
    _
  // Predicated region
  $region6: #{discriminator_forward.6} parent=0 // pred_check
    _
  $region7: #{discriminator_forward.6} parent=0 // pred_check_branch
    %12 = sbr.rel (0) target = $region9
  $region8: #{discriminator_forward.6} parent=0 // pred_region
    _
  $region9: #{discriminator_forward.6} parent=0 // pred_fallthru
    _
  // Predicated region
  $region10: #{discriminator_forward.6} parent=0 // pred_check
    _
  $region11: #{discriminator_forward.6} parent=0 // pred_check_branch
    %14 = sbr.rel (0) target = $region13
  $region12: #{discriminator_forward.6} parent=0 // pred_region
    _
  $region13: #{discriminator_forward.6} parent=0 // pred_fallthru
    _
  // Predicated region
  $region14: #{discriminator_forward.6} parent=0 // pred_check
    _
  $region15: #{discriminator_forward.6} parent=0 // pred_check_branch
    %16 = sbr.rel (0) target = $region17
  $region16: #{discriminator_forward.6} parent=0 // pred_region
    _
  $region17: #{discriminator_forward.6} parent=0 // pred_fallthru
    _
  %p18 = scmp.eq.s32.totalorder 0, 0
  // Predicated region
  $region18: #{discriminator_forward.6} parent=0 // pred_check
    %p19 = pneg %p18
  $region19: #{discriminator_forward.6} parent=0 // pred_check_branch
    %21 = sbr.rel (%p19) target = $region21
  $region20: #{discriminator_forward.6} parent=0 // pred_region
    %22 = vst [vmem:[#allocation3] sm:$0x1] 0.0
    %23 = vst [vmem:[#allocation4] sm:$0x1] 0.0
  $region21: #{discriminator_forward.6} parent=0 // pred_fallthru
    _
  %v24 = vld [vmem:[%s0] sm:$0xff]
  %v25 = vld [vmem:[%s0 + $0x8] sm:$0xff]
  %v26 = vld [vmem:[%s0 + $0x10] sm:$0xff]
  %v27 = vld [vmem:[%s0 + $0x18] sm:$0xff]
  %v28 = vld [vmem:[%s0 + $0x20] sm:$0xff]
  %v29 = vld [vmem:[%s0 + $0x28] sm:$0xff]
  %v30 = vld [vmem:[%s0 + $0x30] sm:$0xff]
  %v31 = vld [vmem:[%s0 + $0x38] sm:$0xff]
  %v32 = vld [vmem:[%s0 + $0x40] sm:$0xff]
  %v33 = vld [vmem:[%s0 + $0x48] sm:$0xff]
  %v34 = vld [vmem:[%s0 + $0x50] sm:$0xff]
  %v35 = vld [vmem:[%s0 + $0x58] sm:$0xff]
  %v36 = vld [vmem:[%s0 + $0x60] sm:$0xff]
  %v37 = vld [vmem:[%s0 + $0x68] sm:$0xff]
  %v38 = vld [vmem:[%s0 + $0x70] sm:$0xff]
  %v39 = vld [vmem:[%s0 + $0x78] sm:$0xff]
  %v40 = vld [vmem:[%s0 + $0x80] sm:$0xff]
  %v41 = vld [vmem:[%s0 + $0x88] sm:$0xff]
  %v42 = vld [vmem:[%s0 + $0x90] sm:$0xff]
  %v43 = vld [vmem:[%s0 + $0x98] sm:$0xff]
  %v44 = vld [vmem:[%s0 + $0xa0] sm:$0xff]
  %v45 = vld [vmem:[%s0 + $0xa8] sm:$0xff]
  %v46 = vld [vmem:[%s0 + $0xb0] sm:$0xff]
  %v47 = vld [vmem:[%s0 + $0xb8] sm:$0xff]
  %v48 = vld [vmem:[%s0 + $0xc0] sm:$0xff]
  %v49 = vld [vmem:[%s0 + $0xc8] sm:$0xff]
  %v50 = vld [vmem:[%s0 + $0xd0] sm:$0xff]
  %v51 = vld [vmem:[%s0 + $0xd8] sm:$0xff]
  %v52 = vld [vmem:[%s0 + $0xe0] sm:$0xff]
  %v53 = vld [vmem:[%s0 + $0xe8] sm:$0xff]
  %v54 = vld [vmem:[%s0 + $0xf0] sm:$0xff]
  %v55 = vld [vmem:[%s0 + $0xf8] sm:$0xff]
  %v56 = vld [vmem:[%s1] sm:$0xf]
  %v57 = vld [vmem:[%s1 + $0x4] sm:$0xf]
  %v58 = vld [vmem:[%s1 + $0x8] sm:$0xf]
  %v59 = vld [vmem:[%s1 + $0xc] sm:$0xf]
  %v60 = vld [vmem:[%s1 + $0x10] sm:$0xf]
  %v61 = vld [vmem:[%s1 + $0x14] sm:$0xf]
  %v62 = vld [vmem:[%s1 + $0x18] sm:$0xf]
  %v63 = vld [vmem:[%s1 + $0x1c] sm:$0xf]
  %v64 = vld [vmem:[%s1 + $0x20] sm:$0xf]
  %v65 = vld [vmem:[%s1 + $0x24] sm:$0xf]
  %v66 = vld [vmem:[%s1 + $0x28] sm:$0xf]
  %v67 = vld [vmem:[%s1 + $0x2c] sm:$0xf]
  %v68 = vld [vmem:[%s1 + $0x30] sm:$0xf]
  %v69 = vld [vmem:[%s1 + $0x34] sm:$0xf]
  %v70 = vld [vmem:[%s1 + $0x38] sm:$0xf]
  %v71 = vld [vmem:[%s1 + $0x3c] sm:$0xf]
  %v72 = vld [vmem:[%s1 + $0x40] sm:$0xf]
  %v73 = vld [vmem:[%s1 + $0x44] sm:$0xf]
  %v74 = vld [vmem:[%s1 + $0x48] sm:$0xf]
  %v75 = vld [vmem:[%s1 + $0x4c] sm:$0xf]
  %v76 = vld [vmem:[%s1 + $0x50] sm:$0xf]
  %v77 = vld [vmem:[%s1 + $0x54] sm:$0xf]
  %v78 = vld [vmem:[%s1 + $0x58] sm:$0xf]
  %v79 = vld [vmem:[%s1 + $0x5c] sm:$0xf]
  %v80 = vld [vmem:[%s1 + $0x60] sm:$0xf]
  %v81 = vld [vmem:[%s1 + $0x64] sm:$0xf]
  %v82 = vld [vmem:[%s1 + $0x68] sm:$0xf]
  %v83 = vld [vmem:[%s1 + $0x6c] sm:$0xf]
  %v84 = vld [vmem:[%s1 + $0x70] sm:$0xf]
  %v85 = vld [vmem:[%s1 + $0x74] sm:$0xf]
  %v86 = vld [vmem:[%s1 + $0x78] sm:$0xf]
  %v87 = vld [vmem:[%s1 + $0x7c] sm:$0xf]
  %v88 = vld [vmem:[%s1 + $0x80] sm:$0xf]
  %v89 = vld [vmem:[%s1 + $0x84] sm:$0xf]
  %v90 = vld [vmem:[%s1 + $0x88] sm:$0xf]
  %v91 = vld [vmem:[%s1 + $0x8c] sm:$0xf]
  %v92 = vld [vmem:[%s1 + $0x90] sm:$0xf]
  %v93 = vld [vmem:[%s1 + $0x94] sm:$0xf]
  %v94 = vld [vmem:[%s1 + $0x98] sm:$0xf]
  %v95 = vld [vmem:[%s1 + $0x9c] sm:$0xf]
  %v96 = vld [vmem:[%s1 + $0xa0] sm:$0xf]
  %v97 = vld [vmem:[%s1 + $0xa4] sm:$0xf]
  %v98 = vld [vmem:[%s1 + $0xa8] sm:$0xf]
  %v99 = vld [vmem:[%s1 + $0xac] sm:$0xf]
  %v100 = vld [vmem:[%s1 + $0xb0] sm:$0xf]
  %v101 = vld [vmem:[%s1 + $0xb4] sm:$0xf]
  %v102 = vld [vmem:[%s1 + $0xb8] sm:$0xf]
  %v103 = vld [vmem:[%s1 + $0xbc] sm:$0xf]
  %v104 = vld [vmem:[%s1 + $0xc0] sm:$0xf]
  %v105 = vld [vmem:[%s1 + $0xc4] sm:$0xf]
  %v106 = vld [vmem:[%s1 + $0xc8] sm:$0xf]
  %v107 = vld [vmem:[%s1 + $0xcc] sm:$0xf]
  %v108 = vld [vmem:[%s1 + $0xd0] sm:$0xf]
  %v109 = vld [vmem:[%s1 + $0xd4] sm:$0xf]
  %v110 = vld [vmem:[%s1 + $0xd8] sm:$0xf]
  %v111 = vld [vmem:[%s1 + $0xdc] sm:$0xf]
  %v112 = vld [vmem:[%s1 + $0xe0] sm:$0xf]
  %v113 = vld [vmem:[%s1 + $0xe4] sm:$0xf]
  %v114 = vld [vmem:[%s1 + $0xe8] sm:$0xf]
  %v115 = vld [vmem:[%s1 + $0xec] sm:$0xf]
  %v116 = vld [vmem:[%s1 + $0xf0] sm:$0xf]
  %v117 = vld [vmem:[%s1 + $0xf4] sm:$0xf]
  %v118 = vld [vmem:[%s1 + $0xf8] sm:$0xf]
  %v119 = vld [vmem:[%s1 + $0xfc] sm:$0xf]
  %v120 = vld [vmem:[%s1 + $0x100] sm:$0xf]
  %v121 = vld [vmem:[%s1 + $0x104] sm:$0xf]
  %v122 = vld [vmem:[%s1 + $0x108] sm:$0xf]
  %v123 = vld [vmem:[%s1 + $0x10c] sm:$0xf]
  %v124 = vld [vmem:[%s1 + $0x110] sm:$0xf]
  %v125 = vld [vmem:[%s1 + $0x114] sm:$0xf]
  %v126 = vld [vmem:[%s1 + $0x118] sm:$0xf]
  %v127 = vld [vmem:[%s1 + $0x11c] sm:$0xf]
  %v128 = vld [vmem:[%s1 + $0x120] sm:$0xf]
  %v129 = vld [vmem:[%s1 + $0x124] sm:$0xf]
  %v130 = vld [vmem:[%s1 + $0x128] sm:$0xf]
  %v131 = vld [vmem:[%s1 + $0x12c] sm:$0xf]
  %v132 = vld [vmem:[%s1 + $0x130] sm:$0xf]
  %v133 = vld [vmem:[%s1 + $0x134] sm:$0xf]
  %v134 = vld [vmem:[%s1 + $0x138] sm:$0xf]
  %v135 = vld [vmem:[%s1 + $0x13c] sm:$0xf]
  %v136 = vld [vmem:[%s1 + $0x140] sm:$0xf]
  %v137 = vld [vmem:[%s1 + $0x144] sm:$0xf]
  %v138 = vld [vmem:[%s1 + $0x148] sm:$0xf]
  %v139 = vld [vmem:[%s1 + $0x14c] sm:$0xf]
  %v140 = vld [vmem:[%s1 + $0x150] sm:$0xf]
  %v141 = vld [vmem:[%s1 + $0x154] sm:$0xf]
  %v142 = vld [vmem:[%s1 + $0x158] sm:$0xf]
  %v143 = vld [vmem:[%s1 + $0x15c] sm:$0xf]
  %v144 = vld [vmem:[%s1 + $0x160] sm:$0xf]
  %v145 = vld [vmem:[%s1 + $0x164] sm:$0xf]
  %v146 = vld [vmem:[%s1 + $0x168] sm:$0xf]
  %v147 = vld [vmem:[%s1 + $0x16c] sm:$0xf]
  %v148 = vld [vmem:[%s1 + $0x170] sm:$0xf]
  %v149 = vld [vmem:[%s1 + $0x174] sm:$0xf]
  %v150 = vld [vmem:[%s1 + $0x178] sm:$0xf]
  %v151 = vld [vmem:[%s1 + $0x17c] sm:$0xf]
  %v152 = vld [vmem:[%s1 + $0x180] sm:$0xf]
  %v153 = vld [vmem:[%s1 + $0x184] sm:$0xf]
  %v154 = vld [vmem:[%s1 + $0x188] sm:$0xf]
  %v155 = vld [vmem:[%s1 + $0x18c] sm:$0xf]
  %v156 = vld [vmem:[%s1 + $0x190] sm:$0xf]
  %v157 = vld [vmem:[%s1 + $0x194] sm:$0xf]
  %v158 = vld [vmem:[%s1 + $0x198] sm:$0xf]
  %v159 = vld [vmem:[%s1 + $0x19c] sm:$0xf]
  %v160 = vld [vmem:[%s1 + $0x1a0] sm:$0xf]
  %v161 = vld [vmem:[%s1 + $0x1a4] sm:$0xf]
  %v162 = vld [vmem:[%s1 + $0x1a8] sm:$0xf]
  %v163 = vld [vmem:[%s1 + $0x1ac] sm:$0xf]
  %v164 = vld [vmem:[%s1 + $0x1b0] sm:$0xf]
  %v165 = vld [vmem:[%s1 + $0x1b4] sm:$0xf]
  %v166 = vld [vmem:[%s1 + $0x1b8] sm:$0xf]
  %v167 = vld [vmem:[%s1 + $0x1bc] sm:$0xf]
  %v168 = vld [vmem:[%s1 + $0x1c0] sm:$0xf]
  %v169 = vld [vmem:[%s1 + $0x1c4] sm:$0xf]
  %v170 = vld [vmem:[%s1 + $0x1c8] sm:$0xf]
  %v171 = vld [vmem:[%s1 + $0x1cc] sm:$0xf]
  %v172 = vld [vmem:[%s1 + $0x1d0] sm:$0xf]
  %v173 = vld [vmem:[%s1 + $0x1d4] sm:$0xf]
  %v174 = vld [vmem:[%s1 + $0x1d8] sm:$0xf]
  %v175 = vld [vmem:[%s1 + $0x1dc] sm:$0xf]
  %v176 = vld [vmem:[%s1 + $0x1e0] sm:$0xf]
  %v177 = vld [vmem:[%s1 + $0x1e4] sm:$0xf]
  %v178 = vld [vmem:[%s1 + $0x1e8] sm:$0xf]
  %v179 = vld [vmem:[%s1 + $0x1ec] sm:$0xf]
  %v180 = vld [vmem:[%s1 + $0x1f0] sm:$0xf]
  %v181 = vld [vmem:[%s1 + $0x1f4] sm:$0xf]
  %v182 = vld [vmem:[%s1 + $0x1f8] sm:$0xf]
  %v183 = vld [vmem:[%s1 + $0x1fc] sm:$0xf]
  %v184 = vld [vmem:[%s1 + $0x200] sm:$0xf]
  %v185 = vld [vmem:[%s1 + $0x204] sm:$0xf]
  %v186 = vld [vmem:[%s1 + $0x208] sm:$0xf]
  %v187 = vld [vmem:[%s1 + $0x20c] sm:$0xf]
  %v188 = vld [vmem:[%s1 + $0x210] sm:$0xf]
  %v189 = vld [vmem:[%s1 + $0x214] sm:$0xf]
  %v190 = vld [vmem:[%s1 + $0x218] sm:$0xf]
  %v191 = vld [vmem:[%s1 + $0x21c] sm:$0xf]
  %v192 = vld [vmem:[%s1 + $0x220] sm:$0xf]
  %v193 = vld [vmem:[%s1 + $0x224] sm:$0xf]
  %v194 = vld [vmem:[%s1 + $0x228] sm:$0xf]
  %v195 = vld [vmem:[%s1 + $0x22c] sm:$0xf]
  %v196 = vld [vmem:[%s1 + $0x230] sm:$0xf]
  %v197 = vld [vmem:[%s1 + $0x234] sm:$0xf]
  %v198 = vld [vmem:[%s1 + $0x238] sm:$0xf]
  %v199 = vld [vmem:[%s1 + $0x23c] sm:$0xf]
  %v200 = vld [vmem:[%s1 + $0x240] sm:$0xf]
  %v201 = vld [vmem:[%s1 + $0x244] sm:$0xf]
  %v202 = vld [vmem:[%s1 + $0x248] sm:$0xf]
  %v203 = vld [vmem:[%s1 + $0x24c] sm:$0xf]
  %v204 = vld [vmem:[%s1 + $0x250] sm:$0xf]
  %v205 = vld [vmem:[%s1 + $0x254] sm:$0xf]
  %v206 = vld [vmem:[%s1 + $0x258] sm:$0xf]
  %v207 = vld [vmem:[%s1 + $0x25c] sm:$0xf]
  %v208 = vld [vmem:[%s1 + $0x260] sm:$0xf]
  %v209 = vld [vmem:[%s1 + $0x264] sm:$0xf]
  %v210 = vld [vmem:[%s1 + $0x268] sm:$0xf]
  %v211 = vld [vmem:[%s1 + $0x26c] sm:$0xf]
  %v212 = vld [vmem:[%s1 + $0x270] sm:$0xf]
  %v213 = vld [vmem:[%s1 + $0x274] sm:$0xf]
  %v214 = vld [vmem:[%s1 + $0x278] sm:$0xf]
  %v215 = vld [vmem:[%s1 + $0x27c] sm:$0xf]
  %v216 = vld [vmem:[%s1 + $0x280] sm:$0xf]
  %v217 = vld [vmem:[%s1 + $0x284] sm:$0xf]
  %v218 = vld [vmem:[%s1 + $0x288] sm:$0xf]
  %v219 = vld [vmem:[%s1 + $0x28c] sm:$0xf]
  %v220 = vld [vmem:[%s1 + $0x290] sm:$0xf]
  %v221 = vld [vmem:[%s1 + $0x294] sm:$0xf]
  %v222 = vld [vmem:[%s1 + $0x298] sm:$0xf]
  %v223 = vld [vmem:[%s1 + $0x29c] sm:$0xf]
  %v224 = vld [vmem:[%s1 + $0x2a0] sm:$0xf]
  %v225 = vld [vmem:[%s1 + $0x2a4] sm:$0xf]
  %v226 = vld [vmem:[%s1 + $0x2a8] sm:$0xf]
  %v227 = vld [vmem:[%s1 + $0x2ac] sm:$0xf]
  %v228 = vld [vmem:[%s1 + $0x2b0] sm:$0xf]
  %v229 = vld [vmem:[%s1 + $0x2b4] sm:$0xf]
  %v230 = vld [vmem:[%s1 + $0x2b8] sm:$0xf]
  %v231 = vld [vmem:[%s1 + $0x2bc] sm:$0xf]
  %v232 = vld [vmem:[%s1 + $0x2c0] sm:$0xf]
  %v233 = vld [vmem:[%s1 + $0x2c4] sm:$0xf]
  %v234 = vld [vmem:[%s1 + $0x2c8] sm:$0xf]
  %v235 = vld [vmem:[%s1 + $0x2cc] sm:$0xf]
  %v236 = vld [vmem:[%s1 + $0x2d0] sm:$0xf]
  %v237 = vld [vmem:[%s1 + $0x2d4] sm:$0xf]
  %v238 = vld [vmem:[%s1 + $0x2d8] sm:$0xf]
  %v239 = vld [vmem:[%s1 + $0x2dc] sm:$0xf]
  %v240 = vld [vmem:[%s1 + $0x2e0] sm:$0xf]
  %v241 = vld [vmem:[%s1 + $0x2e4] sm:$0xf]
  %v242 = vld [vmem:[%s1 + $0x2e8] sm:$0xf]
  %v243 = vld [vmem:[%s1 + $0x2ec] sm:$0xf]
  %v244 = vld [vmem:[%s1 + $0x2f0] sm:$0xf]
  %v245 = vld [vmem:[%s1 + $0x2f4] sm:$0xf]
  %v246 = vld [vmem:[%s1 + $0x2f8] sm:$0xf]
  %v247 = vld [vmem:[%s1 + $0x2fc] sm:$0xf]
  %v248 = vld [vmem:[%s1 + $0x300] sm:$0xf]
  %v249 = vld [vmem:[%s1 + $0x304] sm:$0xf]
  %v250 = vld [vmem:[%s1 + $0x308] sm:$0xf]
  %v251 = vld [vmem:[%s1 + $0x30c] sm:$0xf]
  %v252 = vld [vmem:[%s1 + $0x310] sm:$0xf]
  %v253 = vld [vmem:[%s1 + $0x314] sm:$0xf]
  %v254 = vld [vmem:[%s1 + $0x318] sm:$0xf]
  %v255 = vld [vmem:[%s1 + $0x31c] sm:$0xf]
  %v256 = vld [vmem:[%s1 + $0x320] sm:$0xf]
  %v257 = vld [vmem:[%s1 + $0x324] sm:$0xf]
  %v258 = vld [vmem:[%s1 + $0x328] sm:$0xf]
  %v259 = vld [vmem:[%s1 + $0x32c] sm:$0xf]
  %v260 = vld [vmem:[%s1 + $0x330] sm:$0xf]
  %v261 = vld [vmem:[%s1 + $0x334] sm:$0xf]
  %v262 = vld [vmem:[%s1 + $0x338] sm:$0xf]
  %v263 = vld [vmem:[%s1 + $0x33c] sm:$0xf]
  %v264 = vld [vmem:[%s1 + $0x340] sm:$0xf]
  %v265 = vld [vmem:[%s1 + $0x344] sm:$0xf]
  %v266 = vld [vmem:[%s1 + $0x348] sm:$0xf]
  %v267 = vld [vmem:[%s1 + $0x34c] sm:$0xf]
  %v268 = vld [vmem:[%s1 + $0x350] sm:$0xf]
  %v269 = vld [vmem:[%s1 + $0x354] sm:$0xf]
  %v270 = vld [vmem:[%s1 + $0x358] sm:$0xf]
  %v271 = vld [vmem:[%s1 + $0x35c] sm:$0xf]
  %v272 = vld [vmem:[%s1 + $0x360] sm:$0xf]
  %v273 = vld [vmem:[%s1 + $0x364] sm:$0xf]
  %v274 = vld [vmem:[%s1 + $0x368] sm:$0xf]
  %v275 = vld [vmem:[%s1 + $0x36c] sm:$0xf]
  %v276 = vld [vmem:[%s1 + $0x370] sm:$0xf]
  %v277 = vld [vmem:[%s1 + $0x374] sm:$0xf]
  %v278 = vld [vmem:[%s1 + $0x378] sm:$0xf]
  %v279 = vld [vmem:[%s1 + $0x37c] sm:$0xf]
  %v280 = vld [vmem:[%s1 + $0x380] sm:$0xf]
  %v281 = vld [vmem:[%s1 + $0x384] sm:$0xf]
  %v282 = vld [vmem:[%s1 + $0x388] sm:$0xf]
  %v283 = vld [vmem:[%s1 + $0x38c] sm:$0xf]
  %v284 = vld [vmem:[%s1 + $0x390] sm:$0xf]
  %v285 = vld [vmem:[%s1 + $0x394] sm:$0xf]
  %v286 = vld [vmem:[%s1 + $0x398] sm:$0xf]
  %v287 = vld [vmem:[%s1 + $0x39c] sm:$0xf]
  %v288 = vld [vmem:[%s1 + $0x3a0] sm:$0xf]
  %v289 = vld [vmem:[%s1 + $0x3a4] sm:$0xf]
  %v290 = vld [vmem:[%s1 + $0x3a8] sm:$0xf]
  %v291 = vld [vmem:[%s1 + $0x3ac] sm:$0xf]
  %v292 = vld [vmem:[%s1 + $0x3b0] sm:$0xf]
  %v293 = vld [vmem:[%s1 + $0x3b4] sm:$0xf]
  %v294 = vld [vmem:[%s1 + $0x3b8] sm:$0xf]
  %v295 = vld [vmem:[%s1 + $0x3bc] sm:$0xf]
  %v296 = vld [vmem:[%s1 + $0x3c0] sm:$0xf]
  %v297 = vld [vmem:[%s1 + $0x3c4] sm:$0xf]
  %v298 = vld [vmem:[%s1 + $0x3c8] sm:$0xf]
  %v299 = vld [vmem:[%s1 + $0x3cc] sm:$0xf]
  %v300 = vld [vmem:[%s1 + $0x3d0] sm:$0xf]
  %v301 = vld [vmem:[%s1 + $0x3d4] sm:$0xf]
  %v302 = vld [vmem:[%s1 + $0x3d8] sm:$0xf]
  %v303 = vld [vmem:[%s1 + $0x3dc] sm:$0xf]
  %v304 = vld [vmem:[%s1 + $0x3e0] sm:$0xf]
  %v305 = vld [vmem:[%s1 + $0x3e4] sm:$0xf]
  %v306 = vld [vmem:[%s1 + $0x3e8] sm:$0xf]
  %v307 = vld [vmem:[%s1 + $0x3ec] sm:$0xf]
  %v308 = vld [vmem:[%s1 + $0x3f0] sm:$0xf]
  %v309 = vld [vmem:[%s1 + $0x3f4] sm:$0xf]
  %v310 = vld [vmem:[%s1 + $0x3f8] sm:$0xf]
  %v311 = vld [vmem:[%s1 + $0x3fc] sm:$0xf]
  %v344 = vunpack.c.l.b16 %v24
  %v345 = vunpack.c.h.b16 %v24
  %v346 = vunpack.c.l.b16 %v25
  %v347 = vunpack.c.h.b16 %v25
  %v348 = vunpack.c.l.b16 %v26
  %v349 = vunpack.c.h.b16 %v26
  %v350 = vunpack.c.l.b16 %v27
  %v351 = vunpack.c.h.b16 %v27
  %v352 = vunpack.c.l.b16 %v28
  %v353 = vunpack.c.h.b16 %v28
  %v354 = vunpack.c.l.b16 %v29
  %v355 = vunpack.c.h.b16 %v29
  %v356 = vunpack.c.l.b16 %v30
  %v357 = vunpack.c.h.b16 %v30
  %v358 = vunpack.c.l.b16 %v31
  %v359 = vunpack.c.h.b16 %v31
  %v360 = vunpack.c.l.b16 %v32
  %v361 = vunpack.c.h.b16 %v32
  %v362 = vunpack.c.l.b16 %v33
  %v363 = vunpack.c.h.b16 %v33
  %v364 = vunpack.c.l.b16 %v34
  %v365 = vunpack.c.h.b16 %v34
  %v366 = vunpack.c.l.b16 %v35
  %v367 = vunpack.c.h.b16 %v35
  %v368 = vunpack.c.l.b16 %v36
  %v369 = vunpack.c.h.b16 %v36
  %v370 = vunpack.c.l.b16 %v37
  %v371 = vunpack.c.h.b16 %v37
  %v372 = vunpack.c.l.b16 %v38
  %v373 = vunpack.c.h.b16 %v38
  %v374 = vunpack.c.l.b16 %v39
  %v375 = vunpack.c.h.b16 %v39
  %v376 = vunpack.c.l.b16 %v40
  %v377 = vunpack.c.h.b16 %v40
  %v378 = vunpack.c.l.b16 %v41
  %v379 = vunpack.c.h.b16 %v41
  %v380 = vunpack.c.l.b16 %v42
  %v381 = vunpack.c.h.b16 %v42
  %v382 = vunpack.c.l.b16 %v43
  %v383 = vunpack.c.h.b16 %v43
  %v384 = vunpack.c.l.b16 %v44
  %v385 = vunpack.c.h.b16 %v44
  %v386 = vunpack.c.l.b16 %v45
  %v387 = vunpack.c.h.b16 %v45
  %v388 = vunpack.c.l.b16 %v46
  %v389 = vunpack.c.h.b16 %v46
  %v390 = vunpack.c.l.b16 %v47
  %v391 = vunpack.c.h.b16 %v47
  %v392 = vunpack.c.l.b16 %v48
  %v393 = vunpack.c.h.b16 %v48
  %v394 = vunpack.c.l.b16 %v49
  %v395 = vunpack.c.h.b16 %v49
  %v396 = vunpack.c.l.b16 %v50
  %v397 = vunpack.c.h.b16 %v50
  %v398 = vunpack.c.l.b16 %v51
  %v399 = vunpack.c.h.b16 %v51
  %v400 = vunpack.c.l.b16 %v52
  %v401 = vunpack.c.h.b16 %v52
  %v402 = vunpack.c.l.b16 %v53
  %v403 = vunpack.c.h.b16 %v53
  %v404 = vunpack.c.l.b16 %v54
  %v405 = vunpack.c.h.b16 %v54
  %v406 = vunpack.c.l.b16 %v55
  %v407 = vunpack.c.h.b16 %v55
  %v408 = vpack.c.b16 %v360, %v344
  %v409 = vpack.c.b16 %v361, %v345
  %v410 = vpack.c.b16 %v362, %v346
  %v411 = vpack.c.b16 %v363, %v347
  %v412 = vpack.c.b16 %v364, %v348
  %v413 = vpack.c.b16 %v365, %v349
  %v414 = vpack.c.b16 %v366, %v350
  %v415 = vpack.c.b16 %v367, %v351
  %v416 = vpack.c.b16 %v368, %v352
  %v417 = vpack.c.b16 %v369, %v353
  %v418 = vpack.c.b16 %v370, %v354
  %v419 = vpack.c.b16 %v371, %v355
  %v420 = vpack.c.b16 %v372, %v356
  %v421 = vpack.c.b16 %v373, %v357
  %v422 = vpack.c.b16 %v374, %v358
  %v423 = vpack.c.b16 %v375, %v359
  %v424 = vpack.c.b16 %v392, %v376
  %v425 = vpack.c.b16 %v393, %v377
  %v426 = vpack.c.b16 %v394, %v378
  %v427 = vpack.c.b16 %v395, %v379
  %v428 = vpack.c.b16 %v396, %v380
  %v429 = vpack.c.b16 %v397, %v381
  %v430 = vpack.c.b16 %v398, %v382
  %v431 = vpack.c.b16 %v399, %v383
  %v432 = vpack.c.b16 %v400, %v384
  %v433 = vpack.c.b16 %v401, %v385
  %v434 = vpack.c.b16 %v402, %v386
  %v435 = vpack.c.b16 %v403, %v387
  %v436 = vpack.c.b16 %v404, %v388
  %v437 = vpack.c.b16 %v405, %v389
  %v438 = vpack.c.b16 %v406, %v390
  %v439 = vpack.c.b16 %v407, %v391
  %v728 = vunpack.c.l.b16 %v56
  %v729 = vunpack.c.l.b16 %v57
  %v730 = vunpack.c.l.b16 %v58
  %v731 = vunpack.c.l.b16 %v59
  %v732 = vunpack.c.l.b16 %v60
  %v733 = vunpack.c.l.b16 %v61
  %v734 = vunpack.c.l.b16 %v62
  %v735 = vunpack.c.l.b16 %v63
  %v736 = vunpack.c.l.b16 %v64
  %v737 = vunpack.c.l.b16 %v65
  %v738 = vunpack.c.l.b16 %v66
  %v739 = vunpack.c.l.b16 %v67
  %v740 = vunpack.c.l.b16 %v68
  %v741 = vunpack.c.l.b16 %v69
  %v742 = vunpack.c.l.b16 %v70
  %v743 = vunpack.c.l.b16 %v71
  %v744 = vunpack.c.l.b16 %v72
  %v745 = vunpack.c.l.b16 %v73
  %v746 = vunpack.c.l.b16 %v74
  %v747 = vunpack.c.l.b16 %v75
  %v748 = vunpack.c.l.b16 %v76
  %v749 = vunpack.c.l.b16 %v77
  %v750 = vunpack.c.l.b16 %v78
  %v751 = vunpack.c.l.b16 %v79
  %v752 = vunpack.c.l.b16 %v80
  %v753 = vunpack.c.l.b16 %v81
  %v754 = vunpack.c.l.b16 %v82
  %v755 = vunpack.c.l.b16 %v83
  %v756 = vunpack.c.l.b16 %v84
  %v757 = vunpack.c.l.b16 %v85
  %v758 = vunpack.c.l.b16 %v86
  %v759 = vunpack.c.l.b16 %v87
  %v760 = vunpack.c.l.b16 %v88
  %v761 = vunpack.c.l.b16 %v89
  %v762 = vunpack.c.l.b16 %v90
  %v763 = vunpack.c.l.b16 %v91
  %v764 = vunpack.c.l.b16 %v92
  %v765 = vunpack.c.l.b16 %v93
  %v766 = vunpack.c.l.b16 %v94
  %v767 = vunpack.c.l.b16 %v95
  %v768 = vunpack.c.l.b16 %v96
  %v769 = vunpack.c.l.b16 %v97
  %v770 = vunpack.c.l.b16 %v98
  %v771 = vunpack.c.l.b16 %v99
  %v772 = vunpack.c.l.b16 %v100
  %v773 = vunpack.c.l.b16 %v101
  %v774 = vunpack.c.l.b16 %v102
  %v775 = vunpack.c.l.b16 %v103
  %v776 = vunpack.c.l.b16 %v104
  %v777 = vunpack.c.l.b16 %v105
  %v778 = vunpack.c.l.b16 %v106
  %v779 = vunpack.c.l.b16 %v107
  %v780 = vunpack.c.l.b16 %v108
  %v781 = vunpack.c.l.b16 %v109
  %v782 = vunpack.c.l.b16 %v110
  %v783 = vunpack.c.l.b16 %v111
  %v784 = vunpack.c.l.b16 %v112
  %v785 = vunpack.c.l.b16 %v113
  %v786 = vunpack.c.l.b16 %v114
  %v787 = vunpack.c.l.b16 %v115
  %v788 = vunpack.c.l.b16 %v116
  %v789 = vunpack.c.l.b16 %v117
  %v790 = vunpack.c.l.b16 %v118
  %v791 = vunpack.c.l.b16 %v119
  %v792 = vunpack.c.l.b16 %v120
  %v793 = vunpack.c.l.b16 %v121
  %v794 = vunpack.c.l.b16 %v122
  %v795 = vunpack.c.l.b16 %v123
  %v796 = vunpack.c.l.b16 %v124
  %v797 = vunpack.c.l.b16 %v125
  %v798 = vunpack.c.l.b16 %v126
  %v799 = vunpack.c.l.b16 %v127
  %v800 = vunpack.c.l.b16 %v128
  %v801 = vunpack.c.l.b16 %v129
  %v802 = vunpack.c.l.b16 %v130
  %v803 = vunpack.c.l.b16 %v131
  %v804 = vunpack.c.l.b16 %v132
  %v805 = vunpack.c.l.b16 %v133
  %v806 = vunpack.c.l.b16 %v134
  %v807 = vunpack.c.l.b16 %v135
  %v808 = vunpack.c.l.b16 %v136
  %v809 = vunpack.c.l.b16 %v137
  %v810 = vunpack.c.l.b16 %v138
  %v811 = vunpack.c.l.b16 %v139
  %v812 = vunpack.c.l.b16 %v140
  %v813 = vunpack.c.l.b16 %v141
  %v814 = vunpack.c.l.b16 %v142
  %v815 = vunpack.c.l.b16 %v143
  %v816 = vunpack.c.l.b16 %v144
  %v817 = vunpack.c.l.b16 %v145
  %v818 = vunpack.c.l.b16 %v146
  %v819 = vunpack.c.l.b16 %v147
  %v820 = vunpack.c.l.b16 %v148
  %v821 = vunpack.c.l.b16 %v149
  %v822 = vunpack.c.l.b16 %v150
  %v823 = vunpack.c.l.b16 %v151
  %v824 = vunpack.c.l.b16 %v152
  %v825 = vunpack.c.l.b16 %v153
  %v826 = vunpack.c.l.b16 %v154
  %v827 = vunpack.c.l.b16 %v155
  %v828 = vunpack.c.l.b16 %v156
  %v829 = vunpack.c.l.b16 %v157
  %v830 = vunpack.c.l.b16 %v158
  %v831 = vunpack.c.l.b16 %v159
  %v832 = vunpack.c.l.b16 %v160
  %v833 = vunpack.c.l.b16 %v161
  %v834 = vunpack.c.l.b16 %v162
  %v835 = vunpack.c.l.b16 %v163
  %v836 = vunpack.c.l.b16 %v164
  %v837 = vunpack.c.l.b16 %v165
  %v838 = vunpack.c.l.b16 %v166
  %v839 = vunpack.c.l.b16 %v167
  %v840 = vunpack.c.l.b16 %v168
  %v841 = vunpack.c.l.b16 %v169
  %v842 = vunpack.c.l.b16 %v170
  %v843 = vunpack.c.l.b16 %v171
  %v844 = vunpack.c.l.b16 %v172
  %v845 = vunpack.c.l.b16 %v173
  %v846 = vunpack.c.l.b16 %v174
  %v847 = vunpack.c.l.b16 %v175
  %v848 = vunpack.c.l.b16 %v176
  %v849 = vunpack.c.l.b16 %v177
  %v850 = vunpack.c.l.b16 %v178
  %v851 = vunpack.c.l.b16 %v179
  %v852 = vunpack.c.l.b16 %v180
  %v853 = vunpack.c.l.b16 %v181
  %v854 = vunpack.c.l.b16 %v182
  %v855 = vunpack.c.l.b16 %v183
  %v856 = vunpack.c.l.b16 %v184
  %v857 = vunpack.c.l.b16 %v185
  %v858 = vunpack.c.l.b16 %v186
  %v859 = vunpack.c.l.b16 %v187
  %v860 = vunpack.c.l.b16 %v188
  %v861 = vunpack.c.l.b16 %v189
  %v862 = vunpack.c.l.b16 %v190
  %v863 = vunpack.c.l.b16 %v191
  %v864 = vunpack.c.l.b16 %v192
  %v865 = vunpack.c.l.b16 %v193
  %v866 = vunpack.c.l.b16 %v194
  %v867 = vunpack.c.l.b16 %v195
  %v868 = vunpack.c.l.b16 %v196
  %v869 = vunpack.c.l.b16 %v197
  %v870 = vunpack.c.l.b16 %v198
  %v871 = vunpack.c.l.b16 %v199
  %v872 = vunpack.c.l.b16 %v200
  %v873 = vunpack.c.l.b16 %v201
  %v874 = vunpack.c.l.b16 %v202
  %v875 = vunpack.c.l.b16 %v203
  %v876 = vunpack.c.l.b16 %v204
  %v877 = vunpack.c.l.b16 %v205
  %v878 = vunpack.c.l.b16 %v206
  %v879 = vunpack.c.l.b16 %v207
  %v880 = vunpack.c.l.b16 %v208
  %v881 = vunpack.c.l.b16 %v209
  %v882 = vunpack.c.l.b16 %v210
  %v883 = vunpack.c.l.b16 %v211
  %v884 = vunpack.c.l.b16 %v212
  %v885 = vunpack.c.l.b16 %v213
  %v886 = vunpack.c.l.b16 %v214
  %v887 = vunpack.c.l.b16 %v215
  %v888 = vunpack.c.l.b16 %v216
  %v889 = vunpack.c.l.b16 %v217
  %v890 = vunpack.c.l.b16 %v218
  %v891 = vunpack.c.l.b16 %v219
  %v892 = vunpack.c.l.b16 %v220
  %v893 = vunpack.c.l.b16 %v221
  %v894 = vunpack.c.l.b16 %v222
  %v895 = vunpack.c.l.b16 %v223
  %v896 = vunpack.c.l.b16 %v224
  %v897 = vunpack.c.l.b16 %v225
  %v898 = vunpack.c.l.b16 %v226
  %v899 = vunpack.c.l.b16 %v227
  %v900 = vunpack.c.l.b16 %v228
  %v901 = vunpack.c.l.b16 %v229
  %v902 = vunpack.c.l.b16 %v230
  %v903 = vunpack.c.l.b16 %v231
  %v904 = vunpack.c.l.b16 %v232
  %v905 = vunpack.c.l.b16 %v233
  %v906 = vunpack.c.l.b16 %v234
  %v907 = vunpack.c.l.b16 %v235
  %v908 = vunpack.c.l.b16 %v236
  %v909 = vunpack.c.l.b16 %v237
  %v910 = vunpack.c.l.b16 %v238
  %v911 = vunpack.c.l.b16 %v239
  %v912 = vunpack.c.l.b16 %v240
  %v913 = vunpack.c.l.b16 %v241
  %v914 = vunpack.c.l.b16 %v242
  %v915 = vunpack.c.l.b16 %v243
  %v916 = vunpack.c.l.b16 %v244
  %v917 = vunpack.c.l.b16 %v245
  %v918 = vunpack.c.l.b16 %v246
  %v919 = vunpack.c.l.b16 %v247
  %v920 = vunpack.c.l.b16 %v248
  %v921 = vunpack.c.l.b16 %v249
  %v922 = vunpack.c.l.b16 %v250
  %v923 = vunpack.c.l.b16 %v251
  %v924 = vunpack.c.l.b16 %v252
  %v925 = vunpack.c.l.b16 %v253
  %v926 = vunpack.c.l.b16 %v254
  %v927 = vunpack.c.l.b16 %v255
  %v928 = vunpack.c.l.b16 %v256
  %v929 = vunpack.c.l.b16 %v257
  %v930 = vunpack.c.l.b16 %v258
  %v931 = vunpack.c.l.b16 %v259
  %v932 = vunpack.c.l.b16 %v260
  %v933 = vunpack.c.l.b16 %v261
  %v934 = vunpack.c.l.b16 %v262
  %v935 = vunpack.c.l.b16 %v263
  %v936 = vunpack.c.l.b16 %v264
  %v937 = vunpack.c.l.b16 %v265
  %v938 = vunpack.c.l.b16 %v266
  %v939 = vunpack.c.l.b16 %v267
  %v940 = vunpack.c.l.b16 %v268
  %v941 = vunpack.c.l.b16 %v269
  %v942 = vunpack.c.l.b16 %v270
  %v943 = vunpack.c.l.b16 %v271
  %v944 = vunpack.c.l.b16 %v272
  %v945 = vunpack.c.l.b16 %v273
  %v946 = vunpack.c.l.b16 %v274
  %v947 = vunpack.c.l.b16 %v275
  %v948 = vunpack.c.l.b16 %v276
  %v949 = vunpack.c.l.b16 %v277
  %v950 = vunpack.c.l.b16 %v278
  %v951 = vunpack.c.l.b16 %v279
  %v952 = vunpack.c.l.b16 %v280
  %v953 = vunpack.c.l.b16 %v281
  %v954 = vunpack.c.l.b16 %v282
  %v955 = vunpack.c.l.b16 %v283
  %v956 = vunpack.c.l.b16 %v284
  %v957 = vunpack.c.l.b16 %v285
  %v958 = vunpack.c.l.b16 %v286
  %v959 = vunpack.c.l.b16 %v287
  %v960 = vunpack.c.l.b16 %v288
  %v961 = vunpack.c.l.b16 %v289
  %v962 = vunpack.c.l.b16 %v290
  %v963 = vunpack.c.l.b16 %v291
  %v964 = vunpack.c.l.b16 %v292
  %v965 = vunpack.c.l.b16 %v293
  %v966 = vunpack.c.l.b16 %v294
  %v967 = vunpack.c.l.b16 %v295
  %v968 = vunpack.c.l.b16 %v296
  %v969 = vunpack.c.l.b16 %v297
  %v970 = vunpack.c.l.b16 %v298
  %v971 = vunpack.c.l.b16 %v299
  %v972 = vunpack.c.l.b16 %v300
  %v973 = vunpack.c.l.b16 %v301
  %v974 = vunpack.c.l.b16 %v302
  %v975 = vunpack.c.l.b16 %v303
  %v976 = vunpack.c.l.b16 %v304
  %v977 = vunpack.c.l.b16 %v305
  %v978 = vunpack.c.l.b16 %v306
  %v979 = vunpack.c.l.b16 %v307
  %v980 = vunpack.c.l.b16 %v308
  %v981 = vunpack.c.l.b16 %v309
  %v982 = vunpack.c.l.b16 %v310
  %v983 = vunpack.c.l.b16 %v311
  %v984 = vpack.c.b16 %v729, %v728
  %v985 = vpack.c.b16 %v731, %v730
  %v986 = vpack.c.b16 %v733, %v732
  %v987 = vpack.c.b16 %v735, %v734
  %v988 = vpack.c.b16 %v737, %v736
  %v989 = vpack.c.b16 %v739, %v738
  %v990 = vpack.c.b16 %v741, %v740
  %v991 = vpack.c.b16 %v743, %v742
  %v992 = vpack.c.b16 %v745, %v744
  %v993 = vpack.c.b16 %v747, %v746
  %v994 = vpack.c.b16 %v749, %v748
  %v995 = vpack.c.b16 %v751, %v750
  %v996 = vpack.c.b16 %v753, %v752
  %v997 = vpack.c.b16 %v755, %v754
  %v998 = vpack.c.b16 %v757, %v756
  %v999 = vpack.c.b16 %v759, %v758
  %v1000 = vpack.c.b16 %v761, %v760
  %v1001 = vpack.c.b16 %v763, %v762
  %v1002 = vpack.c.b16 %v765, %v764
  %v1003 = vpack.c.b16 %v767, %v766
  %v1004 = vpack.c.b16 %v769, %v768
  %v1005 = vpack.c.b16 %v771, %v770
  %v1006 = vpack.c.b16 %v773, %v772
  %v1007 = vpack.c.b16 %v775, %v774
  %v1008 = vpack.c.b16 %v777, %v776
  %v1009 = vpack.c.b16 %v779, %v778
  %v1010 = vpack.c.b16 %v781, %v780
  %v1011 = vpack.c.b16 %v783, %v782
  %v1012 = vpack.c.b16 %v785, %v784
  %v1013 = vpack.c.b16 %v787, %v786
  %v1014 = vpack.c.b16 %v789, %v788
  %v1015 = vpack.c.b16 %v791, %v790
  %v1016 = vpack.c.b16 %v793, %v792
  %v1017 = vpack.c.b16 %v795, %v794
  %v1018 = vpack.c.b16 %v797, %v796
  %v1019 = vpack.c.b16 %v799, %v798
  %v1020 = vpack.c.b16 %v801, %v800
  %v1021 = vpack.c.b16 %v803, %v802
  %v1022 = vpack.c.b16 %v805, %v804
  %v1023 = vpack.c.b16 %v807, %v806
  %v1024 = vpack.c.b16 %v809, %v808
  %v1025 = vpack.c.b16 %v811, %v810
  %v1026 = vpack.c.b16 %v813, %v812
  %v1027 = vpack.c.b16 %v815, %v814
  %v1028 = vpack.c.b16 %v817, %v816
  %v1029 = vpack.c.b16 %v819, %v818
  %v1030 = vpack.c.b16 %v821, %v820
  %v1031 = vpack.c.b16 %v823, %v822
  %v1032 = vpack.c.b16 %v825, %v824
  %v1033 = vpack.c.b16 %v827, %v826
  %v1034 = vpack.c.b16 %v829, %v828
  %v1035 = vpack.c.b16 %v831, %v830
  %v1036 = vpack.c.b16 %v833, %v832
  %v1037 = vpack.c.b16 %v835, %v834
  %v1038 = vpack.c.b16 %v837, %v836
  %v1039 = vpack.c.b16 %v839, %v838
  %v1040 = vpack.c.b16 %v841, %v840
  %v1041 = vpack.c.b16 %v843, %v842
  %v1042 = vpack.c.b16 %v845, %v844
  %v1043 = vpack.c.b16 %v847, %v846
  %v1044 = vpack.c.b16 %v849, %v848
  %v1045 = vpack.c.b16 %v851, %v850
  %v1046 = vpack.c.b16 %v853, %v852
  %v1047 = vpack.c.b16 %v855, %v854
  %v1048 = vpack.c.b16 %v857, %v856
  %v1049 = vpack.c.b16 %v859, %v858
  %v1050 = vpack.c.b16 %v861, %v860
  %v1051 = vpack.c.b16 %v863, %v862
  %v1052 = vpack.c.b16 %v865, %v864
  %v1053 = vpack.c.b16 %v867, %v866
  %v1054 = vpack.c.b16 %v869, %v868
  %v1055 = vpack.c.b16 %v871, %v870
  %v1056 = vpack.c.b16 %v873, %v872
  %v1057 = vpack.c.b16 %v875, %v874
  %v1058 = vpack.c.b16 %v877, %v876
  %v1059 = vpack.c.b16 %v879, %v878
  %v1060 = vpack.c.b16 %v881, %v880
  %v1061 = vpack.c.b16 %v883, %v882
  %v1062 = vpack.c.b16 %v885, %v884
  %v1063 = vpack.c.b16 %v887, %v886
  %v1064 = vpack.c.b16 %v889, %v888
  %v1065 = vpack.c.b16 %v891, %v890
  %v1066 = vpack.c.b16 %v893, %v892
  %v1067 = vpack.c.b16 %v895, %v894
  %v1068 = vpack.c.b16 %v897, %v896
  %v1069 = vpack.c.b16 %v899, %v898
  %v1070 = vpack.c.b16 %v901, %v900
  %v1071 = vpack.c.b16 %v903, %v902
  %v1072 = vpack.c.b16 %v905, %v904
  %v1073 = vpack.c.b16 %v907, %v906
  %v1074 = vpack.c.b16 %v909, %v908
  %v1075 = vpack.c.b16 %v911, %v910
  %v1076 = vpack.c.b16 %v913, %v912
  %v1077 = vpack.c.b16 %v915, %v914
  %v1078 = vpack.c.b16 %v917, %v916
  %v1079 = vpack.c.b16 %v919, %v918
  %v1080 = vpack.c.b16 %v921, %v920
  %v1081 = vpack.c.b16 %v923, %v922
  %v1082 = vpack.c.b16 %v925, %v924
  %v1083 = vpack.c.b16 %v927, %v926
  %v1084 = vpack.c.b16 %v929, %v928
  %v1085 = vpack.c.b16 %v931, %v930
  %v1086 = vpack.c.b16 %v933, %v932
  %v1087 = vpack.c.b16 %v935, %v934
  %v1088 = vpack.c.b16 %v937, %v936
  %v1089 = vpack.c.b16 %v939, %v938
  %v1090 = vpack.c.b16 %v941, %v940
  %v1091 = vpack.c.b16 %v943, %v942
  %v1092 = vpack.c.b16 %v945, %v944
  %v1093 = vpack.c.b16 %v947, %v946
  %v1094 = vpack.c.b16 %v949, %v948
  %v1095 = vpack.c.b16 %v951, %v950
  %v1096 = vpack.c.b16 %v953, %v952
  %v1097 = vpack.c.b16 %v955, %v954
  %v1098 = vpack.c.b16 %v957, %v956
  %v1099 = vpack.c.b16 %v959, %v958
  %v1100 = vpack.c.b16 %v961, %v960
  %v1101 = vpack.c.b16 %v963, %v962
  %v1102 = vpack.c.b16 %v965, %v964
  %v1103 = vpack.c.b16 %v967, %v966
  %v1104 = vpack.c.b16 %v969, %v968
  %v1105 = vpack.c.b16 %v971, %v970
  %v1106 = vpack.c.b16 %v973, %v972
  %v1107 = vpack.c.b16 %v975, %v974
  %v1108 = vpack.c.b16 %v977, %v976
  %v1109 = vpack.c.b16 %v979, %v978
  %v1110 = vpack.c.b16 %v981, %v980
  %v1111 = vpack.c.b16 %v983, %v982
  %1240 = vmatprep.subr.bf16.mxu0 0
  %1241 = vmatpush1.bf16.msra.mxu0 %v984
  %1242 = vmatprep.subr.bf16.mxu0 0
  %1243 = vmatpush1.bf16.msra.mxu0 %v985
  %1244 = vmatprep.subr.bf16.mxu0 0
  %1245 = vmatpush1.bf16.msra.mxu0 %v986
  %1246 = vmatprep.subr.bf16.mxu0 0
  %1247 = vmatpush1.bf16.msra.mxu0 %v987
  %1248 = vmatprep.subr.bf16.mxu0 0
  %1249 = vmatpush1.bf16.msra.mxu0 %v988
  %1250 = vmatprep.subr.bf16.mxu0 0
  %1251 = vmatpush1.bf16.msra.mxu0 %v989
  %1252 = vmatprep.subr.bf16.mxu0 0
  %1253 = vmatpush1.bf16.msra.mxu0 %v990
  %1254 = vmatprep.subr.bf16.mxu0 0
  %1255 = vmatpush1.bf16.msra.mxu0 %v991
  %1256 = vmatprep.subr.bf16.mxu0 0
  %1257 = vmatpush1.bf16.msra.mxu0 %v992
  %1258 = vmatprep.subr.bf16.mxu0 0
  %1259 = vmatpush1.bf16.msra.mxu0 %v993
  %1260 = vmatprep.subr.bf16.mxu0 0
  %1261 = vmatpush1.bf16.msra.mxu0 %v994
  %1262 = vmatprep.subr.bf16.mxu0 0
  %1263 = vmatpush1.bf16.msra.mxu0 %v995
  %1264 = vmatprep.subr.bf16.mxu0 0
  %1265 = vmatpush1.bf16.msra.mxu0 %v996
  %1266 = vmatprep.subr.bf16.mxu0 0
  %1267 = vmatpush1.bf16.msra.mxu0 %v997
  %1268 = vmatprep.subr.bf16.mxu0 0
  %1269 = vmatpush1.bf16.msra.mxu0 %v998
  %1270 = vmatprep.subr.bf16.mxu0 0
  %1271 = vmatpush1.bf16.msra.mxu0 %v999
  %1272 = vmatprep.mubr.bf16.mxu0 %v409
  %1273 = vmatmul.mubr.bf16.gmra.mrb[0].mxu0 %v408
  %v1274 = vpop.f32.mrb[0].mxu0
  %v1275 = vadd.f32 0.0, %v1274
  %v1276 = vpop.f32.mrb[0].mxu0
  %v1277 = vpop.f32.mrb[0].mxu0
  %v1278 = vadd.f32 0.0, %v1277
  %v1279 = vpop.f32.mrb[0].mxu0
  %1280 = vmatprep.mubr.bf16.mxu0 %v425
  %1281 = vmatmul.mubr.bf16.gmra.mrb[0].mxu0 %v424
  %v1282 = vpop.f32.mrb[0].mxu0
  %v1283 = vadd.f32 0.0, %v1282
  %v1284 = vpop.f32.mrb[0].mxu0
  %v1285 = vpop.f32.mrb[0].mxu0
  %v1286 = vadd.f32 0.0, %v1285
  %v1287 = vpop.f32.mrb[0].mxu0
  %1288 = vdwg.mxu0
  %1289 = vmatprep.subr.bf16.mxu0 0
  %1290 = vmatpush1.bf16.msra.mxu0 %v1000
  %1291 = vmatprep.subr.bf16.mxu0 0
  %1292 = vmatpush1.bf16.msra.mxu0 %v1001
  %1293 = vmatprep.subr.bf16.mxu0 0
  %1294 = vmatpush1.bf16.msra.mxu0 %v1002
  %1295 = vmatprep.subr.bf16.mxu0 0
  %1296 = vmatpush1.bf16.msra.mxu0 %v1003
  %1297 = vmatprep.subr.bf16.mxu0 0
  %1298 = vmatpush1.bf16.msra.mxu0 %v1004
  %1299 = vmatprep.subr.bf16.mxu0 0
  %1300 = vmatpush1.bf16.msra.mxu0 %v1005
  %1301 = vmatprep.subr.bf16.mxu0 0
  %1302 = vmatpush1.bf16.msra.mxu0 %v1006
  %1303 = vmatprep.subr.bf16.mxu0 0
  %1304 = vmatpush1.bf16.msra.mxu0 %v1007
  %1305 = vmatprep.subr.bf16.mxu0 0
  %1306 = vmatpush1.bf16.msra.mxu0 %v1008
  %1307 = vmatprep.subr.bf16.mxu0 0
  %1308 = vmatpush1.bf16.msra.mxu0 %v1009
  %1309 = vmatprep.subr.bf16.mxu0 0
  %1310 = vmatpush1.bf16.msra.mxu0 %v1010
  %1311 = vmatprep.subr.bf16.mxu0 0
  %1312 = vmatpush1.bf16.msra.mxu0 %v1011
  %1313 = vmatprep.subr.bf16.mxu0 0
  %1314 = vmatpush1.bf16.msra.mxu0 %v1012
  %1315 = vmatprep.subr.bf16.mxu0 0
  %1316 = vmatpush1.bf16.msra.mxu0 %v1013
  %1317 = vmatprep.subr.bf16.mxu0 0
  %1318 = vmatpush1.bf16.msra.mxu0 %v1014
  %1319 = vmatprep.subr.bf16.mxu0 0
  %1320 = vmatpush1.bf16.msra.mxu0 %v1015
  %1321 = vmatprep.mubr.bf16.mxu0 %v411
  %1322 = vmatmul.mubr.bf16.gmra.mrb[0].mxu0 %v410
  %v1323 = vpop.f32.mrb[0].mxu0
  %v1324 = vadd.f32 %v1275, %v1323
  %v1325 = vpop.f32.mrb[0].mxu0
  %v1326 = vpop.f32.mrb[0].mxu0
  %v1327 = vadd.f32 %v1278, %v1326
  %v1328 = vpop.f32.mrb[0].mxu0
  %1329 = vmatprep.mubr.bf16.mxu0 %v427
  %1330 = vmatmul.mubr.bf16.gmra.mrb[0].mxu0 %v426
  %v1331 = vpop.f32.mrb[0].mxu0
  %v1332 = vadd.f32 %v1283, %v1331
  %v1333 = vpop.f32.mrb[0].mxu0
  %v1334 = vpop.f32.mrb[0].mxu0
  %v1335 = vadd.f32 %v1286, %v1334
  %v1336 = vpop.f32.mrb[0].mxu0
  %1337 = vdwg.mxu0
  %1338 = vmatprep.subr.bf16.mxu0 0
  %1339 = vmatpush1.bf16.msra.mxu0 %v1016
  %1340 = vmatprep.subr.bf16.mxu0 0
  %1341 = vmatpush1.bf16.msra.mxu0 %v1017
  %1342 = vmatprep.subr.bf16.mxu0 0
  %1343 = vmatpush1.bf16.msra.mxu0 %v1018
  %1344 = vmatprep.subr.bf16.mxu0 0
  %1345 = vmatpush1.bf16.msra.mxu0 %v1019
  %1346 = vmatprep.subr.bf16.mxu0 0
  %1347 = vmatpush1.bf16.msra.mxu0 %v1020
  %1348 = vmatprep.subr.bf16.mxu0 0
  %1349 = vmatpush1.bf16.msra.mxu0 %v1021
  %1350 = vmatprep.subr.bf16.mxu0 0
  %1351 = vmatpush1.bf16.msra.mxu0 %v1022
  %1352 = vmatprep.subr.bf16.mxu0 0
  %1353 = vmatpush1.bf16.msra.mxu0 %v1023
  %1354 = vmatprep.subr.bf16.mxu0 0
  %1355 = vmatpush1.bf16.msra.mxu0 %v1024
  %1356 = vmatprep.subr.bf16.mxu0 0
  %1357 = vmatpush1.bf16.msra.mxu0 %v1025
  %1358 = vmatprep.subr.bf16.mxu0 0
  %1359 = vmatpush1.bf16.msra.mxu0 %v1026
  %1360 = vmatprep.subr.bf16.mxu0 0
  %1361 = vmatpush1.bf16.msra.mxu0 %v1027
  %1362 = vmatprep.subr.bf16.mxu0 0
  %1363 = vmatpush1.bf16.msra.mxu0 %v1028
  %1364 = vmatprep.subr.bf16.mxu0 0
  %1365 = vmatpush1.bf16.msra.mxu0 %v1029
  %1366 = vmatprep.subr.bf16.mxu0 0
  %1367 = vmatpush1.bf16.msra.mxu0 %v1030
  %1368 = vmatprep.subr.bf16.mxu0 0
  %1369 = vmatpush1.bf16.msra.mxu0 %v1031
  %1370 = vmatprep.mubr.bf16.mxu0 %v413
  %1371 = vmatmul.mubr.bf16.gmra.mrb[0].mxu0 %v412
  %v1372 = vpop.f32.mrb[0].mxu0
  %v1373 = vadd.f32 %v1324, %v1372
  %v1374 = vpop.f32.mrb[0].mxu0
  %v1375 = vpop.f32.mrb[0].mxu0
  %v1376 = vadd.f32 %v1327, %v1375
  %v1377 = vpop.f32.mrb[0].mxu0
  %1378 = vmatprep.mubr.bf16.mxu0 %v429
  %1379 = vmatmul.mubr.bf16.gmra.mrb[0].mxu0 %v428
  %v1380 = vpop.f32.mrb[0].mxu0
  %v1381 = vadd.f32 %v1332, %v1380
  %v1382 = vpop.f32.mrb[0].mxu0
  %v1383 = vpop.f32.mrb[0].mxu0
  %v1384 = vadd.f32 %v1335, %v1383
  %v1385 = vpop.f32.mrb[0].mxu0
  %1386 = vdwg.mxu0
  %1387 = vmatprep.subr.bf16.mxu0 0
  %1388 = vmatpush1.bf16.msra.mxu0 %v1032
  %1389 = vmatprep.subr.bf16.mxu0 0
  %1390 = vmatpush1.bf16.msra.mxu0 %v1033
  %1391 = vmatprep.subr.bf16.mxu0 0
  %1392 = vmatpush1.bf16.msra.mxu0 %v1034
  %1393 = vmatprep.subr.bf16.mxu0 0
  %1394 = vmatpush1.bf16.msra.mxu0 %v1035
  %1395 = vmatprep.subr.bf16.mxu0 0
  %1396 = vmatpush1.bf16.msra.mxu0 %v1036
  %1397 = vmatprep.subr.bf16.mxu0 0
  %1398 = vmatpush1.bf16.msra.mxu0 %v1037
  %1399 = vmatprep.subr.bf16.mxu0 0
  %1400 = vmatpush1.bf16.msra.mxu0 %v1038
  %1401 = vmatprep.subr.bf16.mxu0 0
  %1402 = vmatpush1.bf16.msra.mxu0 %v1039
  %1403 = vmatprep.subr.bf16.mxu0 0
  %1404 = vmatpush1.bf16.msra.mxu0 %v1040
  %1405 = vmatprep.subr.bf16.mxu0 0
  %1406 = vmatpush1.bf16.msra.mxu0 %v1041
  %1407 = vmatprep.subr.bf16.mxu0 0
  %1408 = vmatpush1.bf16.msra.mxu0 %v1042
  %1409 = vmatprep.subr.bf16.mxu0 0
  %1410 = vmatpush1.bf16.msra.mxu0 %v1043
  %1411 = vmatprep.subr.bf16.mxu0 0
  %1412 = vmatpush1.bf16.msra.mxu0 %v1044
  %1413 = vmatprep.subr.bf16.mxu0 0
  %1414 = vmatpush1.bf16.msra.mxu0 %v1045
  %1415 = vmatprep.subr.bf16.mxu0 0
  %1416 = vmatpush1.bf16.msra.mxu0 %v1046
  %1417 = vmatprep.subr.bf16.mxu0 0
  %1418 = vmatpush1.bf16.msra.mxu0 %v1047
  %1419 = vmatprep.mubr.bf16.mxu0 %v415
  %1420 = vmatmul.mubr.bf16.gmra.mrb[0].mxu0 %v414
  %v1421 = vpop.f32.mrb[0].mxu0
  %v1422 = vadd.f32 %v1373, %v1421
  %v1423 = vpop.f32.mrb[0].mxu0
  %v1424 = vpop.f32.mrb[0].mxu0
  %v1425 = vadd.f32 %v1376, %v1424
  %v1426 = vpop.f32.mrb[0].mxu0
  %1427 = vmatprep.mubr.bf16.mxu0 %v431
  %1428 = vmatmul.mubr.bf16.gmra.mrb[0].mxu0 %v430
  %v1429 = vpop.f32.mrb[0].mxu0
  %v1430 = vadd.f32 %v1381, %v1429
  %v1431 = vpop.f32.mrb[0].mxu0
  %v1432 = vpop.f32.mrb[0].mxu0
  %v1433 = vadd.f32 %v1384, %v1432
  %v1434 = vpop.f32.mrb[0].mxu0
  %1435 = vdwg.mxu0
  %1436 = vmatprep.subr.bf16.mxu0 0
  %1437 = vmatpush1.bf16.msra.mxu0 %v1048
  %1438 = vmatprep.subr.bf16.mxu0 0
  %1439 = vmatpush1.bf16.msra.mxu0 %v1049
  %1440 = vmatprep.subr.bf16.mxu0 0
  %1441 = vmatpush1.bf16.msra.mxu0 %v1050
  %1442 = vmatprep.subr.bf16.mxu0 0
  %1443 = vmatpush1.bf16.msra.mxu0 %v1051
  %1444 = vmatprep.subr.bf16.mxu0 0
  %1445 = vmatpush1.bf16.msra.mxu0 %v1052
  %1446 = vmatprep.subr.bf16.mxu0 0
  %1447 = vmatpush1.bf16.msra.mxu0 %v1053
  %1448 = vmatprep.subr.bf16.mxu0 0
  %1449 = vmatpush1.bf16.msra.mxu0 %v1054
  %1450 = vmatprep.subr.bf16.mxu0 0
  %1451 = vmatpush1.bf16.msra.mxu0 %v1055
  %1452 = vmatprep.subr.bf16.mxu0 0
  %1453 = vmatpush1.bf16.msra.mxu0 %v1056
  %1454 = vmatprep.subr.bf16.mxu0 0
  %1455 = vmatpush1.bf16.msra.mxu0 %v1057
  %1456 = vmatprep.subr.bf16.mxu0 0
  %1457 = vmatpush1.bf16.msra.mxu0 %v1058
  %1458 = vmatprep.subr.bf16.mxu0 0
  %1459 = vmatpush1.bf16.msra.mxu0 %v1059
  %1460 = vmatprep.subr.bf16.mxu0 0
  %1461 = vmatpush1.bf16.msra.mxu0 %v1060
  %1462 = vmatprep.subr.bf16.mxu0 0
  %1463 = vmatpush1.bf16.msra.mxu0 %v1061
  %1464 = vmatprep.subr.bf16.mxu0 0
  %1465 = vmatpush1.bf16.msra.mxu0 %v1062
  %1466 = vmatprep.subr.bf16.mxu0 0
  %1467 = vmatpush1.bf16.msra.mxu0 %v1063
  %1468 = vmatprep.mubr.bf16.mxu0 %v417
  %1469 = vmatmul.mubr.bf16.gmra.mrb[0].mxu0 %v416
  %v1470 = vpop.f32.mrb[0].mxu0
  %v1471 = vadd.f32 %v1422, %v1470
  %v1472 = vpop.f32.mrb[0].mxu0
  %v1473 = vpop.f32.mrb[0].mxu0
  %v1474 = vadd.f32 %v1425, %v1473
  %v1475 = vpop.f32.mrb[0].mxu0
  %1476 = vmatprep.mubr.bf16.mxu0 %v433
  %1477 = vmatmul.mubr.bf16.gmra.mrb[0].mxu0 %v432
  %v1478 = vpop.f32.mrb[0].mxu0
  %v1479 = vadd.f32 %v1430, %v1478
  %v1480 = vpop.f32.mrb[0].mxu0
  %v1481 = vpop.f32.mrb[0].mxu0
  %v1482 = vadd.f32 %v1433, %v1481
  %v1483 = vpop.f32.mrb[0].mxu0
  %1484 = vdwg.mxu0
  %1485 = vmatprep.subr.bf16.mxu0 0
  %1486 = vmatpush1.bf16.msra.mxu0 %v1064
  %1487 = vmatprep.subr.bf16.mxu0 0
  %1488 = vmatpush1.bf16.msra.mxu0 %v1065
  %1489 = vmatprep.subr.bf16.mxu0 0
  %1490 = vmatpush1.bf16.msra.mxu0 %v1066
  %1491 = vmatprep.subr.bf16.mxu0 0
  %1492 = vmatpush1.bf16.msra.mxu0 %v1067
  %1493 = vmatprep.subr.bf16.mxu0 0
  %1494 = vmatpush1.bf16.msra.mxu0 %v1068
  %1495 = vmatprep.subr.bf16.mxu0 0
  %1496 = vmatpush1.bf16.msra.mxu0 %v1069
  %1497 = vmatprep.subr.bf16.mxu0 0
  %1498 = vmatpush1.bf16.msra.mxu0 %v1070
  %1499 = vmatprep.subr.bf16.mxu0 0
  %1500 = vmatpush1.bf16.msra.mxu0 %v1071
  %1501 = vmatprep.subr.bf16.mxu0 0
  %1502 = vmatpush1.bf16.msra.mxu0 %v1072
  %1503 = vmatprep.subr.bf16.mxu0 0
  %1504 = vmatpush1.bf16.msra.mxu0 %v1073
  %1505 = vmatprep.subr.bf16.mxu0 0
  %1506 = vmatpush1.bf16.msra.mxu0 %v1074
  %1507 = vmatprep.subr.bf16.mxu0 0
  %1508 = vmatpush1.bf16.msra.mxu0 %v1075
  %1509 = vmatprep.subr.bf16.mxu0 0
  %1510 = vmatpush1.bf16.msra.mxu0 %v1076
  %1511 = vmatprep.subr.bf16.mxu0 0
  %1512 = vmatpush1.bf16.msra.mxu0 %v1077
  %1513 = vmatprep.subr.bf16.mxu0 0
  %1514 = vmatpush1.bf16.msra.mxu0 %v1078
  %1515 = vmatprep.subr.bf16.mxu0 0
  %1516 = vmatpush1.bf16.msra.mxu0 %v1079
  %1517 = vmatprep.mubr.bf16.mxu0 %v419
  %1518 = vmatmul.mubr.bf16.gmra.mrb[0].mxu0 %v418
  %v1519 = vpop.f32.mrb[0].mxu0
  %v1520 = vadd.f32 %v1471, %v1519
  %v1521 = vpop.f32.mrb[0].mxu0
  %v1522 = vpop.f32.mrb[0].mxu0
  %v1523 = vadd.f32 %v1474, %v1522
  %v1524 = vpop.f32.mrb[0].mxu0
  %1525 = vmatprep.mubr.bf16.mxu0 %v435
  %1526 = vmatmul.mubr.bf16.gmra.mrb[0].mxu0 %v434
  %v1527 = vpop.f32.mrb[0].mxu0
  %v1528 = vadd.f32 %v1479, %v1527
  %v1529 = vpop.f32.mrb[0].mxu0
  %v1530 = vpop.f32.mrb[0].mxu0
  %v1531 = vadd.f32 %v1482, %v1530
  %v1532 = vpop.f32.mrb[0].mxu0
  %1533 = vdwg.mxu0
  %1534 = vmatprep.subr.bf16.mxu0 0
  %1535 = vmatpush1.bf16.msra.mxu0 %v1080
  %1536 = vmatprep.subr.bf16.mxu0 0
  %1537 = vmatpush1.bf16.msra.mxu0 %v1081
  %1538 = vmatprep.subr.bf16.mxu0 0
  %1539 = vmatpush1.bf16.msra.mxu0 %v1082
  %1540 = vmatprep.subr.bf16.mxu0 0
  %1541 = vmatpush1.bf16.msra.mxu0 %v1083
  %1542 = vmatprep.subr.bf16.mxu0 0
  %1543 = vmatpush1.bf16.msra.mxu0 %v1084
  %1544 = vmatprep.subr.bf16.mxu0 0
  %1545 = vmatpush1.bf16.msra.mxu0 %v1085
  %1546 = vmatprep.subr.bf16.mxu0 0
  %1547 = vmatpush1.bf16.msra.mxu0 %v1086
  %1548 = vmatprep.subr.bf16.mxu0 0
  %1549 = vmatpush1.bf16.msra.mxu0 %v1087
  %1550 = vmatprep.subr.bf16.mxu0 0
  %1551 = vmatpush1.bf16.msra.mxu0 %v1088
  %1552 = vmatprep.subr.bf16.mxu0 0
  %1553 = vmatpush1.bf16.msra.mxu0 %v1089
  %1554 = vmatprep.subr.bf16.mxu0 0
  %1555 = vmatpush1.bf16.msra.mxu0 %v1090
  %1556 = vmatprep.subr.bf16.mxu0 0
  %1557 = vmatpush1.bf16.msra.mxu0 %v1091
  %1558 = vmatprep.subr.bf16.mxu0 0
  %1559 = vmatpush1.bf16.msra.mxu0 %v1092
  %1560 = vmatprep.subr.bf16.mxu0 0
  %1561 = vmatpush1.bf16.msra.mxu0 %v1093
  %1562 = vmatprep.subr.bf16.mxu0 0
  %1563 = vmatpush1.bf16.msra.mxu0 %v1094
  %1564 = vmatprep.subr.bf16.mxu0 0
  %1565 = vmatpush1.bf16.msra.mxu0 %v1095
  %1566 = vmatprep.mubr.bf16.mxu0 %v421
  %1567 = vmatmul.mubr.bf16.gmra.mrb[0].mxu0 %v420
  %v1568 = vpop.f32.mrb[0].mxu0
  %v1569 = vadd.f32 %v1520, %v1568
  %v1570 = vpop.f32.mrb[0].mxu0
  %v1571 = vpop.f32.mrb[0].mxu0
  %v1572 = vadd.f32 %v1523, %v1571
  %v1573 = vpop.f32.mrb[0].mxu0
  %1574 = vmatprep.mubr.bf16.mxu0 %v437
  %1575 = vmatmul.mubr.bf16.gmra.mrb[0].mxu0 %v436
  %v1576 = vpop.f32.mrb[0].mxu0
  %v1577 = vadd.f32 %v1528, %v1576
  %v1578 = vpop.f32.mrb[0].mxu0
  %v1579 = vpop.f32.mrb[0].mxu0
  %v1580 = vadd.f32 %v1531, %v1579
  %v1581 = vpop.f32.mrb[0].mxu0
  %1582 = vdwg.mxu0
  %1583 = vmatprep.subr.bf16.mxu0 0
  %1584 = vmatpush1.bf16.msra.mxu0 %v1096
  %1585 = vmatprep.subr.bf16.mxu0 0
  %1586 = vmatpush1.bf16.msra.mxu0 %v1097
  %1587 = vmatprep.subr.bf16.mxu0 0
  %1588 = vmatpush1.bf16.msra.mxu0 %v1098
  %1589 = vmatprep.subr.bf16.mxu0 0
  %1590 = vmatpush1.bf16.msra.mxu0 %v1099
  %1591 = vmatprep.subr.bf16.mxu0 0
  %1592 = vmatpush1.bf16.msra.mxu0 %v1100
  %1593 = vmatprep.subr.bf16.mxu0 0
  %1594 = vmatpush1.bf16.msra.mxu0 %v1101
  %1595 = vmatprep.subr.bf16.mxu0 0
  %1596 = vmatpush1.bf16.msra.mxu0 %v1102
  %1597 = vmatprep.subr.bf16.mxu0 0
  %1598 = vmatpush1.bf16.msra.mxu0 %v1103
  %1599 = vmatprep.subr.bf16.mxu0 0
  %1600 = vmatpush1.bf16.msra.mxu0 %v1104
  %1601 = vmatprep.subr.bf16.mxu0 0
  %1602 = vmatpush1.bf16.msra.mxu0 %v1105
  %1603 = vmatprep.subr.bf16.mxu0 0
  %1604 = vmatpush1.bf16.msra.mxu0 %v1106
  %1605 = vmatprep.subr.bf16.mxu0 0
  %1606 = vmatpush1.bf16.msra.mxu0 %v1107
  %1607 = vmatprep.subr.bf16.mxu0 0
  %1608 = vmatpush1.bf16.msra.mxu0 %v1108
  %1609 = vmatprep.subr.bf16.mxu0 0
  %1610 = vmatpush1.bf16.msra.mxu0 %v1109
  %1611 = vmatprep.subr.bf16.mxu0 0
  %1612 = vmatpush1.bf16.msra.mxu0 %v1110
  %1613 = vmatprep.subr.bf16.mxu0 0
  %1614 = vmatpush1.bf16.msra.mxu0 %v1111
  %1615 = vmatprep.mubr.bf16.mxu0 %v423
  %1616 = vmatmul.mubr.bf16.gmra.mrb[0].mxu0 %v422
  %v1617 = vpop.f32.mrb[0].mxu0
  %v1618 = vadd.f32 %v1569, %v1617
  %v1619 = vpop.f32.mrb[0].mxu0
  %v1620 = vpop.f32.mrb[0].mxu0
  %v1621 = vadd.f32 %v1572, %v1620
  %v1622 = vpop.f32.mrb[0].mxu0
  %1623 = vmatprep.mubr.bf16.mxu0 %v439
  %1624 = vmatmul.mubr.bf16.gmra.mrb[0].mxu0 %v438
  %v1625 = vpop.f32.mrb[0].mxu0
  %v1626 = vadd.f32 %v1577, %v1625
  %v1627 = vpop.f32.mrb[0].mxu0
  %v1628 = vpop.f32.mrb[0].mxu0
  %v1629 = vadd.f32 %v1580, %v1628
  %v1630 = vpop.f32.mrb[0].mxu0
  %1631 = vdwg.mxu0
  %s1632 = smul.u32 0, 32
  %s1633 = scalar_lea.vmem [#allocation2], %s1632
  %1634 = vst [vmem:[%s1633] sm:$0xff] %v1618
  %1635 = vst [vmem:[%s1633 + $0x8] sm:$0xff] %v1621
  %1636 = vst [vmem:[%s1633 + $0x10] sm:$0xff] %v1626
  %1637 = vst [vmem:[%s1633 + $0x18] sm:$0xff] %v1629
  %v1638 = vld [vmem:[#allocation3] sm:$0x1]
  %v1639 = vadd.f32 %v1618, %v1621
  %v1640 = vadd.f32 %v1639, %v1626
  %v1641 = vadd.f32 %v1640, %v1629
  %v1642 = vrot.slane %v1641, 4
  %v1643 = vadd.f32 %v1641, %v1642
  %v1644 = vrot.slane %v1643, 2
  %v1645 = vadd.f32 %v1643, %v1644
  %v1646 = vrot.slane %v1645, 1
  %v1647 = vadd.f32 %v1645, %v1646
  %v1648 = vadd.f32 %v1638, %v1647
  %1649 = vst [vmem:[#allocation3] sm:$0x1] %v1648
  %v1650 = vld [vmem:[#allocation4] sm:$0x1]
  %v1651 = vmul.f32 %v1618, %v1618
  %v1652 = vmul.f32 %v1621, %v1621
  %v1653 = vmul.f32 %v1626, %v1626
  %v1654 = vmul.f32 %v1629, %v1629
  %v1655 = vadd.f32 %v1651, %v1652
  %v1656 = vadd.f32 %v1655, %v1653
  %v1657 = vadd.f32 %v1656, %v1654
  %v1658 = vrot.slane %v1657, 4
  %v1659 = vadd.f32 %v1657, %v1658
  %v1660 = vrot.slane %v1659, 2
  %v1661 = vadd.f32 %v1659, %v1660
  %v1662 = vrot.slane %v1661, 1
  %v1663 = vadd.f32 %v1661, %v1662
  %v1664 = vadd.f32 %v1650, %v1663
  %1665 = vst [vmem:[#allocation4] sm:$0x1] %v1664
  // Predicated region
  $region22: #{discriminator_forward.6} parent=0 // pred_check
    %p1666 = pneg %p18
  $region23: #{discriminator_forward.6} parent=0 // pred_check_branch
    %1668 = sbr.rel (%p1666) target = $region25
  $region24: #{discriminator_forward.6} parent=0 // pred_region
    %v1669 = vld [vmem:[#allocation3] sm:$0x1]
    %v1670 = vmul.f32 %v1669, 0.03125
    %v1671 = vld [vmem:[#allocation4] sm:$0x1]
    %v1672 = vmul.f32 %v1671, 0.03125
    %v1673 = vmul.f32 %v1670, %v1670
    %v1674 = vsub.f32 %v1672, %v1673
    %v1675 = vld [vmem:[%s2] sm:$0x1]
    %v1676 = vadd.f32 %v1674, 1e-05
    %v1677 = vrsqrt.pop %v1676
    %v1678 = vmul.f32 %v1675, %v1677
    %v1679 = vld [vmem:[%s3] sm:$0x1]
    %v1680 = vmul.f32 %v1670, %v1678
    %v1681 = vsub.f32 %v1679, %v1680
    %v1682 = vld [vmem:[#allocation2] sm:$0xff]
    %v1683 = vld [vmem:[#allocation2 + $0x8] sm:$0xff]
    %v1684 = vld [vmem:[#allocation2 + $0x10] sm:$0xff]
    %v1685 = vld [vmem:[#allocation2 + $0x18] sm:$0xff]
    %v1687 = vlaneseq
    %v1688 = vshrl.u32 %v1687, 7
    %v1689 = vsub.s32 0, %v1688
    %v1690 = vrot.slane %v1678, %v1689
    %v1692 = vmul.f32 %v1682, %v1690
    %v1693 = vmul.f32 %v1683, %v1690
    %v1694 = vmul.f32 %v1684, %v1690
    %v1695 = vmul.f32 %v1685, %v1690
    %v1697 = vlaneseq
    %v1698 = vshrl.u32 %v1697, 7
    %v1699 = vsub.s32 0, %v1698
    %v1700 = vrot.slane %v1681, %v1699
    %v1702 = vadd.f32 %v1692, %v1700
    %v1703 = vadd.f32 %v1693, %v1700
    %v1704 = vadd.f32 %v1694, %v1700
    %v1705 = vadd.f32 %v1695, %v1700
    %vm1706 = vcmp.gt.f32.partialorder %v1702, 0.0
    %vm1707 = vcmp.gt.f32.partialorder %v1703, 0.0
    %vm1708 = vcmp.gt.f32.partialorder %v1704, 0.0
    %vm1709 = vcmp.gt.f32.partialorder %v1705, 0.0
    %v1710 = vmul.f32 %v1702, 0.2
    %v1711 = vmul.f32 %v1703, 0.2
    %v1712 = vmul.f32 %v1704, 0.2
    %v1713 = vmul.f32 %v1705, 0.2
    %v1714 = vsel %vm1706, %v1702, %v1710
    %v1715 = vsel %vm1707, %v1703, %v1711
    %v1716 = vsel %vm1708, %v1704, %v1712
    %v1717 = vsel %vm1709, %v1705, %v1713
    %v1718 = vpack.c.bf16 %v1715, %v1714
    %v1719 = vpack.c.bf16 %v1717, %v1716
    %v1722 = vunpack.c.l.b16 %v1718
    %v1723 = vunpack.c.h.b16 %v1718
    %v1724 = vunpack.c.l.b16 %v1719
    %v1725 = vunpack.c.h.b16 %v1719
    %v1726 = vpack.c.b16 %v1722, %v1722
    %v1727 = vpack.c.b16 %v1723, %v1723
    %v1728 = vpack.c.b16 %v1724, %v1724
    %v1729 = vpack.c.b16 %v1725, %v1725
    %1734 = vst [vmem:[%s4] sm:$0xf] %v1726
    %1735 = vst [vmem:[%s4 + $0x4] sm:$0xf] %v1727
    %1736 = vst [vmem:[%s4 + $0x8] sm:$0xf] %v1728
    %1737 = vst [vmem:[%s4 + $0xc] sm:$0xf] %v1729
  $region25: #{discriminator_forward.6} parent=0 // pred_fallthru
    _
  // Predicated region
  $region26: #{discriminator_forward.6} parent=0 // pred_check
    _
  $region27: #{discriminator_forward.6} parent=0 // pred_check_branch
    %1739 = sbr.rel (0) target = $region29
  $region28: #{discriminator_forward.6} parent=0 // pred_region
    _
  $region29: #{discriminator_forward.6} parent=0 // pred_fallthru
    _
  // Predicated region
  $region30: #{discriminator_forward.6} parent=0 // pred_check
    _
  $region31: #{discriminator_forward.6} parent=0 // pred_check_branch
    %1741 = sbr.rel (0) target = $region33
  $region32: #{discriminator_forward.6} parent=0 // pred_region
    _
  $region33: #{discriminator_forward.6} parent=0 // pred_fallthru
    _

// kernel: discriminator_forward.7
$region0: #{discriminator_forward.7}
  #allocation0 [shape = 'u32[]', space=smem, size = 0x4, offset = 0x4, fixed_abs, tag = 'smem constant byte address 0x4 - core index']
  #allocation1 [shape = 'u32[144,128]{1,0:T(1,128)}', space=vmem, size = 0x12000, scoped, tag = 'internal scratch']
  %s0 = inlined_call_operand.vmem [shape: bf16[8,2048], index: 0, kind: input, shape index: {}]
  %s1 = inlined_call_operand.vmem [shape: bf16[2048,128], index: 1, kind: input, shape index: {}]
  %s2 = inlined_call_operand.vmem [shape: f32[8,128], index: 2, kind: output, shape index: {}]
  %s3 = sld [smem:[#allocation0]]
  $region18: #{discriminator_forward.7} parent=0
    _
  %s5 = ssub.s32 1, %s3
  %s6 = scalar_select 0, %s5, %s3
  // Predicated region
  $region2: #{discriminator_forward.7} parent=0 // pred_check
    _
  $region3: #{discriminator_forward.7} parent=0 // pred_check_branch
    %8 = sbr.rel (0) target = $region5
  $region4: #{discriminator_forward.7} parent=0 // pred_region
    _
  $region5: #{discriminator_forward.7} parent=0 // pred_fallthru
    _
  // Predicated region
  $region6: #{discriminator_forward.7} parent=0 // pred_check
    _
  $region7: #{discriminator_forward.7} parent=0 // pred_check_branch
    %10 = sbr.rel (0) target = $region9
  $region8: #{discriminator_forward.7} parent=0 // pred_region
    _
  $region9: #{discriminator_forward.7} parent=0 // pred_fallthru
    _
  %v12 = vld [vmem:[%s0] sm:$0xff]
  %v13 = vld [vmem:[%s0 + $0x8] sm:$0xff]
  %v14 = vld [vmem:[%s0 + $0x10] sm:$0xff]
  %v15 = vld [vmem:[%s0 + $0x18] sm:$0xff]
  %v16 = vld [vmem:[%s0 + $0x20] sm:$0xff]
  %v17 = vld [vmem:[%s0 + $0x28] sm:$0xff]
  %v18 = vld [vmem:[%s0 + $0x30] sm:$0xff]
  %v19 = vld [vmem:[%s0 + $0x38] sm:$0xff]
  %v20 = vld [vmem:[%s1] sm:$0xf]
  %v21 = vld [vmem:[%s1 + $0x4] sm:$0xf]
  %v22 = vld [vmem:[%s1 + $0x8] sm:$0xf]
  %v23 = vld [vmem:[%s1 + $0xc] sm:$0xf]
  %v24 = vld [vmem:[%s1 + $0x10] sm:$0xf]
  %v25 = vld [vmem:[%s1 + $0x14] sm:$0xf]
  %v26 = vld [vmem:[%s1 + $0x18] sm:$0xf]
  %v27 = vld [vmem:[%s1 + $0x1c] sm:$0xf]
  %v28 = vld [vmem:[%s1 + $0x20] sm:$0xf]
  %v29 = vld [vmem:[%s1 + $0x24] sm:$0xf]
  %v30 = vld [vmem:[%s1 + $0x28] sm:$0xf]
  %v31 = vld [vmem:[%s1 + $0x2c] sm:$0xf]
  %v32 = vld [vmem:[%s1 + $0x30] sm:$0xf]
  %v33 = vld [vmem:[%s1 + $0x34] sm:$0xf]
  %v34 = vld [vmem:[%s1 + $0x38] sm:$0xf]
  %v35 = vld [vmem:[%s1 + $0x3c] sm:$0xf]
  %v36 = vld [vmem:[%s1 + $0x40] sm:$0xf]
  %v37 = vld [vmem:[%s1 + $0x44] sm:$0xf]
  %v38 = vld [vmem:[%s1 + $0x48] sm:$0xf]
  %v39 = vld [vmem:[%s1 + $0x4c] sm:$0xf]
  %v40 = vld [vmem:[%s1 + $0x50] sm:$0xf]
  %v41 = vld [vmem:[%s1 + $0x54] sm:$0xf]
  %v42 = vld [vmem:[%s1 + $0x58] sm:$0xf]
  %v43 = vld [vmem:[%s1 + $0x5c] sm:$0xf]
  %v44 = vld [vmem:[%s1 + $0x60] sm:$0xf]
  %v45 = vld [vmem:[%s1 + $0x64] sm:$0xf]
  %v46 = vld [vmem:[%s1 + $0x68] sm:$0xf]
  %v47 = vld [vmem:[%s1 + $0x6c] sm:$0xf]
  %v48 = vld [vmem:[%s1 + $0x70] sm:$0xf]
  %v49 = vld [vmem:[%s1 + $0x74] sm:$0xf]
  %v50 = vld [vmem:[%s1 + $0x78] sm:$0xf]
  %v51 = vld [vmem:[%s1 + $0x7c] sm:$0xf]
  %v52 = vld [vmem:[%s1 + $0x80] sm:$0xf]
  %v53 = vld [vmem:[%s1 + $0x84] sm:$0xf]
  %v54 = vld [vmem:[%s1 + $0x88] sm:$0xf]
  %v55 = vld [vmem:[%s1 + $0x8c] sm:$0xf]
  %v56 = vld [vmem:[%s1 + $0x90] sm:$0xf]
  %v57 = vld [vmem:[%s1 + $0x94] sm:$0xf]
  %v58 = vld [vmem:[%s1 + $0x98] sm:$0xf]
  %v59 = vld [vmem:[%s1 + $0x9c] sm:$0xf]
  %v60 = vld [vmem:[%s1 + $0xa0] sm:$0xf]
  %v61 = vld [vmem:[%s1 + $0xa4] sm:$0xf]
  %v62 = vld [vmem:[%s1 + $0xa8] sm:$0xf]
  %v63 = vld [vmem:[%s1 + $0xac] sm:$0xf]
  %v64 = vld [vmem:[%s1 + $0xb0] sm:$0xf]
  %v65 = vld [vmem:[%s1 + $0xb4] sm:$0xf]
  %v66 = vld [vmem:[%s1 + $0xb8] sm:$0xf]
  %v67 = vld [vmem:[%s1 + $0xbc] sm:$0xf]
  %v68 = vld [vmem:[%s1 + $0xc0] sm:$0xf]
  %v69 = vld [vmem:[%s1 + $0xc4] sm:$0xf]
  %v70 = vld [vmem:[%s1 + $0xc8] sm:$0xf]
  %v71 = vld [vmem:[%s1 + $0xcc] sm:$0xf]
  %v72 = vld [vmem:[%s1 + $0xd0] sm:$0xf]
  %v73 = vld [vmem:[%s1 + $0xd4] sm:$0xf]
  %v74 = vld [vmem:[%s1 + $0xd8] sm:$0xf]
  %v75 = vld [vmem:[%s1 + $0xdc] sm:$0xf]
  %v76 = vld [vmem:[%s1 + $0xe0] sm:$0xf]
  %v77 = vld [vmem:[%s1 + $0xe4] sm:$0xf]
  %v78 = vld [vmem:[%s1 + $0xe8] sm:$0xf]
  %v79 = vld [vmem:[%s1 + $0xec] sm:$0xf]
  %v80 = vld [vmem:[%s1 + $0xf0] sm:$0xf]
  %v81 = vld [vmem:[%s1 + $0xf4] sm:$0xf]
  %v82 = vld [vmem:[%s1 + $0xf8] sm:$0xf]
  %v83 = vld [vmem:[%s1 + $0xfc] sm:$0xf]
  %v84 = vld [vmem:[%s1 + $0x100] sm:$0xf]
  %v85 = vld [vmem:[%s1 + $0x104] sm:$0xf]
  %v86 = vld [vmem:[%s1 + $0x108] sm:$0xf]
  %v87 = vld [vmem:[%s1 + $0x10c] sm:$0xf]
  %v88 = vld [vmem:[%s1 + $0x110] sm:$0xf]
  %v89 = vld [vmem:[%s1 + $0x114] sm:$0xf]
  %v90 = vld [vmem:[%s1 + $0x118] sm:$0xf]
  %v91 = vld [vmem:[%s1 + $0x11c] sm:$0xf]
  %v92 = vld [vmem:[%s1 + $0x120] sm:$0xf]
  %v93 = vld [vmem:[%s1 + $0x124] sm:$0xf]
  %v94 = vld [vmem:[%s1 + $0x128] sm:$0xf]
  %v95 = vld [vmem:[%s1 + $0x12c] sm:$0xf]
  %v96 = vld [vmem:[%s1 + $0x130] sm:$0xf]
  %v97 = vld [vmem:[%s1 + $0x134] sm:$0xf]
  %v98 = vld [vmem:[%s1 + $0x138] sm:$0xf]
  %v99 = vld [vmem:[%s1 + $0x13c] sm:$0xf]
  %v100 = vld [vmem:[%s1 + $0x140] sm:$0xf]
  %v101 = vld [vmem:[%s1 + $0x144] sm:$0xf]
  %v102 = vld [vmem:[%s1 + $0x148] sm:$0xf]
  %v103 = vld [vmem:[%s1 + $0x14c] sm:$0xf]
  %v104 = vld [vmem:[%s1 + $0x150] sm:$0xf]
  %v105 = vld [vmem:[%s1 + $0x154] sm:$0xf]
  %v106 = vld [vmem:[%s1 + $0x158] sm:$0xf]
  %v107 = vld [vmem:[%s1 + $0x15c] sm:$0xf]
  %v108 = vld [vmem:[%s1 + $0x160] sm:$0xf]
  %v109 = vld [vmem:[%s1 + $0x164] sm:$0xf]
  %v110 = vld [vmem:[%s1 + $0x168] sm:$0xf]
  %v111 = vld [vmem:[%s1 + $0x16c] sm:$0xf]
  %v112 = vld [vmem:[%s1 + $0x170] sm:$0xf]
  %v113 = vld [vmem:[%s1 + $0x174] sm:$0xf]
  %v114 = vld [vmem:[%s1 + $0x178] sm:$0xf]
  %v115 = vld [vmem:[%s1 + $0x17c] sm:$0xf]
  %v116 = vld [vmem:[%s1 + $0x180] sm:$0xf]
  %v117 = vld [vmem:[%s1 + $0x184] sm:$0xf]
  %v118 = vld [vmem:[%s1 + $0x188] sm:$0xf]
  %v119 = vld [vmem:[%s1 + $0x18c] sm:$0xf]
  %v120 = vld [vmem:[%s1 + $0x190] sm:$0xf]
  %v121 = vld [vmem:[%s1 + $0x194] sm:$0xf]
  %v122 = vld [vmem:[%s1 + $0x198] sm:$0xf]
  %v123 = vld [vmem:[%s1 + $0x19c] sm:$0xf]
  %v124 = vld [vmem:[%s1 + $0x1a0] sm:$0xf]
  %v125 = vld [vmem:[%s1 + $0x1a4] sm:$0xf]
  %v126 = vld [vmem:[%s1 + $0x1a8] sm:$0xf]
  %v127 = vld [vmem:[%s1 + $0x1ac] sm:$0xf]
  %v128 = vld [vmem:[%s1 + $0x1b0] sm:$0xf]
  %v129 = vld [vmem:[%s1 + $0x1b4] sm:$0xf]
  %v130 = vld [vmem:[%s1 + $0x1b8] sm:$0xf]
  %v131 = vld [vmem:[%s1 + $0x1bc] sm:$0xf]
  %v132 = vld [vmem:[%s1 + $0x1c0] sm:$0xf]
  %v133 = vld [vmem:[%s1 + $0x1c4] sm:$0xf]
  %v134 = vld [vmem:[%s1 + $0x1c8] sm:$0xf]
  %v135 = vld [vmem:[%s1 + $0x1cc] sm:$0xf]
  %v136 = vld [vmem:[%s1 + $0x1d0] sm:$0xf]
  %v137 = vld [vmem:[%s1 + $0x1d4] sm:$0xf]
  %v138 = vld [vmem:[%s1 + $0x1d8] sm:$0xf]
  %v139 = vld [vmem:[%s1 + $0x1dc] sm:$0xf]
  %v140 = vld [vmem:[%s1 + $0x1e0] sm:$0xf]
  %v141 = vld [vmem:[%s1 + $0x1e4] sm:$0xf]
  %v142 = vld [vmem:[%s1 + $0x1e8] sm:$0xf]
  %v143 = vld [vmem:[%s1 + $0x1ec] sm:$0xf]
  %v144 = vld [vmem:[%s1 + $0x1f0] sm:$0xf]
  %v145 = vld [vmem:[%s1 + $0x1f4] sm:$0xf]
  %v146 = vld [vmem:[%s1 + $0x1f8] sm:$0xf]
  %v147 = vld [vmem:[%s1 + $0x1fc] sm:$0xf]
  %v148 = vld [vmem:[%s1 + $0x200] sm:$0xf]
  %v149 = vld [vmem:[%s1 + $0x204] sm:$0xf]
  %v150 = vld [vmem:[%s1 + $0x208] sm:$0xf]
  %v151 = vld [vmem:[%s1 + $0x20c] sm:$0xf]
  %v152 = vld [vmem:[%s1 + $0x210] sm:$0xf]
  %v153 = vld [vmem:[%s1 + $0x214] sm:$0xf]
  %v154 = vld [vmem:[%s1 + $0x218] sm:$0xf]
  %v155 = vld [vmem:[%s1 + $0x21c] sm:$0xf]
  %v156 = vld [vmem:[%s1 + $0x220] sm:$0xf]
  %v157 = vld [vmem:[%s1 + $0x224] sm:$0xf]
  %v158 = vld [vmem:[%s1 + $0x228] sm:$0xf]
  %v159 = vld [vmem:[%s1 + $0x22c] sm:$0xf]
  %v160 = vld [vmem:[%s1 + $0x230] sm:$0xf]
  %v161 = vld [vmem:[%s1 + $0x234] sm:$0xf]
  %v162 = vld [vmem:[%s1 + $0x238] sm:$0xf]
  %v163 = vld [vmem:[%s1 + $0x23c] sm:$0xf]
  %v164 = vld [vmem:[%s1 + $0x240] sm:$0xf]
  %v165 = vld [vmem:[%s1 + $0x244] sm:$0xf]
  %v166 = vld [vmem:[%s1 + $0x248] sm:$0xf]
  %v167 = vld [vmem:[%s1 + $0x24c] sm:$0xf]
  %v168 = vld [vmem:[%s1 + $0x250] sm:$0xf]
  %v169 = vld [vmem:[%s1 + $0x254] sm:$0xf]
  %v170 = vld [vmem:[%s1 + $0x258] sm:$0xf]
  %v171 = vld [vmem:[%s1 + $0x25c] sm:$0xf]
  %v172 = vld [vmem:[%s1 + $0x260] sm:$0xf]
  %v173 = vld [vmem:[%s1 + $0x264] sm:$0xf]
  %v174 = vld [vmem:[%s1 + $0x268] sm:$0xf]
  %v175 = vld [vmem:[%s1 + $0x26c] sm:$0xf]
  %v176 = vld [vmem:[%s1 + $0x270] sm:$0xf]
  %v177 = vld [vmem:[%s1 + $0x274] sm:$0xf]
  %v178 = vld [vmem:[%s1 + $0x278] sm:$0xf]
  %v179 = vld [vmem:[%s1 + $0x27c] sm:$0xf]
  %v180 = vld [vmem:[%s1 + $0x280] sm:$0xf]
  %v181 = vld [vmem:[%s1 + $0x284] sm:$0xf]
  %v182 = vld [vmem:[%s1 + $0x288] sm:$0xf]
  %v183 = vld [vmem:[%s1 + $0x28c] sm:$0xf]
  %v184 = vld [vmem:[%s1 + $0x290] sm:$0xf]
  %v185 = vld [vmem:[%s1 + $0x294] sm:$0xf]
  %v186 = vld [vmem:[%s1 + $0x298] sm:$0xf]
  %v187 = vld [vmem:[%s1 + $0x29c] sm:$0xf]
  %v188 = vld [vmem:[%s1 + $0x2a0] sm:$0xf]
  %v189 = vld [vmem:[%s1 + $0x2a4] sm:$0xf]
  %v190 = vld [vmem:[%s1 + $0x2a8] sm:$0xf]
  %v191 = vld [vmem:[%s1 + $0x2ac] sm:$0xf]
  %v192 = vld [vmem:[%s1 + $0x2b0] sm:$0xf]
  %v193 = vld [vmem:[%s1 + $0x2b4] sm:$0xf]
  %v194 = vld [vmem:[%s1 + $0x2b8] sm:$0xf]
  %v195 = vld [vmem:[%s1 + $0x2bc] sm:$0xf]
  %v196 = vld [vmem:[%s1 + $0x2c0] sm:$0xf]
  %v197 = vld [vmem:[%s1 + $0x2c4] sm:$0xf]
  %v198 = vld [vmem:[%s1 + $0x2c8] sm:$0xf]
  %v199 = vld [vmem:[%s1 + $0x2cc] sm:$0xf]
  %v200 = vld [vmem:[%s1 + $0x2d0] sm:$0xf]
  %v201 = vld [vmem:[%s1 + $0x2d4] sm:$0xf]
  %v202 = vld [vmem:[%s1 + $0x2d8] sm:$0xf]
  %v203 = vld [vmem:[%s1 + $0x2dc] sm:$0xf]
  %v204 = vld [vmem:[%s1 + $0x2e0] sm:$0xf]
  %v205 = vld [vmem:[%s1 + $0x2e4] sm:$0xf]
  %v206 = vld [vmem:[%s1 + $0x2e8] sm:$0xf]
  %v207 = vld [vmem:[%s1 + $0x2ec] sm:$0xf]
  %v208 = vld [vmem:[%s1 + $0x2f0] sm:$0xf]
  %v209 = vld [vmem:[%s1 + $0x2f4] sm:$0xf]
  %v210 = vld [vmem:[%s1 + $0x2f8] sm:$0xf]
  %v211 = vld [vmem:[%s1 + $0x2fc] sm:$0xf]
  %v212 = vld [vmem:[%s1 + $0x300] sm:$0xf]
  %v213 = vld [vmem:[%s1 + $0x304] sm:$0xf]
  %v214 = vld [vmem:[%s1 + $0x308] sm:$0xf]
  %v215 = vld [vmem:[%s1 + $0x30c] sm:$0xf]
  %v216 = vld [vmem:[%s1 + $0x310] sm:$0xf]
  %v217 = vld [vmem:[%s1 + $0x314] sm:$0xf]
  %v218 = vld [vmem:[%s1 + $0x318] sm:$0xf]
  %v219 = vld [vmem:[%s1 + $0x31c] sm:$0xf]
  %v220 = vld [vmem:[%s1 + $0x320] sm:$0xf]
  %v221 = vld [vmem:[%s1 + $0x324] sm:$0xf]
  %v222 = vld [vmem:[%s1 + $0x328] sm:$0xf]
  %v223 = vld [vmem:[%s1 + $0x32c] sm:$0xf]
  %v224 = vld [vmem:[%s1 + $0x330] sm:$0xf]
  %v225 = vld [vmem:[%s1 + $0x334] sm:$0xf]
  %v226 = vld [vmem:[%s1 + $0x338] sm:$0xf]
  %v227 = vld [vmem:[%s1 + $0x33c] sm:$0xf]
  %v228 = vld [vmem:[%s1 + $0x340] sm:$0xf]
  %v229 = vld [vmem:[%s1 + $0x344] sm:$0xf]
  %v230 = vld [vmem:[%s1 + $0x348] sm:$0xf]
  %v231 = vld [vmem:[%s1 + $0x34c] sm:$0xf]
  %v232 = vld [vmem:[%s1 + $0x350] sm:$0xf]
  %v233 = vld [vmem:[%s1 + $0x354] sm:$0xf]
  %v234 = vld [vmem:[%s1 + $0x358] sm:$0xf]
  %v235 = vld [vmem:[%s1 + $0x35c] sm:$0xf]
  %v236 = vld [vmem:[%s1 + $0x360] sm:$0xf]
  %v237 = vld [vmem:[%s1 + $0x364] sm:$0xf]
  %v238 = vld [vmem:[%s1 + $0x368] sm:$0xf]
  %v239 = vld [vmem:[%s1 + $0x36c] sm:$0xf]
  %v240 = vld [vmem:[%s1 + $0x370] sm:$0xf]
  %v241 = vld [vmem:[%s1 + $0x374] sm:$0xf]
  %v242 = vld [vmem:[%s1 + $0x378] sm:$0xf]
  %v243 = vld [vmem:[%s1 + $0x37c] sm:$0xf]
  %v244 = vld [vmem:[%s1 + $0x380] sm:$0xf]
  %v245 = vld [vmem:[%s1 + $0x384] sm:$0xf]
  %v246 = vld [vmem:[%s1 + $0x388] sm:$0xf]
  %v247 = vld [vmem:[%s1 + $0x38c] sm:$0xf]
  %v248 = vld [vmem:[%s1 + $0x390] sm:$0xf]
  %v249 = vld [vmem:[%s1 + $0x394] sm:$0xf]
  %v250 = vld [vmem:[%s1 + $0x398] sm:$0xf]
  %v251 = vld [vmem:[%s1 + $0x39c] sm:$0xf]
  %v252 = vld [vmem:[%s1 + $0x3a0] sm:$0xf]
  %v253 = vld [vmem:[%s1 + $0x3a4] sm:$0xf]
  %v254 = vld [vmem:[%s1 + $0x3a8] sm:$0xf]
  %v255 = vld [vmem:[%s1 + $0x3ac] sm:$0xf]
  %v256 = vld [vmem:[%s1 + $0x3b0] sm:$0xf]
  %v257 = vld [vmem:[%s1 + $0x3b4] sm:$0xf]
  %v258 = vld [vmem:[%s1 + $0x3b8] sm:$0xf]
  %v259 = vld [vmem:[%s1 + $0x3bc] sm:$0xf]
  %v260 = vld [vmem:[%s1 + $0x3c0] sm:$0xf]
  %v261 = vld [vmem:[%s1 + $0x3c4] sm:$0xf]
  %v262 = vld [vmem:[%s1 + $0x3c8] sm:$0xf]
  %v263 = vld [vmem:[%s1 + $0x3cc] sm:$0xf]
  %v264 = vld [vmem:[%s1 + $0x3d0] sm:$0xf]
  %v265 = vld [vmem:[%s1 + $0x3d4] sm:$0xf]
  %v266 = vld [vmem:[%s1 + $0x3d8] sm:$0xf]
  %v267 = vld [vmem:[%s1 + $0x3dc] sm:$0xf]
  %v268 = vld [vmem:[%s1 + $0x3e0] sm:$0xf]
  %v269 = vld [vmem:[%s1 + $0x3e4] sm:$0xf]
  %v270 = vld [vmem:[%s1 + $0x3e8] sm:$0xf]
  %v271 = vld [vmem:[%s1 + $0x3ec] sm:$0xf]
  %v272 = vld [vmem:[%s1 + $0x3f0] sm:$0xf]
  %v273 = vld [vmem:[%s1 + $0x3f4] sm:$0xf]
  %v274 = vld [vmem:[%s1 + $0x3f8] sm:$0xf]
  %v275 = vld [vmem:[%s1 + $0x3fc] sm:$0xf]
  %v284 = vunpack.c.l.b16 %v12
  %v285 = vunpack.c.h.b16 %v12
  %v286 = vunpack.c.l.b16 %v13
  %v287 = vunpack.c.h.b16 %v13
  %v288 = vunpack.c.l.b16 %v14
  %v289 = vunpack.c.h.b16 %v14
  %v290 = vunpack.c.l.b16 %v15
  %v291 = vunpack.c.h.b16 %v15
  %v292 = vunpack.c.l.b16 %v16
  %v293 = vunpack.c.h.b16 %v16
  %v294 = vunpack.c.l.b16 %v17
  %v295 = vunpack.c.h.b16 %v17
  %v296 = vunpack.c.l.b16 %v18
  %v297 = vunpack.c.h.b16 %v18
  %v298 = vunpack.c.l.b16 %v19
  %v299 = vunpack.c.h.b16 %v19
  %v300 = vpack.c.b16 %v284, %v284
  %v301 = vpack.c.b16 %v285, %v285
  %v302 = vpack.c.b16 %v286, %v286
  %v303 = vpack.c.b16 %v287, %v287
  %v304 = vpack.c.b16 %v288, %v288
  %v305 = vpack.c.b16 %v289, %v289
  %v306 = vpack.c.b16 %v290, %v290
  %v307 = vpack.c.b16 %v291, %v291
  %v308 = vpack.c.b16 %v292, %v292
  %v309 = vpack.c.b16 %v293, %v293
  %v310 = vpack.c.b16 %v294, %v294
  %v311 = vpack.c.b16 %v295, %v295
  %v312 = vpack.c.b16 %v296, %v296
  %v313 = vpack.c.b16 %v297, %v297
  %v314 = vpack.c.b16 %v298, %v298
  %v315 = vpack.c.b16 %v299, %v299
  %v588 = vunpack.c.l.b16 %v20
  %v589 = vunpack.c.l.b16 %v21
  %v590 = vunpack.c.l.b16 %v22
  %v591 = vunpack.c.l.b16 %v23
  %v592 = vunpack.c.l.b16 %v24
  %v593 = vunpack.c.l.b16 %v25
  %v594 = vunpack.c.l.b16 %v26
  %v595 = vunpack.c.l.b16 %v27
  %v596 = vunpack.c.l.b16 %v28
  %v597 = vunpack.c.l.b16 %v29
  %v598 = vunpack.c.l.b16 %v30
  %v599 = vunpack.c.l.b16 %v31
  %v600 = vunpack.c.l.b16 %v32
  %v601 = vunpack.c.l.b16 %v33
  %v602 = vunpack.c.l.b16 %v34
  %v603 = vunpack.c.l.b16 %v35
  %v604 = vunpack.c.l.b16 %v36
  %v605 = vunpack.c.l.b16 %v37
  %v606 = vunpack.c.l.b16 %v38
  %v607 = vunpack.c.l.b16 %v39
  %v608 = vunpack.c.l.b16 %v40
  %v609 = vunpack.c.l.b16 %v41
  %v610 = vunpack.c.l.b16 %v42
  %v611 = vunpack.c.l.b16 %v43
  %v612 = vunpack.c.l.b16 %v44
  %v613 = vunpack.c.l.b16 %v45
  %v614 = vunpack.c.l.b16 %v46
  %v615 = vunpack.c.l.b16 %v47
  %v616 = vunpack.c.l.b16 %v48
  %v617 = vunpack.c.l.b16 %v49
  %v618 = vunpack.c.l.b16 %v50
  %v619 = vunpack.c.l.b16 %v51
  %v620 = vunpack.c.l.b16 %v52
  %v621 = vunpack.c.l.b16 %v53
  %v622 = vunpack.c.l.b16 %v54
  %v623 = vunpack.c.l.b16 %v55
  %v624 = vunpack.c.l.b16 %v56
  %v625 = vunpack.c.l.b16 %v57
  %v626 = vunpack.c.l.b16 %v58
  %v627 = vunpack.c.l.b16 %v59
  %v628 = vunpack.c.l.b16 %v60
  %v629 = vunpack.c.l.b16 %v61
  %v630 = vunpack.c.l.b16 %v62
  %v631 = vunpack.c.l.b16 %v63
  %v632 = vunpack.c.l.b16 %v64
  %v633 = vunpack.c.l.b16 %v65
  %v634 = vunpack.c.l.b16 %v66
  %v635 = vunpack.c.l.b16 %v67
  %v636 = vunpack.c.l.b16 %v68
  %v637 = vunpack.c.l.b16 %v69
  %v638 = vunpack.c.l.b16 %v70
  %v639 = vunpack.c.l.b16 %v71
  %v640 = vunpack.c.l.b16 %v72
  %v641 = vunpack.c.l.b16 %v73
  %v642 = vunpack.c.l.b16 %v74
  %v643 = vunpack.c.l.b16 %v75
  %v644 = vunpack.c.l.b16 %v76
  %v645 = vunpack.c.l.b16 %v77
  %v646 = vunpack.c.l.b16 %v78
  %v647 = vunpack.c.l.b16 %v79
  %v648 = vunpack.c.l.b16 %v80
  %v649 = vunpack.c.l.b16 %v81
  %v650 = vunpack.c.l.b16 %v82
  %v651 = vunpack.c.l.b16 %v83
  %v652 = vunpack.c.l.b16 %v84
  %v653 = vunpack.c.l.b16 %v85
  %v654 = vunpack.c.l.b16 %v86
  %v655 = vunpack.c.l.b16 %v87
  %v656 = vunpack.c.l.b16 %v88
  %v657 = vunpack.c.l.b16 %v89
  %v658 = vunpack.c.l.b16 %v90
  %v659 = vunpack.c.l.b16 %v91
  %v660 = vunpack.c.l.b16 %v92
  %v661 = vunpack.c.l.b16 %v93
  %v662 = vunpack.c.l.b16 %v94
  %v663 = vunpack.c.l.b16 %v95
  %v664 = vunpack.c.l.b16 %v96
  %v665 = vunpack.c.l.b16 %v97
  %v666 = vunpack.c.l.b16 %v98
  %v667 = vunpack.c.l.b16 %v99
  %v668 = vunpack.c.l.b16 %v100
  %v669 = vunpack.c.l.b16 %v101
  %v670 = vunpack.c.l.b16 %v102
  %v671 = vunpack.c.l.b16 %v103
  %v672 = vunpack.c.l.b16 %v104
  %v673 = vunpack.c.l.b16 %v105
  %v674 = vunpack.c.l.b16 %v106
  %v675 = vunpack.c.l.b16 %v107
  %v676 = vunpack.c.l.b16 %v108
  %v677 = vunpack.c.l.b16 %v109
  %v678 = vunpack.c.l.b16 %v110
  %v679 = vunpack.c.l.b16 %v111
  %v680 = vunpack.c.l.b16 %v112
  %v681 = vunpack.c.l.b16 %v113
  %v682 = vunpack.c.l.b16 %v114
  %v683 = vunpack.c.l.b16 %v115
  %v684 = vunpack.c.l.b16 %v116
  %v685 = vunpack.c.l.b16 %v117
  %v686 = vunpack.c.l.b16 %v118
  %v687 = vunpack.c.l.b16 %v119
  %v688 = vunpack.c.l.b16 %v120
  %v689 = vunpack.c.l.b16 %v121
  %v690 = vunpack.c.l.b16 %v122
  %v691 = vunpack.c.l.b16 %v123
  %v692 = vunpack.c.l.b16 %v124
  %v693 = vunpack.c.l.b16 %v125
  %v694 = vunpack.c.l.b16 %v126
  %v695 = vunpack.c.l.b16 %v127
  %v696 = vunpack.c.l.b16 %v128
  %v697 = vunpack.c.l.b16 %v129
  %v698 = vunpack.c.l.b16 %v130
  %v699 = vunpack.c.l.b16 %v131
  %v700 = vunpack.c.l.b16 %v132
  %v701 = vunpack.c.l.b16 %v133
  %v702 = vunpack.c.l.b16 %v134
  %v703 = vunpack.c.l.b16 %v135
  %v704 = vunpack.c.l.b16 %v136
  %v705 = vunpack.c.l.b16 %v137
  %v706 = vunpack.c.l.b16 %v138
  %v707 = vunpack.c.l.b16 %v139
  %v708 = vunpack.c.l.b16 %v140
  %v709 = vunpack.c.l.b16 %v141
  %v710 = vunpack.c.l.b16 %v142
  %v711 = vunpack.c.l.b16 %v143
  %v712 = vunpack.c.l.b16 %v144
  %v713 = vunpack.c.l.b16 %v145
  %v714 = vunpack.c.l.b16 %v146
  %v715 = vunpack.c.l.b16 %v147
  %v716 = vunpack.c.l.b16 %v148
  %v717 = vunpack.c.l.b16 %v149
  %v718 = vunpack.c.l.b16 %v150
  %v719 = vunpack.c.l.b16 %v151
  %v720 = vunpack.c.l.b16 %v152
  %v721 = vunpack.c.l.b16 %v153
  %v722 = vunpack.c.l.b16 %v154
  %v723 = vunpack.c.l.b16 %v155
  %v724 = vunpack.c.l.b16 %v156
  %v725 = vunpack.c.l.b16 %v157
  %v726 = vunpack.c.l.b16 %v158
  %v727 = vunpack.c.l.b16 %v159
  %v728 = vunpack.c.l.b16 %v160
  %v729 = vunpack.c.l.b16 %v161
  %v730 = vunpack.c.l.b16 %v162
  %v731 = vunpack.c.l.b16 %v163
  %v732 = vunpack.c.l.b16 %v164
  %v733 = vunpack.c.l.b16 %v165
  %v734 = vunpack.c.l.b16 %v166
  %v735 = vunpack.c.l.b16 %v167
  %v736 = vunpack.c.l.b16 %v168
  %v737 = vunpack.c.l.b16 %v169
  %v738 = vunpack.c.l.b16 %v170
  %v739 = vunpack.c.l.b16 %v171
  %v740 = vunpack.c.l.b16 %v172
  %v741 = vunpack.c.l.b16 %v173
  %v742 = vunpack.c.l.b16 %v174
  %v743 = vunpack.c.l.b16 %v175
  %v744 = vunpack.c.l.b16 %v176
  %v745 = vunpack.c.l.b16 %v177
  %v746 = vunpack.c.l.b16 %v178
  %v747 = vunpack.c.l.b16 %v179
  %v748 = vunpack.c.l.b16 %v180
  %v749 = vunpack.c.l.b16 %v181
  %v750 = vunpack.c.l.b16 %v182
  %v751 = vunpack.c.l.b16 %v183
  %v752 = vunpack.c.l.b16 %v184
  %v753 = vunpack.c.l.b16 %v185
  %v754 = vunpack.c.l.b16 %v186
  %v755 = vunpack.c.l.b16 %v187
  %v756 = vunpack.c.l.b16 %v188
  %v757 = vunpack.c.l.b16 %v189
  %v758 = vunpack.c.l.b16 %v190
  %v759 = vunpack.c.l.b16 %v191
  %v760 = vunpack.c.l.b16 %v192
  %v761 = vunpack.c.l.b16 %v193
  %v762 = vunpack.c.l.b16 %v194
  %v763 = vunpack.c.l.b16 %v195
  %v764 = vunpack.c.l.b16 %v196
  %v765 = vunpack.c.l.b16 %v197
  %v766 = vunpack.c.l.b16 %v198
  %v767 = vunpack.c.l.b16 %v199
  %v768 = vunpack.c.l.b16 %v200
  %v769 = vunpack.c.l.b16 %v201
  %v770 = vunpack.c.l.b16 %v202
  %v771 = vunpack.c.l.b16 %v203
  %v772 = vunpack.c.l.b16 %v204
  %v773 = vunpack.c.l.b16 %v205
  %v774 = vunpack.c.l.b16 %v206
  %v775 = vunpack.c.l.b16 %v207
  %v776 = vunpack.c.l.b16 %v208
  %v777 = vunpack.c.l.b16 %v209
  %v778 = vunpack.c.l.b16 %v210
  %v779 = vunpack.c.l.b16 %v211
  %v780 = vunpack.c.l.b16 %v212
  %v781 = vunpack.c.l.b16 %v213
  %v782 = vunpack.c.l.b16 %v214
  %v783 = vunpack.c.l.b16 %v215
  %v784 = vunpack.c.l.b16 %v216
  %v785 = vunpack.c.l.b16 %v217
  %v786 = vunpack.c.l.b16 %v218
  %v787 = vunpack.c.l.b16 %v219
  %v788 = vunpack.c.l.b16 %v220
  %v789 = vunpack.c.l.b16 %v221
  %v790 = vunpack.c.l.b16 %v222
  %v791 = vunpack.c.l.b16 %v223
  %v792 = vunpack.c.l.b16 %v224
  %v793 = vunpack.c.l.b16 %v225
  %v794 = vunpack.c.l.b16 %v226
  %v795 = vunpack.c.l.b16 %v227
  %v796 = vunpack.c.l.b16 %v228
  %v797 = vunpack.c.l.b16 %v229
  %v798 = vunpack.c.l.b16 %v230
  %v799 = vunpack.c.l.b16 %v231
  %v800 = vunpack.c.l.b16 %v232
  %v801 = vunpack.c.l.b16 %v233
  %v802 = vunpack.c.l.b16 %v234
  %v803 = vunpack.c.l.b16 %v235
  %v804 = vunpack.c.l.b16 %v236
  %v805 = vunpack.c.l.b16 %v237
  %v806 = vunpack.c.l.b16 %v238
  %v807 = vunpack.c.l.b16 %v239
  %v808 = vunpack.c.l.b16 %v240
  %v809 = vunpack.c.l.b16 %v241
  %v810 = vunpack.c.l.b16 %v242
  %v811 = vunpack.c.l.b16 %v243
  %v812 = vunpack.c.l.b16 %v244
  %v813 = vunpack.c.l.b16 %v245
  %v814 = vunpack.c.l.b16 %v246
  %v815 = vunpack.c.l.b16 %v247
  %v816 = vunpack.c.l.b16 %v248
  %v817 = vunpack.c.l.b16 %v249
  %v818 = vunpack.c.l.b16 %v250
  %v819 = vunpack.c.l.b16 %v251
  %v820 = vunpack.c.l.b16 %v252
  %v821 = vunpack.c.l.b16 %v253
  %v822 = vunpack.c.l.b16 %v254
  %v823 = vunpack.c.l.b16 %v255
  %v824 = vunpack.c.l.b16 %v256
  %v825 = vunpack.c.l.b16 %v257
  %v826 = vunpack.c.l.b16 %v258
  %v827 = vunpack.c.l.b16 %v259
  %v828 = vunpack.c.l.b16 %v260
  %v829 = vunpack.c.l.b16 %v261
  %v830 = vunpack.c.l.b16 %v262
  %v831 = vunpack.c.l.b16 %v263
  %v832 = vunpack.c.l.b16 %v264
  %v833 = vunpack.c.l.b16 %v265
  %v834 = vunpack.c.l.b16 %v266
  %v835 = vunpack.c.l.b16 %v267
  %v836 = vunpack.c.l.b16 %v268
  %v837 = vunpack.c.l.b16 %v269
  %v838 = vunpack.c.l.b16 %v270
  %v839 = vunpack.c.l.b16 %v271
  %v840 = vunpack.c.l.b16 %v272
  %v841 = vunpack.c.l.b16 %v273
  %v842 = vunpack.c.l.b16 %v274
  %v843 = vunpack.c.l.b16 %v275
  %v844 = vpack.c.b16 %v589, %v588
  %v845 = vpack.c.b16 %v591, %v590
  %v846 = vpack.c.b16 %v593, %v592
  %v847 = vpack.c.b16 %v595, %v594
  %v848 = vpack.c.b16 %v597, %v596
  %v849 = vpack.c.b16 %v599, %v598
  %v850 = vpack.c.b16 %v601, %v600
  %v851 = vpack.c.b16 %v603, %v602
  %v852 = vpack.c.b16 %v605, %v604
  %v853 = vpack.c.b16 %v607, %v606
  %v854 = vpack.c.b16 %v609, %v608
  %v855 = vpack.c.b16 %v611, %v610
  %v856 = vpack.c.b16 %v613, %v612
  %v857 = vpack.c.b16 %v615, %v614
  %v858 = vpack.c.b16 %v617, %v616
  %v859 = vpack.c.b16 %v619, %v618
  %v860 = vpack.c.b16 %v621, %v620
  %v861 = vpack.c.b16 %v623, %v622
  %v862 = vpack.c.b16 %v625, %v624
  %v863 = vpack.c.b16 %v627, %v626
  %v864 = vpack.c.b16 %v629, %v628
  %v865 = vpack.c.b16 %v631, %v630
  %v866 = vpack.c.b16 %v633, %v632
  %v867 = vpack.c.b16 %v635, %v634
  %v868 = vpack.c.b16 %v637, %v636
  %v869 = vpack.c.b16 %v639, %v638
  %v870 = vpack.c.b16 %v641, %v640
  %v871 = vpack.c.b16 %v643, %v642
  %v872 = vpack.c.b16 %v645, %v644
  %v873 = vpack.c.b16 %v647, %v646
  %v874 = vpack.c.b16 %v649, %v648
  %v875 = vpack.c.b16 %v651, %v650
  %v876 = vpack.c.b16 %v653, %v652
  %v877 = vpack.c.b16 %v655, %v654
  %v878 = vpack.c.b16 %v657, %v656
  %v879 = vpack.c.b16 %v659, %v658
  %v880 = vpack.c.b16 %v661, %v660
  %v881 = vpack.c.b16 %v663, %v662
  %v882 = vpack.c.b16 %v665, %v664
  %v883 = vpack.c.b16 %v667, %v666
  %v884 = vpack.c.b16 %v669, %v668
  %v885 = vpack.c.b16 %v671, %v670
  %v886 = vpack.c.b16 %v673, %v672
  %v887 = vpack.c.b16 %v675, %v674
  %v888 = vpack.c.b16 %v677, %v676
  %v889 = vpack.c.b16 %v679, %v678
  %v890 = vpack.c.b16 %v681, %v680
  %v891 = vpack.c.b16 %v683, %v682
  %v892 = vpack.c.b16 %v685, %v684
  %v893 = vpack.c.b16 %v687, %v686
  %v894 = vpack.c.b16 %v689, %v688
  %v895 = vpack.c.b16 %v691, %v690
  %v896 = vpack.c.b16 %v693, %v692
  %v897 = vpack.c.b16 %v695, %v694
  %v898 = vpack.c.b16 %v697, %v696
  %v899 = vpack.c.b16 %v699, %v698
  %v900 = vpack.c.b16 %v701, %v700
  %v901 = vpack.c.b16 %v703, %v702
  %v902 = vpack.c.b16 %v705, %v704
  %v903 = vpack.c.b16 %v707, %v706
  %v904 = vpack.c.b16 %v709, %v708
  %v905 = vpack.c.b16 %v711, %v710
  %v906 = vpack.c.b16 %v713, %v712
  %v907 = vpack.c.b16 %v715, %v714
  %v908 = vpack.c.b16 %v717, %v716
  %v909 = vpack.c.b16 %v719, %v718
  %v910 = vpack.c.b16 %v721, %v720
  %v911 = vpack.c.b16 %v723, %v722
  %v912 = vpack.c.b16 %v725, %v724
  %v913 = vpack.c.b16 %v727, %v726
  %v914 = vpack.c.b16 %v729, %v728
  %v915 = vpack.c.b16 %v731, %v730
  %v916 = vpack.c.b16 %v733, %v732
  %v917 = vpack.c.b16 %v735, %v734
  %v918 = vpack.c.b16 %v737, %v736
  %v919 = vpack.c.b16 %v739, %v738
  %v920 = vpack.c.b16 %v741, %v740
  %v921 = vpack.c.b16 %v743, %v742
  %v922 = vpack.c.b16 %v745, %v744
  %v923 = vpack.c.b16 %v747, %v746
  %v924 = vpack.c.b16 %v749, %v748
  %v925 = vpack.c.b16 %v751, %v750
  %v926 = vpack.c.b16 %v753, %v752
  %v927 = vpack.c.b16 %v755, %v754
  %v928 = vpack.c.b16 %v757, %v756
  %v929 = vpack.c.b16 %v759, %v758
  %v930 = vpack.c.b16 %v761, %v760
  %v931 = vpack.c.b16 %v763, %v762
  %v932 = vpack.c.b16 %v765, %v764
  %v933 = vpack.c.b16 %v767, %v766
  %v934 = vpack.c.b16 %v769, %v768
  %v935 = vpack.c.b16 %v771, %v770
  %v936 = vpack.c.b16 %v773, %v772
  %v937 = vpack.c.b16 %v775, %v774
  %v938 = vpack.c.b16 %v777, %v776
  %v939 = vpack.c.b16 %v779, %v778
  %v940 = vpack.c.b16 %v781, %v780
  %v941 = vpack.c.b16 %v783, %v782
  %v942 = vpack.c.b16 %v785, %v784
  %v943 = vpack.c.b16 %v787, %v786
  %v944 = vpack.c.b16 %v789, %v788
  %v945 = vpack.c.b16 %v791, %v790
  %v946 = vpack.c.b16 %v793, %v792
  %v947 = vpack.c.b16 %v795, %v794
  %v948 = vpack.c.b16 %v797, %v796
  %v949 = vpack.c.b16 %v799, %v798
  %v950 = vpack.c.b16 %v801, %v800
  %v951 = vpack.c.b16 %v803, %v802
  %v952 = vpack.c.b16 %v805, %v804
  %v953 = vpack.c.b16 %v807, %v806
  %v954 = vpack.c.b16 %v809, %v808
  %v955 = vpack.c.b16 %v811, %v810
  %v956 = vpack.c.b16 %v813, %v812
  %v957 = vpack.c.b16 %v815, %v814
  %v958 = vpack.c.b16 %v817, %v816
  %v959 = vpack.c.b16 %v819, %v818
  %v960 = vpack.c.b16 %v821, %v820
  %v961 = vpack.c.b16 %v823, %v822
  %v962 = vpack.c.b16 %v825, %v824
  %v963 = vpack.c.b16 %v827, %v826
  %v964 = vpack.c.b16 %v829, %v828
  %v965 = vpack.c.b16 %v831, %v830
  %v966 = vpack.c.b16 %v833, %v832
  %v967 = vpack.c.b16 %v835, %v834
  %v968 = vpack.c.b16 %v837, %v836
  %v969 = vpack.c.b16 %v839, %v838
  %v970 = vpack.c.b16 %v841, %v840
  %v971 = vpack.c.b16 %v843, %v842
  %1100 = vmatprep.subr.bf16.mxu0 0
  %1101 = vmatpush1.bf16.msra.mxu0 %v844
  %1102 = vmatprep.subr.bf16.mxu0 0
  %1103 = vmatpush1.bf16.msra.mxu0 %v845
  %1104 = vmatprep.subr.bf16.mxu0 0
  %1105 = vmatpush1.bf16.msra.mxu0 %v846
  %1106 = vmatprep.subr.bf16.mxu0 0
  %1107 = vmatpush1.bf16.msra.mxu0 %v847
  %1108 = vmatprep.subr.bf16.mxu0 0
  %1109 = vmatpush1.bf16.msra.mxu0 %v848
  %1110 = vmatprep.subr.bf16.mxu0 0
  %1111 = vmatpush1.bf16.msra.mxu0 %v849
  %1112 = vmatprep.subr.bf16.mxu0 0
  %1113 = vmatpush1.bf16.msra.mxu0 %v850
  %1114 = vmatprep.subr.bf16.mxu0 0
  %1115 = vmatpush1.bf16.msra.mxu0 %v851
  %1116 = vmatprep.subr.bf16.mxu0 0
  %1117 = vmatpush1.bf16.msra.mxu0 %v852
  %1118 = vmatprep.subr.bf16.mxu0 0
  %1119 = vmatpush1.bf16.msra.mxu0 %v853
  %1120 = vmatprep.subr.bf16.mxu0 0
  %1121 = vmatpush1.bf16.msra.mxu0 %v854
  %1122 = vmatprep.subr.bf16.mxu0 0
  %1123 = vmatpush1.bf16.msra.mxu0 %v855
  %1124 = vmatprep.subr.bf16.mxu0 0
  %1125 = vmatpush1.bf16.msra.mxu0 %v856
  %1126 = vmatprep.subr.bf16.mxu0 0
  %1127 = vmatpush1.bf16.msra.mxu0 %v857
  %1128 = vmatprep.subr.bf16.mxu0 0
  %1129 = vmatpush1.bf16.msra.mxu0 %v858
  %1130 = vmatprep.subr.bf16.mxu0 0
  %1131 = vmatpush1.bf16.msra.mxu0 %v859
  %1132 = vmatprep.mubr.bf16.mxu0 %v301
  %1133 = vmatmul.mubr.bf16.gmra.mrb[0].mxu0 %v300
  %v1134 = vpop.f32.mrb[0].mxu0
  %v1135 = vadd.f32 0.0, %v1134
  %v1136 = vpop.f32.mrb[0].mxu0
  %v1137 = vpop.f32.mrb[0].mxu0
  %v1138 = vpop.f32.mrb[0].mxu0
  %1139 = vdwg.mxu0
  %1140 = vmatprep.subr.bf16.mxu0 0
  %1141 = vmatpush1.bf16.msra.mxu0 %v860
  %1142 = vmatprep.subr.bf16.mxu0 0
  %1143 = vmatpush1.bf16.msra.mxu0 %v861
  %1144 = vmatprep.subr.bf16.mxu0 0
  %1145 = vmatpush1.bf16.msra.mxu0 %v862
  %1146 = vmatprep.subr.bf16.mxu0 0
  %1147 = vmatpush1.bf16.msra.mxu0 %v863
  %1148 = vmatprep.subr.bf16.mxu0 0
  %1149 = vmatpush1.bf16.msra.mxu0 %v864
  %1150 = vmatprep.subr.bf16.mxu0 0
  %1151 = vmatpush1.bf16.msra.mxu0 %v865
  %1152 = vmatprep.subr.bf16.mxu0 0
  %1153 = vmatpush1.bf16.msra.mxu0 %v866
  %1154 = vmatprep.subr.bf16.mxu0 0
  %1155 = vmatpush1.bf16.msra.mxu0 %v867
  %1156 = vmatprep.subr.bf16.mxu0 0
  %1157 = vmatpush1.bf16.msra.mxu0 %v868
  %1158 = vmatprep.subr.bf16.mxu0 0
  %1159 = vmatpush1.bf16.msra.mxu0 %v869
  %1160 = vmatprep.subr.bf16.mxu0 0
  %1161 = vmatpush1.bf16.msra.mxu0 %v870
  %1162 = vmatprep.subr.bf16.mxu0 0
  %1163 = vmatpush1.bf16.msra.mxu0 %v871
  %1164 = vmatprep.subr.bf16.mxu0 0
  %1165 = vmatpush1.bf16.msra.mxu0 %v872
  %1166 = vmatprep.subr.bf16.mxu0 0
  %1167 = vmatpush1.bf16.msra.mxu0 %v873
  %1168 = vmatprep.subr.bf16.mxu0 0
  %1169 = vmatpush1.bf16.msra.mxu0 %v874
  %1170 = vmatprep.subr.bf16.mxu0 0
  %1171 = vmatpush1.bf16.msra.mxu0 %v875
  %1172 = vmatprep.mubr.bf16.mxu0 %v303
  %1173 = vmatmul.mubr.bf16.gmra.mrb[0].mxu0 %v302
  %v1174 = vpop.f32.mrb[0].mxu0
  %v1175 = vadd.f32 %v1135, %v1174
  %v1176 = vpop.f32.mrb[0].mxu0
  %v1177 = vpop.f32.mrb[0].mxu0
  %v1178 = vpop.f32.mrb[0].mxu0
  %1179 = vdwg.mxu0
  %1180 = vmatprep.subr.bf16.mxu0 0
  %1181 = vmatpush1.bf16.msra.mxu0 %v876
  %1182 = vmatprep.subr.bf16.mxu0 0
  %1183 = vmatpush1.bf16.msra.mxu0 %v877
  %1184 = vmatprep.subr.bf16.mxu0 0
  %1185 = vmatpush1.bf16.msra.mxu0 %v878
  %1186 = vmatprep.subr.bf16.mxu0 0
  %1187 = vmatpush1.bf16.msra.mxu0 %v879
  %1188 = vmatprep.subr.bf16.mxu0 0
  %1189 = vmatpush1.bf16.msra.mxu0 %v880
  %1190 = vmatprep.subr.bf16.mxu0 0
  %1191 = vmatpush1.bf16.msra.mxu0 %v881
  %1192 = vmatprep.subr.bf16.mxu0 0
  %1193 = vmatpush1.bf16.msra.mxu0 %v882
  %1194 = vmatprep.subr.bf16.mxu0 0
  %1195 = vmatpush1.bf16.msra.mxu0 %v883
  %1196 = vmatprep.subr.bf16.mxu0 0
  %1197 = vmatpush1.bf16.msra.mxu0 %v884
  %1198 = vmatprep.subr.bf16.mxu0 0
  %1199 = vmatpush1.bf16.msra.mxu0 %v885
  %1200 = vmatprep.subr.bf16.mxu0 0
  %1201 = vmatpush1.bf16.msra.mxu0 %v886
  %1202 = vmatprep.subr.bf16.mxu0 0
  %1203 = vmatpush1.bf16.msra.mxu0 %v887
  %1204 = vmatprep.subr.bf16.mxu0 0
  %1205 = vmatpush1.bf16.msra.mxu0 %v888
  %1206 = vmatprep.subr.bf16.mxu0 0
  %1207 = vmatpush1.bf16.msra.mxu0 %v889
  %1208 = vmatprep.subr.bf16.mxu0 0
  %1209 = vmatpush1.bf16.msra.mxu0 %v890
  %1210 = vmatprep.subr.bf16.mxu0 0
  %1211 = vmatpush1.bf16.msra.mxu0 %v891
  %1212 = vmatprep.mubr.bf16.mxu0 %v305
  %1213 = vmatmul.mubr.bf16.gmra.mrb[0].mxu0 %v304
  %v1214 = vpop.f32.mrb[0].mxu0
  %v1215 = vadd.f32 %v1175, %v1214
  %v1216 = vpop.f32.mrb[0].mxu0
  %v1217 = vpop.f32.mrb[0].mxu0
  %v1218 = vpop.f32.mrb[0].mxu0
  %1219 = vdwg.mxu0
  %1220 = vmatprep.subr.bf16.mxu0 0
  %1221 = vmatpush1.bf16.msra.mxu0 %v892
  %1222 = vmatprep.subr.bf16.mxu0 0
  %1223 = vmatpush1.bf16.msra.mxu0 %v893
  %1224 = vmatprep.subr.bf16.mxu0 0
  %1225 = vmatpush1.bf16.msra.mxu0 %v894
  %1226 = vmatprep.subr.bf16.mxu0 0
  %1227 = vmatpush1.bf16.msra.mxu0 %v895
  %1228 = vmatprep.subr.bf16.mxu0 0
  %1229 = vmatpush1.bf16.msra.mxu0 %v896
  %1230 = vmatprep.subr.bf16.mxu0 0
  %1231 = vmatpush1.bf16.msra.mxu0 %v897
  %1232 = vmatprep.subr.bf16.mxu0 0
  %1233 = vmatpush1.bf16.msra.mxu0 %v898
  %1234 = vmatprep.subr.bf16.mxu0 0
  %1235 = vmatpush1.bf16.msra.mxu0 %v899
  %1236 = vmatprep.subr.bf16.mxu0 0
  %1237 = vmatpush1.bf16.msra.mxu0 %v900
  %1238 = vmatprep.subr.bf16.mxu0 0
  %1239 = vmatpush1.bf16.msra.mxu0 %v901
  %1240 = vmatprep.subr.bf16.mxu0 0
  %1241 = vmatpush1.bf16.msra.mxu0 %v902
  %1242 = vmatprep.subr.bf16.mxu0 0
  %1243 = vmatpush1.bf16.msra.mxu0 %v903
  %1244 = vmatprep.subr.bf16.mxu0 0
  %1245 = vmatpush1.bf16.msra.mxu0 %v904
  %1246 = vmatprep.subr.bf16.mxu0 0
  %1247 = vmatpush1.bf16.msra.mxu0 %v905
  %1248 = vmatprep.subr.bf16.mxu0 0
  %1249 = vmatpush1.bf16.msra.mxu0 %v906
  %1250 = vmatprep.subr.bf16.mxu0 0
  %1251 = vmatpush1.bf16.msra.mxu0 %v907
  %1252 = vmatprep.mubr.bf16.mxu0 %v307
  %1253 = vmatmul.mubr.bf16.gmra.mrb[0].mxu0 %v306
  %v1254 = vpop.f32.mrb[0].mxu0
  %v1255 = vadd.f32 %v1215, %v1254
  %v1256 = vpop.f32.mrb[0].mxu0
  %v1257 = vpop.f32.mrb[0].mxu0
  %v1258 = vpop.f32.mrb[0].mxu0
  %1259 = vdwg.mxu0
  %1260 = vmatprep.subr.bf16.mxu0 0
  %1261 = vmatpush1.bf16.msra.mxu0 %v908
  %1262 = vmatprep.subr.bf16.mxu0 0
  %1263 = vmatpush1.bf16.msra.mxu0 %v909
  %1264 = vmatprep.subr.bf16.mxu0 0
  %1265 = vmatpush1.bf16.msra.mxu0 %v910
  %1266 = vmatprep.subr.bf16.mxu0 0
  %1267 = vmatpush1.bf16.msra.mxu0 %v911
  %1268 = vmatprep.subr.bf16.mxu0 0
  %1269 = vmatpush1.bf16.msra.mxu0 %v912
  %1270 = vmatprep.subr.bf16.mxu0 0
  %1271 = vmatpush1.bf16.msra.mxu0 %v913
  %1272 = vmatprep.subr.bf16.mxu0 0
  %1273 = vmatpush1.bf16.msra.mxu0 %v914
  %1274 = vmatprep.subr.bf16.mxu0 0
  %1275 = vmatpush1.bf16.msra.mxu0 %v915
  %1276 = vmatprep.subr.bf16.mxu0 0
  %1277 = vmatpush1.bf16.msra.mxu0 %v916
  %1278 = vmatprep.subr.bf16.mxu0 0
  %1279 = vmatpush1.bf16.msra.mxu0 %v917
  %1280 = vmatprep.subr.bf16.mxu0 0
  %1281 = vmatpush1.bf16.msra.mxu0 %v918
  %1282 = vmatprep.subr.bf16.mxu0 0
  %1283 = vmatpush1.bf16.msra.mxu0 %v919
  %1284 = vmatprep.subr.bf16.mxu0 0
  %1285 = vmatpush1.bf16.msra.mxu0 %v920
  %1286 = vmatprep.subr.bf16.mxu0 0
  %1287 = vmatpush1.bf16.msra.mxu0 %v921
  %1288 = vmatprep.subr.bf16.mxu0 0
  %1289 = vmatpush1.bf16.msra.mxu0 %v922
  %1290 = vmatprep.subr.bf16.mxu0 0
  %1291 = vmatpush1.bf16.msra.mxu0 %v923
  %1292 = vmatprep.mubr.bf16.mxu0 %v309
  %1293 = vmatmul.mubr.bf16.gmra.mrb[0].mxu0 %v308
  %v1294 = vpop.f32.mrb[0].mxu0
  %v1295 = vadd.f32 %v1255, %v1294
  %v1296 = vpop.f32.mrb[0].mxu0
  %v1297 = vpop.f32.mrb[0].mxu0
  %v1298 = vpop.f32.mrb[0].mxu0
  %1299 = vdwg.mxu0
  %1300 = vmatprep.subr.bf16.mxu0 0
  %1301 = vmatpush1.bf16.msra.mxu0 %v924
  %1302 = vmatprep.subr.bf16.mxu0 0
  %1303 = vmatpush1.bf16.msra.mxu0 %v925
  %1304 = vmatprep.subr.bf16.mxu0 0
  %1305 = vmatpush1.bf16.msra.mxu0 %v926
  %1306 = vmatprep.subr.bf16.mxu0 0
  %1307 = vmatpush1.bf16.msra.mxu0 %v927
  %1308 = vmatprep.subr.bf16.mxu0 0
  %1309 = vmatpush1.bf16.msra.mxu0 %v928
  %1310 = vmatprep.subr.bf16.mxu0 0
  %1311 = vmatpush1.bf16.msra.mxu0 %v929
  %1312 = vmatprep.subr.bf16.mxu0 0
  %1313 = vmatpush1.bf16.msra.mxu0 %v930
  %1314 = vmatprep.subr.bf16.mxu0 0
  %1315 = vmatpush1.bf16.msra.mxu0 %v931
  %1316 = vmatprep.subr.bf16.mxu0 0
  %1317 = vmatpush1.bf16.msra.mxu0 %v932
  %1318 = vmatprep.subr.bf16.mxu0 0
  %1319 = vmatpush1.bf16.msra.mxu0 %v933
  %1320 = vmatprep.subr.bf16.mxu0 0
  %1321 = vmatpush1.bf16.msra.mxu0 %v934
  %1322 = vmatprep.subr.bf16.mxu0 0
  %1323 = vmatpush1.bf16.msra.mxu0 %v935
  %1324 = vmatprep.subr.bf16.mxu0 0
  %1325 = vmatpush1.bf16.msra.mxu0 %v936
  %1326 = vmatprep.subr.bf16.mxu0 0
  %1327 = vmatpush1.bf16.msra.mxu0 %v937
  %1328 = vmatprep.subr.bf16.mxu0 0
  %1329 = vmatpush1.bf16.msra.mxu0 %v938
  %1330 = vmatprep.subr.bf16.mxu0 0
  %1331 = vmatpush1.bf16.msra.mxu0 %v939
  %1332 = vmatprep.mubr.bf16.mxu0 %v311
  %1333 = vmatmul.mubr.bf16.gmra.mrb[0].mxu0 %v310
  %v1334 = vpop.f32.mrb[0].mxu0
  %v1335 = vadd.f32 %v1295, %v1334
  %v1336 = vpop.f32.mrb[0].mxu0
  %v1337 = vpop.f32.mrb[0].mxu0
  %v1338 = vpop.f32.mrb[0].mxu0
  %1339 = vdwg.mxu0
  %1340 = vmatprep.subr.bf16.mxu0 0
  %1341 = vmatpush1.bf16.msra.mxu0 %v940
  %1342 = vmatprep.subr.bf16.mxu0 0
  %1343 = vmatpush1.bf16.msra.mxu0 %v941
  %1344 = vmatprep.subr.bf16.mxu0 0
  %1345 = vmatpush1.bf16.msra.mxu0 %v942
  %1346 = vmatprep.subr.bf16.mxu0 0
  %1347 = vmatpush1.bf16.msra.mxu0 %v943
  %1348 = vmatprep.subr.bf16.mxu0 0
  %1349 = vmatpush1.bf16.msra.mxu0 %v944
  %1350 = vmatprep.subr.bf16.mxu0 0
  %1351 = vmatpush1.bf16.msra.mxu0 %v945
  %1352 = vmatprep.subr.bf16.mxu0 0
  %1353 = vmatpush1.bf16.msra.mxu0 %v946
  %1354 = vmatprep.subr.bf16.mxu0 0
  %1355 = vmatpush1.bf16.msra.mxu0 %v947
  %1356 = vmatprep.subr.bf16.mxu0 0
  %1357 = vmatpush1.bf16.msra.mxu0 %v948
  %1358 = vmatprep.subr.bf16.mxu0 0
  %1359 = vmatpush1.bf16.msra.mxu0 %v949
  %1360 = vmatprep.subr.bf16.mxu0 0
  %1361 = vmatpush1.bf16.msra.mxu0 %v950
  %1362 = vmatprep.subr.bf16.mxu0 0
  %1363 = vmatpush1.bf16.msra.mxu0 %v951
  %1364 = vmatprep.subr.bf16.mxu0 0
  %1365 = vmatpush1.bf16.msra.mxu0 %v952
  %1366 = vmatprep.subr.bf16.mxu0 0
  %1367 = vmatpush1.bf16.msra.mxu0 %v953
  %1368 = vmatprep.subr.bf16.mxu0 0
  %1369 = vmatpush1.bf16.msra.mxu0 %v954
  %1370 = vmatprep.subr.bf16.mxu0 0
  %1371 = vmatpush1.bf16.msra.mxu0 %v955
  %1372 = vmatprep.mubr.bf16.mxu0 %v313
  %1373 = vmatmul.mubr.bf16.gmra.mrb[0].mxu0 %v312
  %v1374 = vpop.f32.mrb[0].mxu0
  %v1375 = vadd.f32 %v1335, %v1374
  %v1376 = vpop.f32.mrb[0].mxu0
  %v1377 = vpop.f32.mrb[0].mxu0
  %v1378 = vpop.f32.mrb[0].mxu0
  %1379 = vdwg.mxu0
  %1380 = vmatprep.subr.bf16.mxu0 0
  %1381 = vmatpush1.bf16.msra.mxu0 %v956
  %1382 = vmatprep.subr.bf16.mxu0 0
  %1383 = vmatpush1.bf16.msra.mxu0 %v957
  %1384 = vmatprep.subr.bf16.mxu0 0
  %1385 = vmatpush1.bf16.msra.mxu0 %v958
  %1386 = vmatprep.subr.bf16.mxu0 0
  %1387 = vmatpush1.bf16.msra.mxu0 %v959
  %1388 = vmatprep.subr.bf16.mxu0 0
  %1389 = vmatpush1.bf16.msra.mxu0 %v960
  %1390 = vmatprep.subr.bf16.mxu0 0
  %1391 = vmatpush1.bf16.msra.mxu0 %v961
  %1392 = vmatprep.subr.bf16.mxu0 0
  %1393 = vmatpush1.bf16.msra.mxu0 %v962
  %1394 = vmatprep.subr.bf16.mxu0 0
  %1395 = vmatpush1.bf16.msra.mxu0 %v963
  %1396 = vmatprep.subr.bf16.mxu0 0
  %1397 = vmatpush1.bf16.msra.mxu0 %v964
  %1398 = vmatprep.subr.bf16.mxu0 0
  %1399 = vmatpush1.bf16.msra.mxu0 %v965
  %1400 = vmatprep.subr.bf16.mxu0 0
  %1401 = vmatpush1.bf16.msra.mxu0 %v966
  %1402 = vmatprep.subr.bf16.mxu0 0
  %1403 = vmatpush1.bf16.msra.mxu0 %v967
  %1404 = vmatprep.subr.bf16.mxu0 0
  %1405 = vmatpush1.bf16.msra.mxu0 %v968
  %1406 = vmatprep.subr.bf16.mxu0 0
  %1407 = vmatpush1.bf16.msra.mxu0 %v969
  %1408 = vmatprep.subr.bf16.mxu0 0
  %1409 = vmatpush1.bf16.msra.mxu0 %v970
  %1410 = vmatprep.subr.bf16.mxu0 0
  %1411 = vmatpush1.bf16.msra.mxu0 %v971
  %1412 = vmatprep.mubr.bf16.mxu0 %v315
  %1413 = vmatmul.mubr.bf16.gmra.mrb[0].mxu0 %v314
  %v1414 = vpop.f32.mrb[0].mxu0
  %v1415 = vadd.f32 %v1375, %v1414
  %v1416 = vpop.f32.mrb[0].mxu0
  %v1417 = vpop.f32.mrb[0].mxu0
  %v1418 = vpop.f32.mrb[0].mxu0
  %1419 = vdwg.mxu0
  %v1420 = vxor.u32 %v1415, 2147483648
  %v1421 = vmul.f32 %v1420, 1.442695
  %v1422 = vpow.pop %v1421
  %v1423 = vadd.f32 %v1422, 1.0
  %v1424 = vrcp.pop %v1423
  %v1425 = vmul.f32 1.0, %v1424
  %1426 = vst [vmem:[%s2] sm:$0xff] %v1425
  // Predicated region
  $region10: #{discriminator_forward.7} parent=0 // pred_check
    _
  $region11: #{discriminator_forward.7} parent=0 // pred_check_branch
    %1428 = sbr.rel (0) target = $region13
  $region12: #{discriminator_forward.7} parent=0 // pred_region
    _
  $region13: #{discriminator_forward.7} parent=0 // pred_fallthru
    _
  // Predicated region
  $region14: #{discriminator_forward.7} parent=0 // pred_check
    _
  $region15: #{discriminator_forward.7} parent=0 // pred_check_branch
    %1430 = sbr.rel (0) target = $region17
  $region16: #{discriminator_forward.7} parent=0 // pred_region
    _
  $region17: #{discriminator_forward.7} parent=0 // pred_fallthru
    _

</llo_original>
